<compile_context>
chip_gen: v7x
topology: tpu7x:2x2x1
jax: 0.10.0
libtpu: 0.0.40
codegen_flags: <defaults>
</compile_context>

<pallas_src>
import functools

import jax
import jax.numpy as jnp
from jax import lax
from jax.experimental import pallas as pl
from jax.experimental.pallas import tpu as pltpu

# TODO(synk): cfg is not provided by the reference module; RetinaNet-style
# defaults are baked in for cfg.alpha / cfg.gamma / cfg.neg_pos_ratio.
ALPHA = 0.25          # cfg.alpha  -> alpha vector [a, 1-a, ..., 1-a]
GAMMA = 2.0           # cfg.gamma
NEG_POS_RATIO = 3     # cfg.neg_pos_ratio


def _pass1_tile(a, pref):
    pref = max(int(pref), 128)
    if a <= pref or a < 128:
        return a                       # whole anchor row: always a legal block
    return (pref // 128) * 128         # 128-aligned tile; last tile may be ragged


def _pass2_tile(a, pref):
    pref = max(int(pref), 128)
    if a < 128:
        return a
    return min((pref // 128) * 128, (a // 128) * 128)


# ---------------------------------------------------------------------------
# Pass 1: per-anchor prep (log-softmax, focal loss, mining value, smooth-L1).
# Blocks: scores (1, C, TA), labels (1, 1, TA), locs/tlocs (1, 4, TA).
# Anchors live on the 128-lane axis; classes/coords on sublanes.
# ---------------------------------------------------------------------------
def _prep_kernel(scores_ref, labels_ref, locs_ref, tlocs_ref,
                 mining_ref, focal_ref, sl1_ref):
    scores = scores_ref[0].astype(jnp.float32)      # (C, TA), upcast in-kernel
    labels = labels_ref[0]                          # (1, TA) i32

    # log-softmax over the class (sublane) axis
    m = jnp.max(scores, axis=0, keepdims=True)                    # (1, TA)
    ex = jnp.exp(scores - m)
    log_denom = jnp.log(jnp.sum(ex, axis=0, keepdims=True))       # (1, TA)
    bg_nll = (m + log_denom) - scores[0:1, :]                     # -log_softmax[..., 0]

    # target-class log-prob via a single one-hot contraction (no full probs)
    lbl = jnp.maximum(labels, 0)                                  # clamp ignore
    cls_iota = lax.broadcasted_iota(jnp.int32, scores.shape, 0)   # (C, TA)
    onehot = (cls_iota == lbl).astype(jnp.float32)
    score_t = jnp.sum(scores * onehot, axis=0, keepdims=True)     # (1, TA)
    logp_t = score_t - m - log_denom
    p_t = jnp.exp(logp_t)

    alpha_t = jnp.where(lbl == 0, ALPHA, 1.0 - ALPHA)
    one_m = jnp.maximum(1.0 - p_t, 0.0)
    if GAMMA == 2.0:                       # trace-time specialization on cfg.gamma
        focal_w = one_m * one_m
    elif GAMMA == 1.0:
        focal_w = one_m
    else:
        focal_w = jnp.exp(GAMMA * jnp.log(jnp.maximum(one_m, 1e-20)))
    focal = -alpha_t * focal_w * logp_t                           # (1, TA)

    pos = labels > 0
    ignore = labels < 0
    mining = jnp.where(pos, -1.0, jnp.where(ignore, -2.0, bg_nll))

    # smooth-L1 over positive anchors, summed over the 4 coords
    diff = locs_ref[0].astype(jnp.float32) - tlocs_ref[0].astype(jnp.float32)
    ad = jnp.abs(diff)
    sl1 = jnp.where(ad < 1.0, 0.5 * ad * ad, ad - 0.5)
    sl1_pos = jnp.where(pos, jnp.sum(sl1, axis=0, keepdims=True), 0.0)

    mining_ref[0] = mining
    focal_ref[0] = focal
    sl1_ref[0] = sl1_pos
    # Ragged last tile: lanes >= A hold garbage but never mix across lanes and
    # their stores are masked away by Pallas, so no in-kernel masking is needed.


# ---------------------------------------------------------------------------
# Pass 2: blocked O(A^2) hard-negative-mining rank + masked focal writeout.
# Grid (B, I, J); rank accumulates over the (arbitrary) j axis in VMEM scratch.
# Both mining streams are lane-dense rows; the (TJ, 1) column is formed on the
# otherwise-idle XLU.  The (TJ, TA) 0/1 indicator is reduced on the MXU
# (bf16 in, f32 accumulate -> exact counts).
# ---------------------------------------------------------------------------
def _mining_cls_kernel(a_total, num_neg_ref, mining_i_ref, mining_j_ref,
                       focal_ref, out_ref, rank_acc):
    b = pl.program_id(0)
    i = pl.program_id(1)
    j = pl.program_id(2)
    nj = pl.num_programs(2)
    ta = mining_i_ref.shape[2]
    tj = mining_j_ref.shape[2]

    @pl.when(j == 0)
    def _():
        rank_acc[...] = jnp.zeros_like(rank_acc)

    mi = mining_i_ref[0]                       # (1, TA) lane-dense i-tile row
    mj_row = mining_j_ref[0]                   # (1, TJ) lane-dense j-tile row
    # Build the (TJ, 1) column in-kernel: broadcast to a (8, TJ) slab so the
    # XLU transpose works on a natively-tileable operand, then take column 0.
    mj_col = jnp.transpose(jnp.broadcast_to(mj_row, (8, tj)))[:, 0:1]   # (TJ, 1)

    # Thin global-index operands: tie-break + ragged-tile validity.
    jg = j * tj + lax.broadcasted_iota(jnp.int32, (tj, 1), 0)   # (TJ, 1)
    ig = i * ta + lax.broadcasted_iota(jnp.int32, (1, ta), 1)   # (1, TA)
    if a_total % tj != 0:
        # ragged last j-tile: out-of-range anchors can never out-rank anyone
        mj_col = jnp.where(jg < a_total, mj_col, -3.0)

    gt = mj_col > mi                                            # (TJ, TA)
    eq = mj_col == mi
    # stable descending-sort tie-break: tied j-anchor beats i iff j_global < i_global
    tie = jg < ig                                               # broadcast compare
    ind = (gt | (eq & tie)).astype(jnp.bfloat16)                # (TJ, TA) 0/1

    # Count beating j-anchors per i-anchor on the MXU (exact: 0/1 in, f32 acc).
    ones = jnp.ones((8, tj), jnp.bfloat16)
    rank_acc[...] += jnp.dot(ones, ind, preferred_element_type=jnp.float32)

    @pl.when(j == nj - 1)
    def _():
        rank = rank_acc[0:1, :]                                 # (1, TA)
        num_neg = num_neg_ref[b].astype(jnp.float32)
        sel = (mi == -1.0) | (rank < num_neg)
        out_ref[0] = jnp.where(sel, focal_ref[0], 0.0)          # lane-dense write


# ---------------------------------------------------------------------------
# Wrapper
# ---------------------------------------------------------------------------
def multibox_loss(pred_scores, pred_locs, target_labels, target_locs,
                  *, pass1_block_anchors=4096, pass2_block_anchors=512):
    """Returns (loc_loss / num_pos, cls_loss / (num_pos * 4))."""
    B, A, C = pred_scores.shape
    target_labels = target_labels.astype(jnp.int32)

    # anchors -> minor (lane) axis; dtypes preserved (upcast happens in-kernel)
    scores_t = jnp.transpose(pred_scores, (0, 2, 1))     # (B, C, A)
    locs_t = jnp.transpose(pred_locs, (0, 2, 1))         # (B, 4, A)
    tlocs_t = jnp.transpose(target_locs, (0, 2, 1))      # (B, 4, A)
    labels3 = target_labels[:, None, :]                  # (B, 1, A)  (tiny)

    ta1 = _pass1_tile(A, pass1_block_anchors)
    ta2 = _pass2_tile(A, pass2_block_anchors)
    n1 = pl.cdiv(A, ta1)
    n2 = pl.cdiv(A, ta2)

    row_shape = jax.ShapeDtypeStruct((B, 1, A), jnp.float32)
    row_spec1 = pl.BlockSpec((1, 1, ta1), lambda b, i: (b, 0, i))

    mining, focal, sl1_pos = pl.pallas_call(
        _prep_kernel,
        out_shape=(row_shape, row_shape, row_shape),
        grid=(B, n1),
        in_specs=[
            pl.BlockSpec((1, C, ta1), lambda b, i: (b, 0, i)),
            pl.BlockSpec((1, 1, ta1), lambda b, i: (b, 0, i)),
            pl.BlockSpec((1, 4, ta1), lambda b, i: (b, 0, i)),
            pl.BlockSpec((1, 4, ta1), lambda b, i: (b, 0, i)),
        ],
        out_specs=(row_spec1, row_spec1, row_spec1),
        compiler_params=pltpu.CompilerParams(
            dimension_semantics=("parallel", "parallel")),
    )(scores_t, labels3, locs_t, tlocs_t)

    # tiny finishing work in XLA: per-row positive counts -> num_neg
    num_pos_b = jnp.sum((target_labels > 0).astype(jnp.int32), axis=1)   # (B,)
    num_neg_b = (num_pos_b * NEG_POS_RATIO).astype(jnp.int32)            # (B,)

    cls_masked = pl.pallas_call(
        functools.partial(_mining_cls_kernel, A),
        out_shape=jax.ShapeDtypeStruct((B, 1, A), jnp.float32),
        grid_spec=pltpu.PrefetchScalarGridSpec(
            num_scalar_prefetch=1,
            grid=(B, n2, n2),
            in_specs=[
                pl.BlockSpec((1, 1, ta2), lambda b, i, j, nn: (b, 0, i)),  # mining (i)
                pl.BlockSpec((1, 1, ta2), lambda b, i, j, nn: (b, 0, j)),  # mining (j)
                pl.BlockSpec((1, 1, ta2), lambda b, i, j, nn: (b, 0, i)),  # focal  (i)
            ],
            out_specs=pl.BlockSpec((1, 1, ta2), lambda b, i, j, nn: (b, 0, i)),
            scratch_shapes=[pltpu.VMEM((8, ta2), jnp.float32)],
        ),
        compiler_params=pltpu.CompilerParams(
            dimension_semantics=("parallel", "parallel", "arbitrary")),
    )(num_neg_b, mining, mining, focal)

    loc_sum = jnp.sum(sl1_pos)
    cls_sum = jnp.sum(cls_masked)
    num_pos = jnp.sum(num_pos_b).astype(jnp.float32)
    # guard zero-positive batches (the PyTorch reference would produce NaN/Inf)
    denom = jnp.maximum(num_pos, 1.0)
    return loc_sum / denom, cls_sum / (denom * 4.0)


# ---------------------------------------------------------------------------
# Pure-JAX reference mirroring the PyTorch semantics (for validation)
# ---------------------------------------------------------------------------
def _reference(pred_scores, pred_locs, target_labels, target_locs):
    logsm = jax.nn.log_softmax(pred_scores, axis=2)
    bg_nll = -logsm[:, :, 0]
    pos_mask = target_labels > 0
    ignore_mask = target_labels < 0
    num_pos_b = jnp.sum(pos_mask, axis=1, keepdims=True)
    num_neg_b = num_pos_b * NEG_POS_RATIO
    mining = jnp.where(pos_mask, -1.0, jnp.where(ignore_mask, -2.0, bg_nll))
    B, A = mining.shape
    li = mining[:, :, None]
    lj = mining[:, None, :]
    i_idx = jnp.arange(A)[None, :, None]
    j_idx = jnp.arange(A)[None, None, :]
    rank = jnp.sum((lj > li) | ((lj == li) & (j_idx < i_idx)), axis=2)
    sel_mask = pos_mask | (rank < num_neg_b)

    probs = jax.nn.softmax(pred_scores, axis=2)
    lbl = jnp.maximum(target_labels, 0)
    p_t = jnp.take_along_axis(probs, lbl[:, :, None], axis=2)[:, :, 0]
    logp_t = jnp.take_along_axis(logsm, lbl[:, :, None], axis=2)[:, :, 0]
    alpha_t = jnp.where(lbl == 0, ALPHA, 1.0 - ALPHA)
    focal = -alpha_t * (1.0 - p_t) ** 2 * logp_t
    cls_sum = jnp.sum(jnp.where(sel_mask, focal, 0.0))

    diff = pred_locs - target_locs
    ad = jnp.abs(diff)
    sl1 = jnp.where(ad < 1.0, 0.5 * ad * ad, ad - 0.5)
    loc_sum = jnp.sum(jnp.where(pos_mask[:, :, None], sl1, 0.0))
    num_pos = jnp.sum(pos_mask).astype(jnp.float32)
    return loc_sum / num_pos, cls_sum / (num_pos * 4.0)


if __name__ == "__main__":
    def run_case(key, B, A, C, **kw):
        k1, k2, k3, k4, k5 = jax.random.split(key, 5)
        pred_scores = jax.random.normal(k1, (B, A, C), dtype=jnp.float32)
        pred_locs = jax.random.normal(k2, (B, A, 4), dtype=jnp.float32)
        target_locs = jax.random.normal(k4, (B, A, 4), dtype=jnp.float32)
        # labels: ~6% positives (1..C-1), ~6% ignore (-1), rest background (0)
        u = jax.random.uniform(k3, (B, A))
        pos_cls = jax.random.randint(k5, (B, A), 1, C)
        target_labels = jnp.where(u < 0.06, pos_cls,
                                  jnp.where(u < 0.12, -1, 0)).astype(jnp.int32)

        loss_fn = jax.jit(functools.partial(multibox_loss, **kw))
        loc_loss, cls_loss = loss_fn(pred_scores, pred_locs,
                                     target_labels, target_locs)
        jax.block_until_ready((loc_loss, cls_loss))

        ref_loc, ref_cls = _reference(pred_scores, pred_locs,
                                      target_labels, target_locs)
        assert jnp.allclose(loc_loss, ref_loc, rtol=1e-4, atol=1e-5), \
            (A, loc_loss, ref_loc)
        assert jnp.allclose(cls_loss, ref_cls, rtol=1e-4, atol=1e-5), \
            (A, cls_loss, ref_cls)

    key = jax.random.PRNGKey(0)
    k1, k2, k3 = jax.random.split(key, 3)
    run_case(k1, 2, 512, 8)                              # even tiles, single j tile
    run_case(k2, 2, 1024, 8, pass2_block_anchors=256)    # multi-tile rank accumulation
    run_case(k3, 2, 600, 8)                              # ragged last tile (masked)

    print("KERNEL_OK")
</pallas_src>

<mosaic_0001>
module attributes {stable_mosaic.version = 11 : i64} {
  func.func @_prep_kernel(%arg0: i32, %arg1: i32, %arg2: memref<1x8x512xf32, #tpu.memory_space<vmem>>, %arg3: memref<1x1x512xi32, #tpu.memory_space<vmem>>, %arg4: memref<1x4x512xf32, #tpu.memory_space<vmem>>, %arg5: memref<1x4x512xf32, #tpu.memory_space<vmem>>, %arg6: memref<1x1x512xf32, #tpu.memory_space<vmem>>, %arg7: memref<1x1x512xf32, #tpu.memory_space<vmem>>, %arg8: memref<1x1x512xf32, #tpu.memory_space<vmem>>) attributes {dimension_semantics = [#tpu.dimension_semantics<parallel>, #tpu.dimension_semantics<parallel>], iteration_bounds = array<i64: 2, 1>, scalar_prefetch = 0 : i64, scratch_operands = 0 : i64, tpu.core_type = #tpu.core_type<tc>, window_params = [{transform_indices = @transform_0, window_bounds = array<i64: 1, 8, 512>}, {transform_indices = @transform_1, window_bounds = array<i64: 1, 1, 512>}, {transform_indices = @transform_2, window_bounds = array<i64: 1, 4, 512>}, {transform_indices = @transform_3, window_bounds = array<i64: 1, 4, 512>}, {transform_indices = @transform_4, window_bounds = array<i64: 1, 1, 512>}, {transform_indices = @transform_5, window_bounds = array<i64: 1, 1, 512>}, {transform_indices = @transform_6, window_bounds = array<i64: 1, 1, 512>}]} {
    %c0 = arith.constant 0 : index
    %c0_0 = arith.constant 0 : index
    %c0_1 = arith.constant 0 : index
    %0 = vector.load %arg2[%c0, %c0_0, %c0_1] : memref<1x8x512xf32, #tpu.memory_space<vmem>>, vector<1x8x512xf32>
    %1 = vector.shape_cast %0 : vector<1x8x512xf32> to vector<8x512xf32>
    %c0_2 = arith.constant 0 : index
    %c0_3 = arith.constant 0 : index
    %c0_4 = arith.constant 0 : index
    %2 = vector.load %arg3[%c0_2, %c0_3, %c0_4] : memref<1x1x512xi32, #tpu.memory_space<vmem>>, vector<1x1x512xi32>
    %3 = vector.shape_cast %2 : vector<1x1x512xi32> to vector<1x512xi32>
    %cst = arith.constant dense<0xFF800000> : vector<512xf32>
    %4 = vector.multi_reduction <maximumf>, %1, %cst [0] : vector<8x512xf32> to vector<512xf32>
    %5 = vector.shape_cast %4 : vector<512xf32> to vector<1x512xf32>
    %6 = vector.broadcast %5 : vector<1x512xf32> to vector<8x512xf32>
    %7 = arith.subf %1, %6 : vector<8x512xf32>
    %8 = math.exp %7 : vector<8x512xf32>
    %cst_5 = arith.constant dense<0.000000e+00> : vector<512xf32>
    %9 = vector.multi_reduction <add>, %8, %cst_5 [0] : vector<8x512xf32> to vector<512xf32>
    %10 = vector.shape_cast %9 : vector<512xf32> to vector<1x512xf32>
    %11 = math.log %10 : vector<1x512xf32>
    %12 = arith.addf %5, %11 : vector<1x512xf32>
    %13 = vector.extract_strided_slice %1 {offsets = [0, 0], sizes = [1, 512], strides = [1, 1]} : vector<8x512xf32> to vector<1x512xf32>
    %14 = arith.subf %12, %13 : vector<1x512xf32>
    %c0_i32 = arith.constant 0 : i32
    %15 = vector.broadcast %c0_i32 : i32 to vector<1x512xi32>
    %16 = arith.maxsi %3, %15 : vector<1x512xi32>
    %17 = tpu.iota {dimensions = array<i32: 0>} : vector<8x512xi32>
    %18 = vector.broadcast %16 : vector<1x512xi32> to vector<8x512xi32>
    %19 = arith.cmpi eq, %17, %18 : vector<8x512xi32>
    %20 = arith.extui %19 : vector<8x512xi1> to vector<8x512xi32>
    %21 = arith.sitofp %20 : vector<8x512xi32> to vector<8x512xf32>
    %22 = arith.mulf %1, %21 : vector<8x512xf32>
    %cst_6 = arith.constant dense<0.000000e+00> : vector<512xf32>
    %23 = vector.multi_reduction <add>, %22, %cst_6 [0] : vector<8x512xf32> to vector<512xf32>
    %24 = vector.shape_cast %23 : vector<512xf32> to vector<1x512xf32>
    %25 = arith.subf %24, %5 : vector<1x512xf32>
    %26 = arith.subf %25, %11 : vector<1x512xf32>
    %27 = math.exp %26 : vector<1x512xf32>
    %c0_i32_7 = arith.constant 0 : i32
    %28 = vector.broadcast %c0_i32_7 : i32 to vector<1x512xi32>
    %29 = arith.cmpi eq, %16, %28 : vector<1x512xi32>
    %cst_8 = arith.constant 2.500000e-01 : f32
    %cst_9 = arith.constant 7.500000e-01 : f32
    %30 = vector.broadcast %cst_8 : f32 to vector<1x512xf32>
    %31 = vector.broadcast %cst_9 : f32 to vector<1x512xf32>
    %32 = arith.select %29, %30, %31 : vector<1x512xi1>, vector<1x512xf32>
    %cst_10 = arith.constant 1.000000e+00 : f32
    %33 = vector.broadcast %cst_10 : f32 to vector<1x512xf32>
    %34 = arith.subf %33, %27 : vector<1x512xf32>
    %cst_11 = arith.constant 0.000000e+00 : f32
    %35 = vector.broadcast %cst_11 : f32 to vector<1x512xf32>
    %36 = arith.maximumf %34, %35 : vector<1x512xf32>
    %37 = arith.mulf %36, %36 : vector<1x512xf32>
    %cst_12 = arith.constant 0.000000e+00 : f32
    %38 = vector.broadcast %cst_12 : f32 to vector<1x512xf32>
    %39 = arith.subf %38, %32 : vector<1x512xf32>
    %40 = arith.mulf %39, %37 : vector<1x512xf32>
    %41 = arith.mulf %40, %26 : vector<1x512xf32>
    %c0_i32_13 = arith.constant 0 : i32
    %42 = vector.broadcast %c0_i32_13 : i32 to vector<1x512xi32>
    %43 = arith.cmpi sgt, %3, %42 : vector<1x512xi32>
    %c0_i32_14 = arith.constant 0 : i32
    %44 = vector.broadcast %c0_i32_14 : i32 to vector<1x512xi32>
    %45 = arith.cmpi slt, %3, %44 : vector<1x512xi32>
    %cst_15 = arith.constant -2.000000e+00 : f32
    %46 = vector.broadcast %cst_15 : f32 to vector<1x512xf32>
    %47 = arith.select %45, %46, %14 : vector<1x512xi1>, vector<1x512xf32>
    %cst_16 = arith.constant -1.000000e+00 : f32
    %48 = vector.broadcast %cst_16 : f32 to vector<1x512xf32>
    %49 = arith.select %43, %48, %47 : vector<1x512xi1>, vector<1x512xf32>
    %c0_17 = arith.constant 0 : index
    %c0_18 = arith.constant 0 : index
    %c0_19 = arith.constant 0 : index
    %50 = vector.load %arg4[%c0_17, %c0_18, %c0_19] : memref<1x4x512xf32, #tpu.memory_space<vmem>>, vector<1x4x512xf32>
    %51 = vector.shape_cast %50 : vector<1x4x512xf32> to vector<4x512xf32>
    %c0_20 = arith.constant 0 : index
    %c0_21 = arith.constant 0 : index
    %c0_22 = arith.constant 0 : index
    %52 = vector.load %arg5[%c0_20, %c0_21, %c0_22] : memref<1x4x512xf32, #tpu.memory_space<vmem>>, vector<1x4x512xf32>
    %53 = vector.shape_cast %52 : vector<1x4x512xf32> to vector<4x512xf32>
    %54 = arith.subf %51, %53 : vector<4x512xf32>
    %55 = math.absf %54 : vector<4x512xf32>
    %cst_23 = arith.constant 1.000000e+00 : f32
    %56 = vector.broadcast %cst_23 : f32 to vector<4x512xf32>
    %57 = arith.cmpf olt, %55, %56 : vector<4x512xf32>
    %cst_24 = arith.constant 5.000000e-01 : f32
    %58 = vector.broadcast %cst_24 : f32 to vector<4x512xf32>
    %59 = arith.mulf %58, %55 : vector<4x512xf32>
    %60 = arith.mulf %59, %55 : vector<4x512xf32>
    %cst_25 = arith.constant 5.000000e-01 : f32
    %61 = vector.broadcast %cst_25 : f32 to vector<4x512xf32>
    %62 = arith.subf %55, %61 : vector<4x512xf32>
    %63 = arith.select %57, %60, %62 : vector<4x512xi1>, vector<4x512xf32>
    %cst_26 = arith.constant dense<0.000000e+00> : vector<512xf32>
    %64 = vector.multi_reduction <add>, %63, %cst_26 [0] : vector<4x512xf32> to vector<512xf32>
    %65 = vector.shape_cast %64 : vector<512xf32> to vector<1x512xf32>
    %cst_27 = arith.constant 0.000000e+00 : f32
    %66 = vector.broadcast %cst_27 : f32 to vector<1x512xf32>
    %67 = arith.select %43, %65, %66 : vector<1x512xi1>, vector<1x512xf32>
    %c0_28 = arith.constant 0 : index
    %c0_29 = arith.constant 0 : index
    %c0_30 = arith.constant 0 : index
    %68 = vector.load %arg6[%c0_28, %c0_29, %c0_30] : memref<1x1x512xf32, #tpu.memory_space<vmem>>, vector<1x1x512xf32>
    %69 = vector.shape_cast %68 : vector<1x1x512xf32> to vector<1x512xf32>
    %70 = vector.shape_cast %49 : vector<1x512xf32> to vector<1x1x512xf32>
    tpu.vector_store %arg6[%c0_28, %c0_29, %c0_30], %70 {strides = array<i32>} : memref<1x1x512xf32, #tpu.memory_space<vmem>>, vector<1x1x512xf32>,
    %c0_31 = arith.constant 0 : index
    %c0_32 = arith.constant 0 : index
    %c0_33 = arith.constant 0 : index
    %71 = vector.load %arg7[%c0_31, %c0_32, %c0_33] : memref<1x1x512xf32, #tpu.memory_space<vmem>>, vector<1x1x512xf32>
    %72 = vector.shape_cast %71 : vector<1x1x512xf32> to vector<1x512xf32>
    %73 = vector.shape_cast %41 : vector<1x512xf32> to vector<1x1x512xf32>
    tpu.vector_store %arg7[%c0_31, %c0_32, %c0_33], %73 {strides = array<i32>} : memref<1x1x512xf32, #tpu.memory_space<vmem>>, vector<1x1x512xf32>,
    %c0_34 = arith.constant 0 : index
    %c0_35 = arith.constant 0 : index
    %c0_36 = arith.constant 0 : index
    %74 = vector.load %arg8[%c0_34, %c0_35, %c0_36] : memref<1x1x512xf32, #tpu.memory_space<vmem>>, vector<1x1x512xf32>
    %75 = vector.shape_cast %74 : vector<1x1x512xf32> to vector<1x512xf32>
    %76 = vector.shape_cast %67 : vector<1x512xf32> to vector<1x1x512xf32>
    tpu.vector_store %arg8[%c0_34, %c0_35, %c0_36], %76 {strides = array<i32>} : memref<1x1x512xf32, #tpu.memory_space<vmem>>, vector<1x1x512xf32>,
    return
  }
  func.func @transform_0(%arg0: i32, %arg1: i32) -> (i32, i32, i32) {
    %c0_i32 = arith.constant 0 : i32
    %c0_i32_0 = arith.constant 0 : i32
    return %arg0, %c0_i32, %arg1 : i32, i32, i32
  }
  func.func @transform_1(%arg0: i32, %arg1: i32) -> (i32, i32, i32) {
    %c0_i32 = arith.constant 0 : i32
    %c0_i32_0 = arith.constant 0 : i32
    return %arg0, %c0_i32, %arg1 : i32, i32, i32
  }
  func.func @transform_2(%arg0: i32, %arg1: i32) -> (i32, i32, i32) {
    %c0_i32 = arith.constant 0 : i32
    %c0_i32_0 = arith.constant 0 : i32
    return %arg0, %c0_i32, %arg1 : i32, i32, i32
  }
  func.func @transform_3(%arg0: i32, %arg1: i32) -> (i32, i32, i32) {
    %c0_i32 = arith.constant 0 : i32
    %c0_i32_0 = arith.constant 0 : i32
    return %arg0, %c0_i32, %arg1 : i32, i32, i32
  }
  func.func @transform_4(%arg0: i32, %arg1: i32) -> (i32, i32, i32) {
    %c0_i32 = arith.constant 0 : i32
    %c0_i32_0 = arith.constant 0 : i32
    return %arg0, %c0_i32, %arg1 : i32, i32, i32
  }
  func.func @transform_5(%arg0: i32, %arg1: i32) -> (i32, i32, i32) {
    %c0_i32 = arith.constant 0 : i32
    %c0_i32_0 = arith.constant 0 : i32
    return %arg0, %c0_i32, %arg1 : i32, i32, i32
  }
  func.func @transform_6(%arg0: i32, %arg1: i32) -> (i32, i32, i32) {
    %c0_i32 = arith.constant 0 : i32
    %c0_i32_0 = arith.constant 0 : i32
    return %arg0, %c0_i32, %arg1 : i32, i32, i32
  }
}

module attributes {stable_mosaic.version = 11 : i64} {
  func.func @_mining_cls_kernel(%arg0: i32, %arg1: i32, %arg2: i32, %arg3: memref<2xi32, #tpu.memory_space<smem>>, %arg4: memref<1x1x512xf32, #tpu.memory_space<vmem>>, %arg5: memref<1x1x512xf32, #tpu.memory_space<vmem>>, %arg6: memref<1x1x512xf32, #tpu.memory_space<vmem>>, %arg7: memref<1x1x512xf32, #tpu.memory_space<vmem>>, %arg8: memref<8x512xf32, #tpu.memory_space<vmem>>) attributes {dimension_semantics = [#tpu.dimension_semantics<parallel>, #tpu.dimension_semantics<parallel>, #tpu.dimension_semantics<arbitrary>], iteration_bounds = array<i64: 2, 1, 1>, scalar_prefetch = 1 : i64, scratch_operands = 1 : i64, tpu.core_type = #tpu.core_type<tc>, window_params = [{transform_indices = @transform_0, window_bounds = array<i64: 1, 1, 512>}, {transform_indices = @transform_1, window_bounds = array<i64: 1, 1, 512>}, {transform_indices = @transform_2, window_bounds = array<i64: 1, 1, 512>}, {transform_indices = @transform_3, window_bounds = array<i64: 1, 1, 512>}]} {
    %c0_i32 = arith.constant 0 : i32
    %0 = arith.cmpi eq, %arg2, %c0_i32 : i32
    %1 = arith.extui %0 : i1 to i32
    %c0_i32_0 = arith.constant 0 : i32
    %2 = arith.cmpi ne, %1, %c0_i32_0 : i32
    scf.if %2 {
      %cst_14 = arith.constant 0.000000e+00 : f32
      %41 = vector.broadcast %cst_14 : f32 to vector<8x512xf32>
      %c0_15 = arith.constant 0 : index
      %c0_16 = arith.constant 0 : index
      %42 = vector.load %arg8[%c0_15, %c0_16] : memref<8x512xf32, #tpu.memory_space<vmem>>, vector<8x512xf32>
      tpu.vector_store %arg8[%c0_15, %c0_16], %41 {strides = array<i32>} : memref<8x512xf32, #tpu.memory_space<vmem>>, vector<8x512xf32>,
    } else {
    }
    %c0 = arith.constant 0 : index
    %c0_1 = arith.constant 0 : index
    %c0_2 = arith.constant 0 : index
    %3 = vector.load %arg4[%c0, %c0_1, %c0_2] : memref<1x1x512xf32, #tpu.memory_space<vmem>>, vector<1x1x512xf32>
    %4 = vector.shape_cast %3 : vector<1x1x512xf32> to vector<1x512xf32>
    %c0_3 = arith.constant 0 : index
    %c0_4 = arith.constant 0 : index
    %c0_5 = arith.constant 0 : index
    %5 = vector.load %arg5[%c0_3, %c0_4, %c0_5] : memref<1x1x512xf32, #tpu.memory_space<vmem>>, vector<1x1x512xf32>
    %6 = vector.shape_cast %5 : vector<1x1x512xf32> to vector<1x512xf32>
    %7 = vector.shape_cast %6 : vector<1x512xf32> to vector<1x512xf32>
    %8 = vector.broadcast %7 : vector<1x512xf32> to vector<8x512xf32>
    %9 = tpu.transpose %8, [1, 0] : vector<8x512xf32> -> vector<512x8xf32>
    %10 = vector.extract_strided_slice %9 {offsets = [0, 0], sizes = [512, 1], strides = [1, 1]} : vector<512x8xf32> to vector<512x1xf32>
    %c512_i32 = arith.constant 512 : i32
    %11 = arith.muli %arg2, %c512_i32 : i32
    %12 = tpu.iota {dimensions = array<i32: 0>} : vector<512x1xi32>
    %13 = vector.broadcast %11 : i32 to vector<512x1xi32>
    %14 = arith.addi %13, %12 : vector<512x1xi32>
    %c512_i32_6 = arith.constant 512 : i32
    %15 = arith.muli %arg1, %c512_i32_6 : i32
    %16 = tpu.iota {dimensions = array<i32: 1>} : vector<1x512xi32>
    %17 = vector.broadcast %15 : i32 to vector<1x512xi32>
    %18 = arith.addi %17, %16 : vector<1x512xi32>
    %19 = vector.broadcast %10 : vector<512x1xf32> to vector<512x512xf32>
    %20 = vector.broadcast %4 : vector<1x512xf32> to vector<512x512xf32>
    %21 = arith.cmpf ogt, %19, %20 : vector<512x512xf32>
    %22 = vector.broadcast %10 : vector<512x1xf32> to vector<512x512xf32>
    %23 = vector.broadcast %4 : vector<1x512xf32> to vector<512x512xf32>
    %24 = arith.cmpf oeq, %22, %23 : vector<512x512xf32>
    %25 = vector.broadcast %14 : vector<512x1xi32> to vector<512x512xi32>
    %26 = vector.broadcast %18 : vector<1x512xi32> to vector<512x512xi32>
    %27 = arith.cmpi slt, %25, %26 : vector<512x512xi32>
    %28 = arith.andi %24, %27 : vector<512x512xi1>
    %29 = arith.ori %21, %28 : vector<512x512xi1>
    %30 = arith.extui %29 : vector<512x512xi1> to vector<512x512xi32>
    %31 = arith.sitofp %30 : vector<512x512xi32> to vector<512x512xf32>
    %32 = arith.truncf %31 : vector<512x512xf32> to vector<512x512xbf16>
    %cst = arith.constant 1.000000e+00 : bf16
    %33 = vector.broadcast %cst : bf16 to vector<8x512xbf16>
    %c0_7 = arith.constant 0 : index
    %c0_8 = arith.constant 0 : index
    %34 = vector.load %arg8[%c0_7, %c0_8] : memref<8x512xf32, #tpu.memory_space<vmem>>, vector<8x512xf32>
    %cst_9 = arith.constant dense<0.000000e+00> : vector<8x512xf32>
    %35 = tpu.matmul %33, %32, %cst_9 {dimension_numbers = #tpu.dot_dimension_numbers<[1], [0], [0], [1], [0, 0, 1, 1], [], []>} : vector<8x512xbf16>, vector<512x512xbf16>, vector<8x512xf32> -> vector<8x512xf32>
    %36 = arith.addf %34, %35 : vector<8x512xf32>
    %c0_10 = arith.constant 0 : index
    %c0_11 = arith.constant 0 : index
    %37 = vector.load %arg8[%c0_10, %c0_11] : memref<8x512xf32, #tpu.memory_space<vmem>>, vector<8x512xf32>
    tpu.vector_store %arg8[%c0_10, %c0_11], %36 {strides = array<i32>} : memref<8x512xf32, #tpu.memory_space<vmem>>, vector<8x512xf32>,
    %c0_i32_12 = arith.constant 0 : i32
    %38 = arith.cmpi eq, %arg2, %c0_i32_12 : i32
    %39 = arith.extui %38 : i1 to i32
    %c0_i32_13 = arith.constant 0 : i32
    %40 = arith.cmpi ne, %39, %c0_i32_13 : i32
    scf.if %40 {
      %c0_14 = arith.constant 0 : index
      %c0_15 = arith.constant 0 : index
      %41 = vector.load %arg8[%c0_14, %c0_15] : memref<8x512xf32, #tpu.memory_space<vmem>>, vector<1x512xf32>
      %42 = arith.index_cast %arg0 : i32 to index
      %43 = memref.load %arg3[%42] : memref<2xi32, #tpu.memory_space<smem>>
      %44 = arith.sitofp %43 : i32 to f32
      %cst_16 = arith.constant -1.000000e+00 : f32
      %45 = vector.broadcast %cst_16 : f32 to vector<1x512xf32>
      %46 = arith.cmpf oeq, %4, %45 : vector<1x512xf32>
      %47 = vector.broadcast %44 : f32 to vector<1x512xf32>
      %48 = arith.cmpf olt, %41, %47 : vector<1x512xf32>
      %49 = arith.ori %46, %48 : vector<1x512xi1>
      %c0_17 = arith.constant 0 : index
      %c0_18 = arith.constant 0 : index
      %c0_19 = arith.constant 0 : index
      %50 = vector.load %arg6[%c0_17, %c0_18, %c0_19] : memref<1x1x512xf32, #tpu.memory_space<vmem>>, vector<1x1x512xf32>
      %51 = vector.shape_cast %50 : vector<1x1x512xf32> to vector<1x512xf32>
      %cst_20 = arith.constant 0.000000e+00 : f32
      %52 = vector.broadcast %cst_20 : f32 to vector<1x512xf32>
      %53 = arith.select %49, %51, %52 : vector<1x512xi1>, vector<1x512xf32>
      %c0_21 = arith.constant 0 : index
      %c0_22 = arith.constant 0 : index
      %c0_23 = arith.constant 0 : index
      %54 = vector.load %arg7[%c0_21, %c0_22, %c0_23] : memref<1x1x512xf32, #tpu.memory_space<vmem>>, vector<1x1x512xf32>
      %55 = vector.shape_cast %54 : vector<1x1x512xf32> to vector<1x512xf32>
      %56 = vector.shape_cast %53 : vector<1x512xf32> to vector<1x1x512xf32>
      tpu.vector_store %arg7[%c0_21, %c0_22, %c0_23], %56 {strides = array<i32>} : memref<1x1x512xf32, #tpu.memory_space<vmem>>, vector<1x1x512xf32>,
    } else {
    }
    return
  }
  func.func @transform_0(%arg0: i32, %arg1: i32, %arg2: i32, %arg3: memref<2xi32, #tpu.memory_space<smem>>) -> (i32, i32, i32) {
    %c0_i32 = arith.constant 0 : i32
    %c0_i32_0 = arith.constant 0 : i32
    return %arg0, %c0_i32, %arg1 : i32, i32, i32
  }
  func.func @transform_1(%arg0: i32, %arg1: i32, %arg2: i32, %arg3: memref<2xi32, #tpu.memory_space<smem>>) -> (i32, i32, i32) {
    %c0_i32 = arith.constant 0 : i32
    %c0_i32_0 = arith.constant 0 : i32
    return %arg0, %c0_i32, %arg2 : i32, i32, i32
  }
  func.func @transform_2(%arg0: i32, %arg1: i32, %arg2: i32, %arg3: memref<2xi32, #tpu.memory_space<smem>>) -> (i32, i32, i32) {
    %c0_i32 = arith.constant 0 : i32
    %c0_i32_0 = arith.constant 0 : i32
    return %arg0, %c0_i32, %arg1 : i32, i32, i32
  }
  func.func @transform_3(%arg0: i32, %arg1: i32, %arg2: i32, %arg3: memref<2xi32, #tpu.memory_space<smem>>) -> (i32, i32, i32) {
    %c0_i32 = arith.constant 0 : i32
    %c0_i32_0 = arith.constant 0 : i32
    return %arg0, %c0_i32, %arg1 : i32, i32, i32
  }
}

</mosaic_0001>

<llo_original>
// kernel: multibox_loss.2
$region0: #{multibox_loss.2}
  #allocation0 [shape = 'u32[]', space=smem, size = 0x4, offset = 0x4, fixed_abs, tag = 'smem constant byte address 0x4 - core index']
  #allocation1 [shape = 'u32[144,128]{1,0:T(1,128)}', space=vmem, size = 0x12000, scoped, tag = 'internal scratch']
  %s0 = inlined_call_operand.hbm [shape: f32[2,8,512], index: 0, kind: input, shape index: {}]
  %s1 = inlined_call_operand.vmem [shape: s32[2,1,512], index: 1, kind: input, shape index: {}]
  %s2 = inlined_call_operand.hbm [shape: f32[2,4,512], index: 2, kind: input, shape index: {}]
  %s3 = inlined_call_operand.hbm [shape: f32[2,4,512], index: 3, kind: input, shape index: {}]
  %s4 = inlined_call_operand.vmem [shape: f32[2,1,512], index: 4, kind: output, shape index: {0}]
  %s5 = inlined_call_operand.vmem [shape: f32[2,1,512], index: 5, kind: output, shape index: {1}]
  %s6 = inlined_call_operand.vmem [shape: f32[2,1,512], index: 6, kind: output, shape index: {2}]
  %7 = xla_tuple %s4, %s5, %s6
  %s8 = sld [smem:[#allocation0]]
  $region77: #{multibox_loss.2} parent=0
    _
  %s10 = ssub.s32 1, %s8
  %s11 = scalar_select 0, %s10, %s8
  $region1: #{multibox_loss.2} parent=0
    #allocation2 [shape = 'u8[32768]{0}', space=vmem, size = 0x8000, scoped, tag = 'input window, operand 0']
    #allocation3 [shape = 's32[2]{0}', space=sflag, size = 0x8, scoped, tag = 'scoped memory for multibox_loss.2']
    #allocation4 [shape = 'u8[16384]{0}', space=vmem, size = 0x4000, scoped, tag = 'input window, operand 2']
    #allocation5 [shape = 's32[2]{0}', space=sflag, size = 0x8, scoped, tag = 'scoped memory for multibox_loss.2']
    #allocation6 [shape = 'u8[16384]{0}', space=vmem, size = 0x4000, scoped, tag = 'input window, operand 3']
    %12 = vsyncpa [#allocation3], 0
    %s13 = scalar_lea.sflag [#allocation3], 1
    %14 = vsyncpa %s13, 0
    %15 = vsyncpa [#allocation5], 0
    %s16 = scalar_lea.sflag [#allocation5], 1
    %17 = vsyncpa %s16, 0
    loop: start=0, step=1, limit=4
    $region2: #{multibox_loss.2} parent=1 // loop_pre_header
      _
    $region3: #{multibox_loss.2} parent=1 // loop_header
      %s19 = sphi 0, %s23
      %p20 = scmp.ge.s32.totalorder %s19, 4
      %s26 = sphi 0, %s38
      %s27 = sphi 0, %s34
      %s28 = sphi 0, %s26
      %s29 = sphi 0, %s27
      %s30 = sphi 0, %s28
      %s31 = sphi 0, %s29
      %s43 = sphi 0, %s45
      %s46 = sphi 0, %s43
      %s47 = sphi 0, %s46
      %s63 = sphi 0, %s47
      %s71 = sphi 0, %s73
      %s74 = sphi 0, %s71
      %s75 = sphi 0, %s74
      %s91 = sphi 0, %s75
      %s99 = sphi 0, %s101
      %s102 = sphi 0, %s99
      %s103 = sphi 0, %s102
      %s119 = sphi 0, %s103
      %s127 = sphi 0, %s129
      %s130 = sphi 0, %s127
      %s131 = sphi 0, %s130
      %s147 = sphi 0, %s131
      %s155 = sphi 0, %s157
      %s158 = sphi 0, %s155
      %s159 = sphi 0, %s158
      %s175 = sphi 0, %s159
      %s183 = sphi 0, %s185
      %s186 = sphi 0, %s183
      %s187 = sphi 0, %s186
      %s203 = sphi 0, %s187
      %s211 = sphi 0, %s213
      %s214 = sphi 0, %s211
      %s215 = sphi 0, %s214
      %s231 = sphi 0, %s215
    $region4: #{multibox_loss.2} parent=1 // loop_header_branch
      %22 = sbr.rel (%p20) target = $region8
    $region5: #{multibox_loss.2} parent=1 // loop_body
      %s24 = ssub.s32 %s19, 1
      %s25 = ssub.s32 %s19, 2
      %s32 = sadd.s32 1, %s27
      %p33 = scmp.ge.s32.totalorder %s32, 1
      %s34 = scalar_select %p33, 0, %s32
      %s35 = sadd.s32 1, %s26
      %s36 = scalar_select %p33, %s35, %s26
      %p37 = scmp.ge.s32.totalorder %s36, 2
      %s38 = scalar_select %p37, 0, %s36
      %s39 = ssub.s32 %s26, %s38
      %s40 = ssub.s32 %s27, %s34
      %s41 = sor.u32 %s39, %s40
      %p42 = scmp.eq.s32.totalorder %s41, 0
      %s44 = sadd.s32 %s43, 1
      %s45 = scalar_select %p42, %s43, %s44
      %p48 = pneg %p42
      %p49 = scmp.eq.s32.totalorder %s19, 1
      %p50 = por %p48, %p49
      %p51 = scmp.ne.s32.totalorder %s43, %s46
      %p52 = scmp.eq.s32.totalorder %s19, 0
      %p53 = por %p51, %p52
      %p54 = scmp.ne.s32.totalorder %s43, %s46
      %p55 = scmp.eq.s32.totalorder %s24, 1
      %p56 = por %p54, %p55
      %p57 = scmp.ne.s32.totalorder %s46, %s47
      %p58 = scmp.eq.s32.totalorder %s24, 0
      %p59 = por %p57, %p58
      %p60 = scmp.ne.s32.totalorder %s46, %s47
      %p61 = scmp.eq.s32.totalorder %s25, 1
      %p62 = por %p60, %p61
      %p64 = scmp.ne.s32.totalorder %s47, %s63
      %p65 = scmp.eq.s32.totalorder %s25, 0
      %p66 = por %p64, %p65
      %s67 = ssub.s32 %s26, %s38
      %s68 = ssub.s32 %s27, %s34
      %s69 = sor.u32 %s67, %s68
      %p70 = scmp.eq.s32.totalorder %s69, 0
      %s72 = sadd.s32 %s71, 1
      %s73 = scalar_select %p70, %s71, %s72
      %p76 = pneg %p70
      %p77 = scmp.eq.s32.totalorder %s19, 1
      %p78 = por %p76, %p77
      %p79 = scmp.ne.s32.totalorder %s71, %s74
      %p80 = scmp.eq.s32.totalorder %s19, 0
      %p81 = por %p79, %p80
      %p82 = scmp.ne.s32.totalorder %s71, %s74
      %p83 = scmp.eq.s32.totalorder %s24, 1
      %p84 = por %p82, %p83
      %p85 = scmp.ne.s32.totalorder %s74, %s75
      %p86 = scmp.eq.s32.totalorder %s24, 0
      %p87 = por %p85, %p86
      %p88 = scmp.ne.s32.totalorder %s74, %s75
      %p89 = scmp.eq.s32.totalorder %s25, 1
      %p90 = por %p88, %p89
      %p92 = scmp.ne.s32.totalorder %s75, %s91
      %p93 = scmp.eq.s32.totalorder %s25, 0
      %p94 = por %p92, %p93
      %s95 = ssub.s32 %s26, %s38
      %s96 = ssub.s32 %s27, %s34
      %s97 = sor.u32 %s95, %s96
      %p98 = scmp.eq.s32.totalorder %s97, 0
      %s100 = sadd.s32 %s99, 1
      %s101 = scalar_select %p98, %s99, %s100
      %p104 = pneg %p98
      %p105 = scmp.eq.s32.totalorder %s19, 1
      %p106 = por %p104, %p105
      %p107 = scmp.ne.s32.totalorder %s99, %s102
      %p108 = scmp.eq.s32.totalorder %s19, 0
      %p109 = por %p107, %p108
      %p110 = scmp.ne.s32.totalorder %s99, %s102
      %p111 = scmp.eq.s32.totalorder %s24, 1
      %p112 = por %p110, %p111
      %p113 = scmp.ne.s32.totalorder %s102, %s103
      %p114 = scmp.eq.s32.totalorder %s24, 0
      %p115 = por %p113, %p114
      %p116 = scmp.ne.s32.totalorder %s102, %s103
      %p117 = scmp.eq.s32.totalorder %s25, 1
      %p118 = por %p116, %p117
      %p120 = scmp.ne.s32.totalorder %s103, %s119
      %p121 = scmp.eq.s32.totalorder %s25, 0
      %p122 = por %p120, %p121
      %s123 = ssub.s32 %s26, %s38
      %s124 = ssub.s32 %s27, %s34
      %s125 = sor.u32 %s123, %s124
      %p126 = scmp.eq.s32.totalorder %s125, 0
      %s128 = sadd.s32 %s127, 1
      %s129 = scalar_select %p126, %s127, %s128
      %p132 = pneg %p126
      %p133 = scmp.eq.s32.totalorder %s19, 1
      %p134 = por %p132, %p133
      %p135 = scmp.ne.s32.totalorder %s127, %s130
      %p136 = scmp.eq.s32.totalorder %s19, 0
      %p137 = por %p135, %p136
      %p138 = scmp.ne.s32.totalorder %s127, %s130
      %p139 = scmp.eq.s32.totalorder %s24, 1
      %p140 = por %p138, %p139
      %p141 = scmp.ne.s32.totalorder %s130, %s131
      %p142 = scmp.eq.s32.totalorder %s24, 0
      %p143 = por %p141, %p142
      %p144 = scmp.ne.s32.totalorder %s130, %s131
      %p145 = scmp.eq.s32.totalorder %s25, 1
      %p146 = por %p144, %p145
      %p148 = scmp.ne.s32.totalorder %s131, %s147
      %p149 = scmp.eq.s32.totalorder %s25, 0
      %p150 = por %p148, %p149
      %s151 = ssub.s32 %s26, %s38
      %s152 = ssub.s32 %s27, %s34
      %s153 = sor.u32 %s151, %s152
      %p154 = scmp.eq.s32.totalorder %s153, 0
      %s156 = sadd.s32 %s155, 1
      %s157 = scalar_select %p154, %s155, %s156
      %p160 = pneg %p154
      %p161 = scmp.eq.s32.totalorder %s19, 1
      %p162 = por %p160, %p161
      %p163 = scmp.ne.s32.totalorder %s155, %s158
      %p164 = scmp.eq.s32.totalorder %s19, 0
      %p165 = por %p163, %p164
      %p166 = scmp.ne.s32.totalorder %s155, %s158
      %p167 = scmp.eq.s32.totalorder %s24, 1
      %p168 = por %p166, %p167
      %p169 = scmp.ne.s32.totalorder %s158, %s159
      %p170 = scmp.eq.s32.totalorder %s24, 0
      %p171 = por %p169, %p170
      %p172 = scmp.ne.s32.totalorder %s158, %s159
      %p173 = scmp.eq.s32.totalorder %s25, 1
      %p174 = por %p172, %p173
      %p176 = scmp.ne.s32.totalorder %s159, %s175
      %p177 = scmp.eq.s32.totalorder %s25, 0
      %p178 = por %p176, %p177
      %s179 = ssub.s32 %s26, %s38
      %s180 = ssub.s32 %s27, %s34
      %s181 = sor.u32 %s179, %s180
      %p182 = scmp.eq.s32.totalorder %s181, 0
      %s184 = sadd.s32 %s183, 1
      %s185 = scalar_select %p182, %s183, %s184
      %p188 = pneg %p182
      %p189 = scmp.eq.s32.totalorder %s19, 1
      %p190 = por %p188, %p189
      %p191 = scmp.ne.s32.totalorder %s183, %s186
      %p192 = scmp.eq.s32.totalorder %s19, 0
      %p193 = por %p191, %p192
      %p194 = scmp.ne.s32.totalorder %s183, %s186
      %p195 = scmp.eq.s32.totalorder %s24, 1
      %p196 = por %p194, %p195
      %p197 = scmp.ne.s32.totalorder %s186, %s187
      %p198 = scmp.eq.s32.totalorder %s24, 0
      %p199 = por %p197, %p198
      %p200 = scmp.ne.s32.totalorder %s186, %s187
      %p201 = scmp.eq.s32.totalorder %s25, 1
      %p202 = por %p200, %p201
      %p204 = scmp.ne.s32.totalorder %s187, %s203
      %p205 = scmp.eq.s32.totalorder %s25, 0
      %p206 = por %p204, %p205
      %s207 = ssub.s32 %s26, %s38
      %s208 = ssub.s32 %s27, %s34
      %s209 = sor.u32 %s207, %s208
      %p210 = scmp.eq.s32.totalorder %s209, 0
      %s212 = sadd.s32 %s211, 1
      %s213 = scalar_select %p210, %s211, %s212
      %p216 = pneg %p210
      %p217 = scmp.eq.s32.totalorder %s19, 1
      %p218 = por %p216, %p217
      %p219 = scmp.ne.s32.totalorder %s211, %s214
      %p220 = scmp.eq.s32.totalorder %s19, 0
      %p221 = por %p219, %p220
      %p222 = scmp.ne.s32.totalorder %s211, %s214
      %p223 = scmp.eq.s32.totalorder %s24, 1
      %p224 = por %p222, %p223
      %p225 = scmp.ne.s32.totalorder %s214, %s215
      %p226 = scmp.eq.s32.totalorder %s24, 0
      %p227 = por %p225, %p226
      %p228 = scmp.ne.s32.totalorder %s214, %s215
      %p229 = scmp.eq.s32.totalorder %s25, 1
      %p230 = por %p228, %p229
      %p232 = scmp.ne.s32.totalorder %s215, %s231
      %p233 = scmp.eq.s32.totalorder %s25, 0
      %p234 = por %p232, %p233
      %p235 = scmp.le.s32.totalorder 1, %s19
      %p236 = scmp.lt.s32.totalorder %s19, 3
      %p237 = pnand %p235, %p236
      %p238 = pneg %p237
      // Predicated region
      $region9: #{multibox_loss.2} parent=5 // pred_check
        _
      $region10: #{multibox_loss.2} parent=5 // pred_check_branch
        %240 = sbr.rel (%p237) target = $region12
      $region11: #{multibox_loss.2} parent=5 // pred_region
        %s241 = ssub.s32 %s19, 1
      $region12: #{multibox_loss.2} parent=5 // pred_fallthru
        _
      %p242 = scmp.lt.s32.totalorder %s19, 2
      // Predicated region
      $region13: #{multibox_loss.2} parent=5 // pred_check
        %p243 = pneg %p242
      $region14: #{multibox_loss.2} parent=5 // pred_check_branch
        %245 = sbr.rel (%p243) target = $region16
      $region15: #{multibox_loss.2} parent=5 // pred_region
        // Predicated region
        $region17: #{multibox_loss.2} parent=15 // pred_check
          %p246 = pneg %p53
        $region18: #{multibox_loss.2} parent=15 // pred_check_branch
          %248 = sbr.rel (%p246) target = $region20
        $region19: #{multibox_loss.2} parent=15 // pred_region
          %s249 = sand.u32 %s43, 1
          %s250 = scalar_lea.sflag [#allocation3], %s249
          %s251 = sand.u32 %s43, 1
          %s252 = smul.addr %s251, 32
          %s253 = scalar_lea.vmem [#allocation2], %s252
          %s254 = smul.u32 4, %s27
          %s256 = ssub.s32 512, 512
          %257 = vsyncadd %s250, %s256
          %s258 = smul.addr %s26, 4
          %s259 = sadd.s32 %s254, %s258
          %s260 = smul.addr %s259, 128
          %s261 = scalar_lea.hbm %s0, %s260
          %s263 = sshll.u32 %s253, 4
          %s264 = int_to_ptr.vmem [resolvable:$true] %s263
          %266 = dma.hbm_to_vmem [thread:$0]  %s261, 512, %s264, %s250
        $region20: #{multibox_loss.2} parent=15 // pred_fallthru
          _
        // Predicated region
        $region21: #{multibox_loss.2} parent=15 // pred_check
          %p267 = pneg %p81
        $region22: #{multibox_loss.2} parent=15 // pred_check_branch
          %269 = sbr.rel (%p267) target = $region24
        $region23: #{multibox_loss.2} parent=15 // pred_region
          %s270 = smul.u32 4, %s27
          %p271 = scmp.lt.s32.totalorder %s26, 1
          %s272 = scalar_select %p271, %s26, 1
          %p273 = scmp.lt.s32.totalorder %s270, 3
          %s274 = scalar_select %p273, %s270, 3
          %s275 = smul.addr %s272, 4
          %s276 = sadd.s32 %s274, %s275
          %s277 = scalar_lea.vmem %s1, %s276
          %s278 = smul.u32 4, %s27
        $region24: #{multibox_loss.2} parent=15 // pred_fallthru
          _
        // Predicated region
        $region25: #{multibox_loss.2} parent=15 // pred_check
          %p279 = pneg %p109
        $region26: #{multibox_loss.2} parent=15 // pred_check_branch
          %281 = sbr.rel (%p279) target = $region28
        $region27: #{multibox_loss.2} parent=15 // pred_region
          %s282 = sand.u32 %s19, 1
          %s283 = scalar_lea.sflag [#allocation5], %s282
          %s284 = sand.u32 %s99, 1
          %s285 = smul.addr %s284, 16
          %s286 = scalar_lea.vmem [#allocation4], %s285
          %s287 = smul.u32 4, %s27
          %s289 = ssub.s32 256, 256
          %290 = vsyncadd %s283, %s289
          %s291 = smul.addr %s26, 4
          %s292 = sadd.s32 %s287, %s291
          %s293 = smul.addr %s292, 64
          %s294 = scalar_lea.hbm %s2, %s293
          %s296 = sshll.u32 %s286, 4
          %s297 = int_to_ptr.vmem [resolvable:$true] %s296
          %299 = dma.hbm_to_vmem [thread:$0]  %s294, 256, %s297, %s283
        $region28: #{multibox_loss.2} parent=15 // pred_fallthru
          _
        // Predicated region
        $region29: #{multibox_loss.2} parent=15 // pred_check
          %p300 = pneg %p137
        $region30: #{multibox_loss.2} parent=15 // pred_check_branch
          %302 = sbr.rel (%p300) target = $region32
        $region31: #{multibox_loss.2} parent=15 // pred_region
          %s303 = sand.u32 %s19, 1
          %s304 = scalar_lea.sflag [#allocation5], %s303
          %s305 = sand.u32 %s127, 1
          %s306 = smul.addr %s305, 16
          %s307 = scalar_lea.vmem [#allocation6], %s306
          %s308 = smul.u32 4, %s27
          %s310 = ssub.s32 256, 256
          %311 = vsyncadd %s304, %s310
          %s312 = smul.addr %s26, 4
          %s313 = sadd.s32 %s308, %s312
          %s314 = smul.addr %s313, 64
          %s315 = scalar_lea.hbm %s3, %s314
          %s317 = sshll.u32 %s307, 4
          %s318 = int_to_ptr.vmem [resolvable:$true] %s317
          %320 = dma.hbm_to_vmem [thread:$0]  %s315, 256, %s318, %s304
        $region32: #{multibox_loss.2} parent=15 // pred_fallthru
          _
      $region16: #{multibox_loss.2} parent=5 // pred_fallthru
        _
      %p321 = scmp.le.s32.totalorder 1, %s19
      %p322 = scmp.lt.s32.totalorder %s19, 3
      %p323 = pnand %p321, %p322
      %p324 = pneg %p323
      // Predicated region
      $region33: #{multibox_loss.2} parent=5 // pred_check
        _
      $region34: #{multibox_loss.2} parent=5 // pred_check_branch
        %326 = sbr.rel (%p323) target = $region36
      $region35: #{multibox_loss.2} parent=5 // pred_region
        %s327 = ssub.s32 %s19, 1
        %s328 = sand.u32 %s46, 1
        %s329 = scalar_lea.sflag [#allocation3], %s328
        %s330 = sand.u32 %s46, 1
        %s331 = smul.addr %s330, 32
        %s332 = scalar_lea.vmem [#allocation2], %s331
        // Predicated region
        $region37: #{multibox_loss.2} parent=35 // pred_check
          %p333 = pneg %p59
        $region38: #{multibox_loss.2} parent=35 // pred_check_branch
          %335 = sbr.rel (%p333) target = $region40
        $region39: #{multibox_loss.2} parent=35 // pred_region
          %336 = dma.done %s329, 512
        $region40: #{multibox_loss.2} parent=35 // pred_fallthru
          _
        %s337 = sand.u32 %s24, 1
        %s338 = scalar_lea.sflag [#allocation5], %s337
        %s339 = sand.u32 %s102, 1
        %s340 = smul.addr %s339, 16
        %s341 = scalar_lea.vmem [#allocation4], %s340
        // Predicated region
        $region41: #{multibox_loss.2} parent=35 // pred_check
          %p342 = pneg %p115
        $region42: #{multibox_loss.2} parent=35 // pred_check_branch
          %344 = sbr.rel (%p342) target = $region44
        $region43: #{multibox_loss.2} parent=35 // pred_region
          %345 = dma.done %s338, 256
        $region44: #{multibox_loss.2} parent=35 // pred_fallthru
          _
        %s346 = sand.u32 %s24, 1
        %s347 = scalar_lea.sflag [#allocation5], %s346
        %s348 = sand.u32 %s130, 1
        %s349 = smul.addr %s348, 16
        %s350 = scalar_lea.vmem [#allocation6], %s349
        // Predicated region
        $region45: #{multibox_loss.2} parent=35 // pred_check
          %p351 = pneg %p143
        $region46: #{multibox_loss.2} parent=35 // pred_check_branch
          %353 = sbr.rel (%p351) target = $region48
        $region47: #{multibox_loss.2} parent=35 // pred_region
          %354 = dma.done %s347, 256
        $region48: #{multibox_loss.2} parent=35 // pred_fallthru
          _
        %s355 = sand.u32 %s46, 1
        %s356 = scalar_lea.sflag [#allocation3], %s355
        %s357 = sand.u32 %s46, 1
        %s358 = smul.addr %s357, 32
        %s359 = scalar_lea.vmem [#allocation2], %s358
        %p360 = pneg %p59
        %p361 = pneg %p56
        %s362 = smul.u32 4, %s29
        %p363 = scmp.lt.s32.totalorder %s28, 1
        %s364 = scalar_select %p363, %s28, 1
        %p365 = scmp.lt.s32.totalorder %s362, 3
        %s366 = scalar_select %p365, %s362, 3
        %s367 = smul.addr %s364, 4
        %s368 = sadd.s32 %s366, %s367
        %s369 = scalar_lea.vmem %s1, %s368
        %p370 = pneg %p87
        %p371 = pneg %p84
        %s372 = sand.u32 %s24, 1
        %s373 = scalar_lea.sflag [#allocation5], %s372
        %s374 = sand.u32 %s102, 1
        %s375 = smul.addr %s374, 16
        %s376 = scalar_lea.vmem [#allocation4], %s375
        %p377 = pneg %p115
        %p378 = pneg %p112
        %s379 = sand.u32 %s24, 1
        %s380 = scalar_lea.sflag [#allocation5], %s379
        %s381 = sand.u32 %s130, 1
        %s382 = smul.addr %s381, 16
        %s383 = scalar_lea.vmem [#allocation6], %s382
        %p384 = pneg %p143
        %p385 = pneg %p140
        %p386 = pneg %p171
        %p387 = pneg %p168
        %s388 = smul.u32 4, %s29
        %p389 = scmp.lt.s32.totalorder %s28, 1
        %s390 = scalar_select %p389, %s28, 1
        %p391 = scmp.lt.s32.totalorder %s388, 3
        %s392 = scalar_select %p391, %s388, 3
        %s393 = smul.addr %s390, 4
        %s394 = sadd.s32 %s392, %s393
        %s395 = scalar_lea.vmem %s4, %s394
        %p396 = pneg %p199
        %p397 = pneg %p196
        %s398 = smul.u32 4, %s29
        %p399 = scmp.lt.s32.totalorder %s28, 1
        %s400 = scalar_select %p399, %s28, 1
        %p401 = scmp.lt.s32.totalorder %s398, 3
        %s402 = scalar_select %p401, %s398, 3
        %s403 = smul.addr %s400, 4
        %s404 = sadd.s32 %s402, %s403
        %s405 = scalar_lea.vmem %s5, %s404
        %p406 = pneg %p227
        %p407 = pneg %p224
        %s408 = smul.u32 4, %s29
        %p409 = scmp.lt.s32.totalorder %s28, 1
        %s410 = scalar_select %p409, %s28, 1
        %p411 = scmp.lt.s32.totalorder %s408, 3
        %s412 = scalar_select %p411, %s408, 3
        %s413 = smul.addr %s410, 4
        %s414 = sadd.s32 %s412, %s413
        %s415 = scalar_lea.vmem %s6, %s414
        %s416 = smul.u32 4, %s29
        %s417 = smul.u32 4, %s29
        %p418 = scmp.lt.s32.totalorder %s28, 1
        %s419 = scalar_select %p418, %s28, 1
        %p420 = scmp.lt.s32.totalorder %s417, 3
        %s421 = scalar_select %p420, %s417, 3
        %s422 = smul.addr %s419, 4
        %s423 = sadd.s32 %s421, %s422
        %s424 = scalar_lea.vmem %s1, %s423
        %s425 = smul.u32 4, %s29
        %s426 = smul.u32 4, %s29
        %s427 = smul.u32 4, %s29
        %s428 = smul.u32 4, %s29
        %p429 = scmp.lt.s32.totalorder %s28, 1
        %s430 = scalar_select %p429, %s28, 1
        %p431 = scmp.lt.s32.totalorder %s428, 3
        %s432 = scalar_select %p431, %s428, 3
        %s433 = smul.addr %s430, 4
        %s434 = sadd.s32 %s432, %s433
        %s435 = scalar_lea.vmem %s4, %s434
        %s436 = smul.u32 4, %s29
        %s437 = smul.u32 4, %s29
        %p438 = scmp.lt.s32.totalorder %s28, 1
        %s439 = scalar_select %p438, %s28, 1
        %p440 = scmp.lt.s32.totalorder %s437, 3
        %s441 = scalar_select %p440, %s437, 3
        %s442 = smul.addr %s439, 4
        %s443 = sadd.s32 %s441, %s442
        %s444 = scalar_lea.vmem %s5, %s443
        %s445 = smul.u32 4, %s29
        %s446 = smul.u32 4, %s29
        %p447 = scmp.lt.s32.totalorder %s28, 1
        %s448 = scalar_select %p447, %s28, 1
        %p449 = scmp.lt.s32.totalorder %s446, 3
        %s450 = scalar_select %p449, %s446, 3
        %s451 = smul.addr %s448, 4
        %s452 = sadd.s32 %s450, %s451
        %s453 = scalar_lea.vmem %s6, %s452
        %s454 = smul.u32 4, %s29
        %v455 = vld [vmem:[%s332] sm:$0xff]
        %v456 = vld [vmem:[%s332 + $0x8] sm:$0xff]
        %v457 = vld [vmem:[%s332 + $0x10] sm:$0xff]
        %v458 = vld [vmem:[%s332 + $0x18] sm:$0xff]
        %v459 = vld [vmem:[%s424] sm:$0xf]
        %v460 = vrot.slane %v455, 4
        %v461 = vmax.f32 %v455, %v460
        %v462 = vrot.slane %v461, 2
        %v463 = vmax.f32 %v461, %v462
        %v464 = vrot.slane %v463, 1
        %v465 = vmax.f32 %v463, %v464
        %v466 = vrot.slane %v456, 4
        %v467 = vmax.f32 %v456, %v466
        %v468 = vrot.slane %v467, 2
        %v469 = vmax.f32 %v467, %v468
        %v470 = vrot.slane %v469, 1
        %v471 = vmax.f32 %v469, %v470
        %v472 = vrot.slane %v457, 4
        %v473 = vmax.f32 %v457, %v472
        %v474 = vrot.slane %v473, 2
        %v475 = vmax.f32 %v473, %v474
        %v476 = vrot.slane %v475, 1
        %v477 = vmax.f32 %v475, %v476
        %v478 = vrot.slane %v458, 4
        %v479 = vmax.f32 %v458, %v478
        %v480 = vrot.slane %v479, 2
        %v481 = vmax.f32 %v479, %v480
        %v482 = vrot.slane %v481, 1
        %v483 = vmax.f32 %v481, %v482
        %v484 = vsub.f32 %v455, %v465
        %v485 = vsub.f32 %v456, %v471
        %v486 = vsub.f32 %v457, %v477
        %v487 = vsub.f32 %v458, %v483
        %v488 = vmul.f32 %v484, 1.442695
        %v489 = vpow.pop %v488
        %v490 = vmul.f32 %v485, 1.442695
        %v491 = vpow.pop %v490
        %v492 = vmul.f32 %v486, 1.442695
        %v493 = vpow.pop %v492
        %v494 = vmul.f32 %v487, 1.442695
        %v495 = vpow.pop %v494
        %v496 = vrot.slane %v489, 4
        %v497 = vadd.f32 %v489, %v496
        %v498 = vrot.slane %v497, 2
        %v499 = vadd.f32 %v497, %v498
        %v500 = vrot.slane %v499, 1
        %v501 = vadd.f32 %v499, %v500
        %v502 = vrot.slane %v491, 4
        %v503 = vadd.f32 %v491, %v502
        %v504 = vrot.slane %v503, 2
        %v505 = vadd.f32 %v503, %v504
        %v506 = vrot.slane %v505, 1
        %v507 = vadd.f32 %v505, %v506
        %v508 = vrot.slane %v493, 4
        %v509 = vadd.f32 %v493, %v508
        %v510 = vrot.slane %v509, 2
        %v511 = vadd.f32 %v509, %v510
        %v512 = vrot.slane %v511, 1
        %v513 = vadd.f32 %v511, %v512
        %v514 = vrot.slane %v495, 4
        %v515 = vadd.f32 %v495, %v514
        %v516 = vrot.slane %v515, 2
        %v517 = vadd.f32 %v515, %v516
        %v518 = vrot.slane %v517, 1
        %v519 = vadd.f32 %v517, %v518
        %v520 = vlog2.pop %v501
        %v521 = vmul.f32 %v520, 0.6931472
        %v522 = vlog2.pop %v507
        %v523 = vmul.f32 %v522, 0.6931472
        %v524 = vlog2.pop %v513
        %v525 = vmul.f32 %v524, 0.6931472
        %v526 = vlog2.pop %v519
        %v527 = vmul.f32 %v526, 0.6931472
        %v528 = vadd.f32 %v465, %v521
        %v529 = vadd.f32 %v471, %v523
        %v530 = vadd.f32 %v477, %v525
        %v531 = vadd.f32 %v483, %v527
        %v532 = vsub.f32 %v528, %v455
        %v533 = vsub.f32 %v529, %v456
        %v534 = vsub.f32 %v530, %v457
        %v535 = vsub.f32 %v531, %v458
        %vm536 = vcmp.gt.s32.totalorder %v459, 0
        %v537 = vsel %vm536, %v459, 0
        %v538 = vlaneseq
        %v539 = vshrl.u32 %v538, 7
        %v540 = vlaneseq
        %v541 = vshrl.u32 %v540, 7
        %v542 = vsub.s32 0, %v541
        %v543 = vrot.slane %v537, %v542
        %v544 = vlaneseq
        %v545 = vshrl.u32 %v544, 7
        %v546 = vsub.s32 1, %v545
        %v547 = vrot.slane %v537, %v546
        %v548 = vlaneseq
        %v549 = vshrl.u32 %v548, 7
        %v550 = vsub.s32 2, %v549
        %v551 = vrot.slane %v537, %v550
        %v552 = vlaneseq
        %v553 = vshrl.u32 %v552, 7
        %v554 = vsub.s32 3, %v553
        %v555 = vrot.slane %v537, %v554
        %vm556 = vcmp.eq.s32.totalorder %v539, %v543
        %vm557 = vcmp.eq.s32.totalorder %v539, %v547
        %vm558 = vcmp.eq.s32.totalorder %v539, %v551
        %vm559 = vcmp.eq.s32.totalorder %v539, %v555
        %v560 = vsel %vm556, 1, 0
        %v561 = vsel %vm557, 1, 0
        %v562 = vsel %vm558, 1, 0
        %v563 = vsel %vm559, 1, 0
        %v564 = vcvt.s32.f32 %v560
        %v565 = vcvt.s32.f32 %v561
        %v566 = vcvt.s32.f32 %v562
        %v567 = vcvt.s32.f32 %v563
        %v568 = vmul.f32 %v455, %v564
        %v569 = vmul.f32 %v456, %v565
        %v570 = vmul.f32 %v457, %v566
        %v571 = vmul.f32 %v458, %v567
        %v572 = vrot.slane %v568, 4
        %v573 = vadd.f32 %v568, %v572
        %v574 = vrot.slane %v573, 2
        %v575 = vadd.f32 %v573, %v574
        %v576 = vrot.slane %v575, 1
        %v577 = vadd.f32 %v575, %v576
        %v578 = vrot.slane %v569, 4
        %v579 = vadd.f32 %v569, %v578
        %v580 = vrot.slane %v579, 2
        %v581 = vadd.f32 %v579, %v580
        %v582 = vrot.slane %v581, 1
        %v583 = vadd.f32 %v581, %v582
        %v584 = vrot.slane %v570, 4
        %v585 = vadd.f32 %v570, %v584
        %v586 = vrot.slane %v585, 2
        %v587 = vadd.f32 %v585, %v586
        %v588 = vrot.slane %v587, 1
        %v589 = vadd.f32 %v587, %v588
        %v590 = vrot.slane %v571, 4
        %v591 = vadd.f32 %v571, %v590
        %v592 = vrot.slane %v591, 2
        %v593 = vadd.f32 %v591, %v592
        %v594 = vrot.slane %v593, 1
        %v595 = vadd.f32 %v593, %v594
        %v596 = vsub.f32 %v577, %v465
        %v597 = vsub.f32 %v583, %v471
        %v598 = vsub.f32 %v589, %v477
        %v599 = vsub.f32 %v595, %v483
        %v600 = vsub.f32 %v596, %v521
        %v601 = vsub.f32 %v597, %v523
        %v602 = vsub.f32 %v598, %v525
        %v603 = vsub.f32 %v599, %v527
        %v604 = vmul.f32 %v600, 1.442695
        %v605 = vpow.pop %v604
        %v606 = vmul.f32 %v601, 1.442695
        %v607 = vpow.pop %v606
        %v608 = vmul.f32 %v602, 1.442695
        %v609 = vpow.pop %v608
        %v610 = vmul.f32 %v603, 1.442695
        %v611 = vpow.pop %v610
        %vm612 = vcmp.eq.s32.totalorder %v537, 0
        %v613 = vsel %vm612, 0.25, 0.75
        %v614 = vsub.f32 1.0, %v605
        %v615 = vsub.f32 1.0, %v607
        %v616 = vsub.f32 1.0, %v609
        %v617 = vsub.f32 1.0, %v611
        %v618 = vmax.f32 %v614, 0.0
        %v619 = vmax.f32 %v615, 0.0
        %v620 = vmax.f32 %v616, 0.0
        %v621 = vmax.f32 %v617, 0.0
        %v622 = vmul.f32 %v618, %v618
        %v623 = vmul.f32 %v619, %v619
        %v624 = vmul.f32 %v620, %v620
        %v625 = vmul.f32 %v621, %v621
        %v626 = vsub.f32 0.0, %v613
        %v631 = vcombine.low %v622, %v623
        %v632 = vcombine.low %v624, %v625
        %v634 = vunpack.c.l.s4 1966171168
        %v635 = vunpack.c.0.s8 %v634
        %v636 = vlaneseq
        %v637 = vshrl.u32 %v636, 7
        %v638 = vsub.s32 %v635, %v637
        %v639 = vrot.slane %v631, %v638
        %v641 = vunpack.c.l.s4 1966171168
        %v642 = vunpack.c.0.s8 %v641
        %v643 = vlaneseq
        %v644 = vshrl.u32 %v643, 7
        %v645 = vsub.s32 %v642, %v644
        %v646 = vrot.slane %v632, %v645
        %v647 = vcombine.low %v639, %v646
        %v649 = vunpack.c.l.s4 1966171168
        %v650 = vunpack.c.0.s8 %v649
        %v651 = vlaneseq
        %v652 = vshrl.u32 %v651, 7
        %v653 = vsub.s32 %v650, %v652
        %v654 = vrot.slane %v647, %v653
        %v656 = vmul.f32 %v626, %v654
        %v661 = vcombine.low %v600, %v601
        %v662 = vcombine.low %v602, %v603
        %v664 = vunpack.c.l.s4 1966171168
        %v665 = vunpack.c.0.s8 %v664
        %v666 = vlaneseq
        %v667 = vshrl.u32 %v666, 7
        %v668 = vsub.s32 %v665, %v667
        %v669 = vrot.slane %v661, %v668
        %v671 = vunpack.c.l.s4 1966171168
        %v672 = vunpack.c.0.s8 %v671
        %v673 = vlaneseq
        %v674 = vshrl.u32 %v673, 7
        %v675 = vsub.s32 %v672, %v674
        %v676 = vrot.slane %v662, %v675
        %v677 = vcombine.low %v669, %v676
        %v679 = vunpack.c.l.s4 1966171168
        %v680 = vunpack.c.0.s8 %v679
        %v681 = vlaneseq
        %v682 = vshrl.u32 %v681, 7
        %v683 = vsub.s32 %v680, %v682
        %v684 = vrot.slane %v677, %v683
        %v686 = vmul.f32 %v656, %v684
        %vm687 = vcmp.gt.s32.totalorder %v459, 0
        %vm688 = vcmp.lt.s32.totalorder %v459, 0
        %v693 = vcombine.low %v532, %v533
        %v694 = vcombine.low %v534, %v535
        %v696 = vunpack.c.l.s4 1966171168
        %v697 = vunpack.c.0.s8 %v696
        %v698 = vlaneseq
        %v699 = vshrl.u32 %v698, 7
        %v700 = vsub.s32 %v697, %v699
        %v701 = vrot.slane %v693, %v700
        %v703 = vunpack.c.l.s4 1966171168
        %v704 = vunpack.c.0.s8 %v703
        %v705 = vlaneseq
        %v706 = vshrl.u32 %v705, 7
        %v707 = vsub.s32 %v704, %v706
        %v708 = vrot.slane %v694, %v707
        %v709 = vcombine.low %v701, %v708
        %v711 = vunpack.c.l.s4 1966171168
        %v712 = vunpack.c.0.s8 %v711
        %v713 = vlaneseq
        %v714 = vshrl.u32 %v713, 7
        %v715 = vsub.s32 %v712, %v714
        %v716 = vrot.slane %v709, %v715
        %v718 = vsel %vm688, -2.0, %v716
        %v719 = vsel %vm687, -1.0, %v718
        %v720 = vld [vmem:[%s341] sm:$0xff]
        %v721 = vld [vmem:[%s341 + $0x8] sm:$0xff]
        %v722 = vld [vmem:[%s350] sm:$0xff]
        %v723 = vld [vmem:[%s350 + $0x8] sm:$0xff]
        %v724 = vsub.f32 %v720, %v722
        %v725 = vsub.f32 %v721, %v723
        %v726 = vand.u32 2147483647, %v724
        %v727 = vand.u32 2147483647, %v725
        %vm728 = vcmp.lt.f32.partialorder %v726, 1.0
        %vm729 = vcmp.lt.f32.partialorder %v727, 1.0
        %v730 = vmul.f32 %v726, 0.5
        %v731 = vmul.f32 %v727, 0.5
        %v732 = vmul.f32 %v730, %v726
        %v733 = vmul.f32 %v731, %v727
        %v734 = vsub.f32 %v726, 0.5
        %v735 = vsub.f32 %v727, 0.5
        %v736 = vsel %vm728, %v732, %v734
        %v737 = vsel %vm729, %v733, %v735
        %v740 = vcombine.high %v736, %v736
        %v741 = vcombine.high %v737, %v737
        %vm744 = vcmask 1043456
        %v745 = vsel %vm744, %v736, 0.0
        %v746 = vrot.slane %v745, 4
        %v747 = vadd.f32 %v745, %v746
        %v748 = vrot.slane %v747, 2
        %v749 = vadd.f32 %v747, %v748
        %v750 = vrot.slane %v749, 1
        %v751 = vadd.f32 %v749, %v750
        %v752 = vsel %vm744, %v740, 0.0
        %v753 = vrot.slane %v752, 4
        %v754 = vadd.f32 %v752, %v753
        %v755 = vrot.slane %v754, 2
        %v756 = vadd.f32 %v754, %v755
        %v757 = vrot.slane %v756, 1
        %v758 = vadd.f32 %v756, %v757
        %v759 = vsel %vm744, %v737, 0.0
        %v760 = vrot.slane %v759, 4
        %v761 = vadd.f32 %v759, %v760
        %v762 = vrot.slane %v761, 2
        %v763 = vadd.f32 %v761, %v762
        %v764 = vrot.slane %v763, 1
        %v765 = vadd.f32 %v763, %v764
        %v766 = vsel %vm744, %v741, 0.0
        %v767 = vrot.slane %v766, 4
        %v768 = vadd.f32 %v766, %v767
        %v769 = vrot.slane %v768, 2
        %v770 = vadd.f32 %v768, %v769
        %v771 = vrot.slane %v770, 1
        %v772 = vadd.f32 %v770, %v771
        %v777 = vcombine.low %v751, %v758
        %v778 = vcombine.low %v765, %v772
        %v780 = vunpack.c.l.s4 1966171168
        %v781 = vunpack.c.0.s8 %v780
        %v782 = vlaneseq
        %v783 = vshrl.u32 %v782, 7
        %v784 = vsub.s32 %v781, %v783
        %v785 = vrot.slane %v777, %v784
        %v787 = vunpack.c.l.s4 1966171168
        %v788 = vunpack.c.0.s8 %v787
        %v789 = vlaneseq
        %v790 = vshrl.u32 %v789, 7
        %v791 = vsub.s32 %v788, %v790
        %v792 = vrot.slane %v778, %v791
        %v793 = vcombine.low %v785, %v792
        %v795 = vunpack.c.l.s4 1966171168
        %v796 = vunpack.c.0.s8 %v795
        %v797 = vlaneseq
        %v798 = vshrl.u32 %v797, 7
        %v799 = vsub.s32 %v796, %v798
        %v800 = vrot.slane %v793, %v799
        %v802 = vsel %vm687, %v800, 0.0
        %v803 = vlaneseq
        %vm804 = vcmp.ge.s32.totalorder %v803, 0
        %vm805 = vcmp.lt.s32.totalorder %v803, 512
        %vm806 = vmand %vm804, %vm805
        %807 = vst.msk [vmem:[%s435] sm:$0xf] %vm806, %v719
        %808 = vst.msk [vmem:[%s444] sm:$0xf] %vm806, %v686
        %809 = vst.msk [vmem:[%s453] sm:$0xf] %vm806, %v802
        %s810 = smul.u32 4, %s29
        %p811 = scmp.lt.s32.totalorder %s28, 1
        %s812 = scalar_select %p811, %s28, 1
        %p813 = scmp.lt.s32.totalorder %s810, 3
        %s814 = scalar_select %p813, %s810, 3
        %s815 = smul.addr %s812, 4
        %s816 = sadd.s32 %s814, %s815
        %s817 = scalar_lea.vmem %s4, %s816
        %s818 = smul.u32 4, %s29
        %p819 = scmp.lt.s32.totalorder %s28, 1
        %s820 = scalar_select %p819, %s28, 1
        %p821 = scmp.lt.s32.totalorder %s818, 3
        %s822 = scalar_select %p821, %s818, 3
        %s823 = smul.addr %s820, 4
        %s824 = sadd.s32 %s822, %s823
        %s825 = scalar_lea.vmem %s5, %s824
        %s826 = smul.u32 4, %s29
        %p827 = scmp.lt.s32.totalorder %s28, 1
        %s828 = scalar_select %p827, %s28, 1
        %p829 = scmp.lt.s32.totalorder %s826, 3
        %s830 = scalar_select %p829, %s826, 3
        %s831 = smul.addr %s828, 4
        %s832 = sadd.s32 %s830, %s831
        %s833 = scalar_lea.vmem %s6, %s832
        // Predicated region
        $region49: #{multibox_loss.2} parent=35 // pred_check
          %p834 = pneg %p168
        $region50: #{multibox_loss.2} parent=35 // pred_check_branch
          %836 = sbr.rel (%p834) target = $region52
        $region51: #{multibox_loss.2} parent=35 // pred_region
          %s837 = smul.u32 4, %s29
        $region52: #{multibox_loss.2} parent=35 // pred_fallthru
          _
        // Predicated region
        $region53: #{multibox_loss.2} parent=35 // pred_check
          %p838 = pneg %p196
        $region54: #{multibox_loss.2} parent=35 // pred_check_branch
          %840 = sbr.rel (%p838) target = $region56
        $region55: #{multibox_loss.2} parent=35 // pred_region
          %s841 = smul.u32 4, %s29
        $region56: #{multibox_loss.2} parent=35 // pred_fallthru
          _
        // Predicated region
        $region57: #{multibox_loss.2} parent=35 // pred_check
          %p842 = pneg %p224
        $region58: #{multibox_loss.2} parent=35 // pred_check_branch
          %844 = sbr.rel (%p842) target = $region60
        $region59: #{multibox_loss.2} parent=35 // pred_region
          %s845 = smul.u32 4, %s29
        $region60: #{multibox_loss.2} parent=35 // pred_fallthru
          _
      $region36: #{multibox_loss.2} parent=5 // pred_fallthru
        _
      %p846 = scmp.le.s32.totalorder 2, %s19
      // Predicated region
      $region61: #{multibox_loss.2} parent=5 // pred_check
        %p847 = pneg %p846
      $region62: #{multibox_loss.2} parent=5 // pred_check_branch
        %849 = sbr.rel (%p847) target = $region64
      $region63: #{multibox_loss.2} parent=5 // pred_region
        %s850 = ssub.s32 %s19, 2
        // Predicated region
        $region65: #{multibox_loss.2} parent=63 // pred_check
          %p851 = pneg %p174
        $region66: #{multibox_loss.2} parent=63 // pred_check_branch
          %853 = sbr.rel (%p851) target = $region68
        $region67: #{multibox_loss.2} parent=63 // pred_region
          %s854 = smul.u32 4, %s31
          %p855 = scmp.lt.s32.totalorder %s30, 1
          %s856 = scalar_select %p855, %s30, 1
          %p857 = scmp.lt.s32.totalorder %s854, 3
          %s858 = scalar_select %p857, %s854, 3
          %s859 = smul.addr %s856, 4
          %s860 = sadd.s32 %s858, %s859
          %s861 = scalar_lea.vmem %s4, %s860
        $region68: #{multibox_loss.2} parent=63 // pred_fallthru
          _
        // Predicated region
        $region69: #{multibox_loss.2} parent=63 // pred_check
          %p862 = pneg %p202
        $region70: #{multibox_loss.2} parent=63 // pred_check_branch
          %864 = sbr.rel (%p862) target = $region72
        $region71: #{multibox_loss.2} parent=63 // pred_region
          %s865 = smul.u32 4, %s31
          %p866 = scmp.lt.s32.totalorder %s30, 1
          %s867 = scalar_select %p866, %s30, 1
          %p868 = scmp.lt.s32.totalorder %s865, 3
          %s869 = scalar_select %p868, %s865, 3
          %s870 = smul.addr %s867, 4
          %s871 = sadd.s32 %s869, %s870
          %s872 = scalar_lea.vmem %s5, %s871
        $region72: #{multibox_loss.2} parent=63 // pred_fallthru
          _
        // Predicated region
        $region73: #{multibox_loss.2} parent=63 // pred_check
          %p873 = pneg %p230
        $region74: #{multibox_loss.2} parent=63 // pred_check_branch
          %875 = sbr.rel (%p873) target = $region76
        $region75: #{multibox_loss.2} parent=63 // pred_region
          %s876 = smul.u32 4, %s31
          %p877 = scmp.lt.s32.totalorder %s30, 1
          %s878 = scalar_select %p877, %s30, 1
          %p879 = scmp.lt.s32.totalorder %s876, 3
          %s880 = scalar_select %p879, %s876, 3
          %s881 = smul.addr %s878, 4
          %s882 = sadd.s32 %s880, %s881
          %s883 = scalar_lea.vmem %s6, %s882
        $region76: #{multibox_loss.2} parent=63 // pred_fallthru
          _
      $region64: #{multibox_loss.2} parent=5 // pred_fallthru
        _
    $region6: #{multibox_loss.2} parent=1 // loop_footer
      %s23 = sadd.s32 1, %s19
    $region7: #{multibox_loss.2} parent=1 // loop_footer_branch
      %18 = sbr.rel target = $region3
    $region8: #{multibox_loss.2} parent=1 // loop_exit
      _
    %884 = vsyncpa [#allocation3], 1
    %s885 = scalar_lea.sflag [#allocation3], 1
    %886 = vsyncpa %s885, 1
    %887 = vsyncpa [#allocation5], 1
    %s888 = scalar_lea.sflag [#allocation5], 1
    %889 = vsyncpa %s888, 1

// kernel: multibox_loss.3
$region0: #{multibox_loss.3}
  #allocation0 [shape = 'u32[]', space=smem, size = 0x4, offset = 0x4, fixed_abs, tag = 'smem constant byte address 0x4 - core index']
  #allocation1 [shape = 'u32[144,128]{1,0:T(1,128)}', space=vmem, size = 0x12000, scoped, tag = 'internal scratch']
  #allocation2 [shape = 'f32[8,512]{1,0:T(8,128)}', space=vmem, size = 0x4000, scoped, tag = 'scratch operand']
  #allocation3 [shape = 's32[1]{0}', space=sflag, size = 0x4, scoped, tag = 'scoped memory for multibox_loss.3']
  #allocation4 [shape = 'u8[512]{0}', space=smem, size = 0x200, scoped, tag = 'prefetched SMEM operand 0']
  %s0 = inlined_call_operand.vmem [shape: s32[2], index: 0, kind: input, shape index: {}]
  %s1 = inlined_call_operand.vmem [shape: f32[2,1,512], index: 1, kind: input, shape index: {}, may-alias: {1,2}]
  %s2 = inlined_call_operand.vmem [shape: f32[2,1,512], index: 2, kind: input, shape index: {}, may-alias: {1,2}]
  %s3 = inlined_call_operand.vmem [shape: f32[2,1,512], index: 3, kind: input, shape index: {}]
  %s4 = inlined_call_operand.vmem [shape: f32[2,1,512], index: 4, kind: output, shape index: {}]
  %s5 = sld [smem:[#allocation0]]
  $region53: #{multibox_loss.3} parent=0
    _
  %s7 = ssub.s32 1, %s5
  %s8 = scalar_select 0, %s7, %s5
  %s9 = sshll.u32 %s0, 4
  %s10 = int_to_ptr.vmem [resolvable:$true] %s9
  %12 = dma.vmem_to_smem %s10, 16, [#allocation4], [#allocation3]
  %13 = dma.done [#allocation3], 16
  %14 = sfence
  loop: start=0, step=1, limit=4
  $region2: #{multibox_loss.3} parent=0 // loop_pre_header
    _
  $region3: #{multibox_loss.3} parent=0 // loop_header
    %s16 = sphi 0, %s20
    %p17 = scmp.ge.s32.totalorder %s16, 4
    %s23 = sphi 0, %s42
    %s24 = sphi 0, %s38
    %s25 = sphi 0, %s34
    %s26 = sphi 0, %s23
    %s27 = sphi 0, %s24
    %s28 = sphi 0, %s25
    %s29 = sphi 0, %s26
    %s30 = sphi 0, %s27
    %s31 = sphi 0, %s28
    %s47 = sphi 0, %s49
    %s50 = sphi 0, %s47
    %s51 = sphi 0, %s50
    %s67 = sphi 0, %s51
    %s75 = sphi 0, %s77
    %s78 = sphi 0, %s75
    %s79 = sphi 0, %s78
    %s95 = sphi 0, %s79
    %s103 = sphi 0, %s105
    %s106 = sphi 0, %s103
    %s107 = sphi 0, %s106
    %s123 = sphi 0, %s107
    %s131 = sphi 0, %s133
    %s134 = sphi 0, %s131
    %s135 = sphi 0, %s134
    %s151 = sphi 0, %s135
  $region4: #{multibox_loss.3} parent=0 // loop_header_branch
    %19 = sbr.rel (%p17) target = $region8
  $region5: #{multibox_loss.3} parent=0 // loop_body
    %s21 = ssub.s32 %s16, 1
    %s22 = ssub.s32 %s16, 2
    %s32 = sadd.s32 1, %s25
    %p33 = scmp.ge.s32.totalorder %s32, 1
    %s34 = scalar_select %p33, 0, %s32
    %s35 = sadd.s32 1, %s24
    %s36 = scalar_select %p33, %s35, %s24
    %p37 = scmp.ge.s32.totalorder %s36, 1
    %s38 = scalar_select %p37, 0, %s36
    %s39 = sadd.s32 1, %s23
    %s40 = scalar_select %p37, %s39, %s23
    %p41 = scmp.ge.s32.totalorder %s40, 2
    %s42 = scalar_select %p41, 0, %s40
    %s43 = ssub.s32 %s23, %s42
    %s44 = ssub.s32 %s24, %s38
    %s45 = sor.u32 %s43, %s44
    %p46 = scmp.eq.s32.totalorder %s45, 0
    %s48 = sadd.s32 %s47, 1
    %s49 = scalar_select %p46, %s47, %s48
    %p52 = pneg %p46
    %p53 = scmp.eq.s32.totalorder %s16, 1
    %p54 = por %p52, %p53
    %p55 = scmp.ne.s32.totalorder %s47, %s50
    %p56 = scmp.eq.s32.totalorder %s16, 0
    %p57 = por %p55, %p56
    %p58 = scmp.ne.s32.totalorder %s47, %s50
    %p59 = scmp.eq.s32.totalorder %s21, 1
    %p60 = por %p58, %p59
    %p61 = scmp.ne.s32.totalorder %s50, %s51
    %p62 = scmp.eq.s32.totalorder %s21, 0
    %p63 = por %p61, %p62
    %p64 = scmp.ne.s32.totalorder %s50, %s51
    %p65 = scmp.eq.s32.totalorder %s22, 1
    %p66 = por %p64, %p65
    %p68 = scmp.ne.s32.totalorder %s51, %s67
    %p69 = scmp.eq.s32.totalorder %s22, 0
    %p70 = por %p68, %p69
    %s71 = ssub.s32 %s23, %s42
    %s72 = ssub.s32 %s25, %s34
    %s73 = sor.u32 %s71, %s72
    %p74 = scmp.eq.s32.totalorder %s73, 0
    %s76 = sadd.s32 %s75, 1
    %s77 = scalar_select %p74, %s75, %s76
    %p80 = pneg %p74
    %p81 = scmp.eq.s32.totalorder %s16, 1
    %p82 = por %p80, %p81
    %p83 = scmp.ne.s32.totalorder %s75, %s78
    %p84 = scmp.eq.s32.totalorder %s16, 0
    %p85 = por %p83, %p84
    %p86 = scmp.ne.s32.totalorder %s75, %s78
    %p87 = scmp.eq.s32.totalorder %s21, 1
    %p88 = por %p86, %p87
    %p89 = scmp.ne.s32.totalorder %s78, %s79
    %p90 = scmp.eq.s32.totalorder %s21, 0
    %p91 = por %p89, %p90
    %p92 = scmp.ne.s32.totalorder %s78, %s79
    %p93 = scmp.eq.s32.totalorder %s22, 1
    %p94 = por %p92, %p93
    %p96 = scmp.ne.s32.totalorder %s79, %s95
    %p97 = scmp.eq.s32.totalorder %s22, 0
    %p98 = por %p96, %p97
    %s99 = ssub.s32 %s23, %s42
    %s100 = ssub.s32 %s24, %s38
    %s101 = sor.u32 %s99, %s100
    %p102 = scmp.eq.s32.totalorder %s101, 0
    %s104 = sadd.s32 %s103, 1
    %s105 = scalar_select %p102, %s103, %s104
    %p108 = pneg %p102
    %p109 = scmp.eq.s32.totalorder %s16, 1
    %p110 = por %p108, %p109
    %p111 = scmp.ne.s32.totalorder %s103, %s106
    %p112 = scmp.eq.s32.totalorder %s16, 0
    %p113 = por %p111, %p112
    %p114 = scmp.ne.s32.totalorder %s103, %s106
    %p115 = scmp.eq.s32.totalorder %s21, 1
    %p116 = por %p114, %p115
    %p117 = scmp.ne.s32.totalorder %s106, %s107
    %p118 = scmp.eq.s32.totalorder %s21, 0
    %p119 = por %p117, %p118
    %p120 = scmp.ne.s32.totalorder %s106, %s107
    %p121 = scmp.eq.s32.totalorder %s22, 1
    %p122 = por %p120, %p121
    %p124 = scmp.ne.s32.totalorder %s107, %s123
    %p125 = scmp.eq.s32.totalorder %s22, 0
    %p126 = por %p124, %p125
    %s127 = ssub.s32 %s23, %s42
    %s128 = ssub.s32 %s24, %s38
    %s129 = sor.u32 %s127, %s128
    %p130 = scmp.eq.s32.totalorder %s129, 0
    %s132 = sadd.s32 %s131, 1
    %s133 = scalar_select %p130, %s131, %s132
    %p136 = pneg %p130
    %p137 = scmp.eq.s32.totalorder %s16, 1
    %p138 = por %p136, %p137
    %p139 = scmp.ne.s32.totalorder %s131, %s134
    %p140 = scmp.eq.s32.totalorder %s16, 0
    %p141 = por %p139, %p140
    %p142 = scmp.ne.s32.totalorder %s131, %s134
    %p143 = scmp.eq.s32.totalorder %s21, 1
    %p144 = por %p142, %p143
    %p145 = scmp.ne.s32.totalorder %s134, %s135
    %p146 = scmp.eq.s32.totalorder %s21, 0
    %p147 = por %p145, %p146
    %p148 = scmp.ne.s32.totalorder %s134, %s135
    %p149 = scmp.eq.s32.totalorder %s22, 1
    %p150 = por %p148, %p149
    %p152 = scmp.ne.s32.totalorder %s135, %s151
    %p153 = scmp.eq.s32.totalorder %s22, 0
    %p154 = por %p152, %p153
    %p155 = scmp.le.s32.totalorder 1, %s16
    %p156 = scmp.lt.s32.totalorder %s16, 3
    %p157 = pnand %p155, %p156
    %p158 = pneg %p157
    // Predicated region
    $region9: #{multibox_loss.3} parent=5 // pred_check
      _
    $region10: #{multibox_loss.3} parent=5 // pred_check_branch
      %160 = sbr.rel (%p157) target = $region12
    $region11: #{multibox_loss.3} parent=5 // pred_region
      %s161 = ssub.s32 %s16, 1
    $region12: #{multibox_loss.3} parent=5 // pred_fallthru
      _
    %p162 = scmp.lt.s32.totalorder %s16, 2
    // Predicated region
    $region13: #{multibox_loss.3} parent=5 // pred_check
      %p163 = pneg %p162
    $region14: #{multibox_loss.3} parent=5 // pred_check_branch
      %165 = sbr.rel (%p163) target = $region16
    $region15: #{multibox_loss.3} parent=5 // pred_region
      // Predicated region
      $region17: #{multibox_loss.3} parent=15 // pred_check
        %p166 = pneg %p57
      $region18: #{multibox_loss.3} parent=15 // pred_check_branch
        %168 = sbr.rel (%p166) target = $region20
      $region19: #{multibox_loss.3} parent=15 // pred_region
        %s169 = smul.u32 4, %s24
        %p170 = scmp.lt.s32.totalorder %s23, 1
        %s171 = scalar_select %p170, %s23, 1
        %p172 = scmp.lt.s32.totalorder %s169, 3
        %s173 = scalar_select %p172, %s169, 3
        %s174 = smul.addr %s171, 4
        %s175 = sadd.s32 %s173, %s174
        %s176 = scalar_lea.vmem %s1, %s175
        %s177 = smul.u32 4, %s24
      $region20: #{multibox_loss.3} parent=15 // pred_fallthru
        _
      // Predicated region
      $region21: #{multibox_loss.3} parent=15 // pred_check
        %p178 = pneg %p85
      $region22: #{multibox_loss.3} parent=15 // pred_check_branch
        %180 = sbr.rel (%p178) target = $region24
      $region23: #{multibox_loss.3} parent=15 // pred_region
        %s181 = smul.u32 4, %s25
        %p182 = scmp.lt.s32.totalorder %s23, 1
        %s183 = scalar_select %p182, %s23, 1
        %p184 = scmp.lt.s32.totalorder %s181, 3
        %s185 = scalar_select %p184, %s181, 3
        %s186 = smul.addr %s183, 4
        %s187 = sadd.s32 %s185, %s186
        %s188 = scalar_lea.vmem %s2, %s187
        %s189 = smul.u32 4, %s25
      $region24: #{multibox_loss.3} parent=15 // pred_fallthru
        _
      // Predicated region
      $region25: #{multibox_loss.3} parent=15 // pred_check
        %p190 = pneg %p113
      $region26: #{multibox_loss.3} parent=15 // pred_check_branch
        %192 = sbr.rel (%p190) target = $region28
      $region27: #{multibox_loss.3} parent=15 // pred_region
        %s193 = smul.u32 4, %s24
        %p194 = scmp.lt.s32.totalorder %s23, 1
        %s195 = scalar_select %p194, %s23, 1
        %p196 = scmp.lt.s32.totalorder %s193, 3
        %s197 = scalar_select %p196, %s193, 3
        %s198 = smul.addr %s195, 4
        %s199 = sadd.s32 %s197, %s198
        %s200 = scalar_lea.vmem %s3, %s199
        %s201 = smul.u32 4, %s24
      $region28: #{multibox_loss.3} parent=15 // pred_fallthru
        _
    $region16: #{multibox_loss.3} parent=5 // pred_fallthru
      _
    %p202 = scmp.le.s32.totalorder 1, %s16
    %p203 = scmp.lt.s32.totalorder %s16, 3
    %p204 = pnand %p202, %p203
    %p205 = pneg %p204
    // Predicated region
    $region29: #{multibox_loss.3} parent=5 // pred_check
      _
    $region30: #{multibox_loss.3} parent=5 // pred_check_branch
      %207 = sbr.rel (%p204) target = $region32
    $region31: #{multibox_loss.3} parent=5 // pred_region
      %s208 = ssub.s32 %s16, 1
      %s209 = smul.u32 4, %s27
      %p210 = scmp.lt.s32.totalorder %s26, 1
      %s211 = scalar_select %p210, %s26, 1
      %p212 = scmp.lt.s32.totalorder %s209, 3
      %s213 = scalar_select %p212, %s209, 3
      %s214 = smul.addr %s211, 4
      %s215 = sadd.s32 %s213, %s214
      %s216 = scalar_lea.vmem %s1, %s215
      %p217 = pneg %p63
      %p218 = pneg %p60
      %s219 = smul.u32 4, %s28
      %p220 = scmp.lt.s32.totalorder %s26, 1
      %s221 = scalar_select %p220, %s26, 1
      %p222 = scmp.lt.s32.totalorder %s219, 3
      %s223 = scalar_select %p222, %s219, 3
      %s224 = smul.addr %s221, 4
      %s225 = sadd.s32 %s223, %s224
      %s226 = scalar_lea.vmem %s2, %s225
      %p227 = pneg %p91
      %p228 = pneg %p88
      %s229 = smul.u32 4, %s27
      %p230 = scmp.lt.s32.totalorder %s26, 1
      %s231 = scalar_select %p230, %s26, 1
      %p232 = scmp.lt.s32.totalorder %s229, 3
      %s233 = scalar_select %p232, %s229, 3
      %s234 = smul.addr %s231, 4
      %s235 = sadd.s32 %s233, %s234
      %s236 = scalar_lea.vmem %s3, %s235
      %p237 = pneg %p119
      %p238 = pneg %p116
      %p239 = pneg %p147
      %p240 = pneg %p144
      %s241 = smul.u32 4, %s27
      %p242 = scmp.lt.s32.totalorder %s26, 1
      %s243 = scalar_select %p242, %s26, 1
      %p244 = scmp.lt.s32.totalorder %s241, 3
      %s245 = scalar_select %p244, %s241, 3
      %s246 = smul.addr %s243, 4
      %s247 = sadd.s32 %s245, %s246
      %s248 = scalar_lea.vmem %s4, %s247
      %s249 = smul.u32 4, %s27
      %p250 = scmp.lt.s32.totalorder %s26, 1
      %s251 = scalar_select %p250, %s26, 1
      %p252 = scmp.lt.s32.totalorder %s249, 3
      %s253 = scalar_select %p252, %s249, 3
      %s254 = smul.addr %s251, 4
      %s255 = sadd.s32 %s253, %s254
      %s256 = scalar_lea.vmem %s1, %s255
      %s257 = smul.u32 4, %s27
      %s258 = smul.u32 4, %s28
      %p259 = scmp.lt.s32.totalorder %s26, 1
      %s260 = scalar_select %p259, %s26, 1
      %p261 = scmp.lt.s32.totalorder %s258, 3
      %s262 = scalar_select %p261, %s258, 3
      %s263 = smul.addr %s260, 4
      %s264 = sadd.s32 %s262, %s263
      %s265 = scalar_lea.vmem %s2, %s264
      %s266 = smul.u32 4, %s28
      %s267 = smul.u32 4, %s27
      %p268 = scmp.lt.s32.totalorder %s26, 1
      %s269 = scalar_select %p268, %s26, 1
      %p270 = scmp.lt.s32.totalorder %s267, 3
      %s271 = scalar_select %p270, %s267, 3
      %s272 = smul.addr %s269, 4
      %s273 = sadd.s32 %s271, %s272
      %s274 = scalar_lea.vmem %s3, %s273
      %s275 = smul.u32 4, %s27
      %s276 = smul.u32 4, %s27
      %p277 = scmp.lt.s32.totalorder %s26, 1
      %s278 = scalar_select %p277, %s26, 1
      %p279 = scmp.lt.s32.totalorder %s276, 3
      %s280 = scalar_select %p279, %s276, 3
      %s281 = smul.addr %s278, 4
      %s282 = sadd.s32 %s280, %s281
      %s283 = scalar_lea.vmem %s4, %s282
      %s284 = smul.u32 4, %s27
      %p286 = scmp.eq.s32.totalorder %s28, 0
      // Predicated region
      $region33: #{multibox_loss.3} parent=31 // pred_check
        %p287 = pneg %p286
      $region34: #{multibox_loss.3} parent=31 // pred_check_branch
        %289 = sbr.rel (%p287) target = $region36
      $region35: #{multibox_loss.3} parent=31 // pred_region
        %290 = vst [vmem:[#allocation2] sm:$0xff] 0.0
        %291 = vst [vmem:[#allocation2 + $0x8] sm:$0xff] 0.0
        %292 = vst [vmem:[#allocation2 + $0x10] sm:$0xff] 0.0
        %293 = vst [vmem:[#allocation2 + $0x18] sm:$0xff] 0.0
      $region36: #{multibox_loss.3} parent=31 // pred_fallthru
        _
      %v294 = vld [vmem:[%s256] sm:$0xf]
      %v295 = vld [vmem:[%s265] sm:$0xf]
      %v297 = vlaneseq
      %v298 = vshrl.u32 %v297, 7
      %v299 = vsub.s32 0, %v298
      %v300 = vrot.slane %v295, %v299
      %v301 = vlaneseq
      %v302 = vshrl.u32 %v301, 7
      %v303 = vsub.s32 1, %v302
      %v304 = vrot.slane %v295, %v303
      %v305 = vlaneseq
      %v306 = vshrl.u32 %v305, 7
      %v307 = vsub.s32 2, %v306
      %v308 = vrot.slane %v295, %v307
      %v309 = vlaneseq
      %v310 = vshrl.u32 %v309, 7
      %v311 = vsub.s32 3, %v310
      %v312 = vrot.slane %v295, %v311
      %317 = vxpose.xlu0.b32.start [1/16] %v300, 128
      %318 = vxpose.xlu0.b32.cont [2/16] 0.0, 128
      %319 = vxpose.xlu0.b32.cont [3/16] 0.0, 128
      %320 = vxpose.xlu0.b32.cont [4/16] 0.0, 128
      %321 = vxpose.xlu0.b32.cont [5/16] 0.0, 128
      %322 = vxpose.xlu0.b32.cont [6/16] 0.0, 128
      %323 = vxpose.xlu0.b32.cont [7/16] 0.0, 128
      %324 = vxpose.xlu0.b32.cont [8/16] 0.0, 128
      %325 = vxpose.xlu0.b32.cont [9/16] 0.0, 128
      %326 = vxpose.xlu0.b32.cont [10/16] 0.0, 128
      %327 = vxpose.xlu0.b32.cont [11/16] 0.0, 128
      %328 = vxpose.xlu0.b32.cont [12/16] 0.0, 128
      %329 = vxpose.xlu0.b32.cont [13/16] 0.0, 128
      %330 = vxpose.xlu0.b32.cont [14/16] 0.0, 128
      %331 = vxpose.xlu0.b32.cont [15/16] 0.0, 128
      %332 = vxpose.xlu0.b32.end [16/16] 0.0, 128
      %v333 = vpop.trf.xlu0
      %v334 = vpop.trf.xlu0
      %v335 = vpop.trf.xlu0
      %v336 = vpop.trf.xlu0
      %v337 = vpop.trf.xlu0
      %v338 = vpop.trf.xlu0
      %v339 = vpop.trf.xlu0
      %v340 = vpop.trf.xlu0
      %v341 = vpop.trf.xlu0
      %v342 = vpop.trf.xlu0
      %v343 = vpop.trf.xlu0
      %v344 = vpop.trf.xlu0
      %v345 = vpop.trf.xlu0
      %v346 = vpop.trf.xlu0
      %v347 = vpop.trf.xlu0
      %v348 = vpop.trf.xlu0
      %349 = vxpose.xlu0.b32.start [1/16] %v304, 128
      %350 = vxpose.xlu0.b32.cont [2/16] 0.0, 128
      %351 = vxpose.xlu0.b32.cont [3/16] 0.0, 128
      %352 = vxpose.xlu0.b32.cont [4/16] 0.0, 128
      %353 = vxpose.xlu0.b32.cont [5/16] 0.0, 128
      %354 = vxpose.xlu0.b32.cont [6/16] 0.0, 128
      %355 = vxpose.xlu0.b32.cont [7/16] 0.0, 128
      %356 = vxpose.xlu0.b32.cont [8/16] 0.0, 128
      %357 = vxpose.xlu0.b32.cont [9/16] 0.0, 128
      %358 = vxpose.xlu0.b32.cont [10/16] 0.0, 128
      %359 = vxpose.xlu0.b32.cont [11/16] 0.0, 128
      %360 = vxpose.xlu0.b32.cont [12/16] 0.0, 128
      %361 = vxpose.xlu0.b32.cont [13/16] 0.0, 128
      %362 = vxpose.xlu0.b32.cont [14/16] 0.0, 128
      %363 = vxpose.xlu0.b32.cont [15/16] 0.0, 128
      %364 = vxpose.xlu0.b32.end [16/16] 0.0, 128
      %v365 = vpop.trf.xlu0
      %v366 = vpop.trf.xlu0
      %v367 = vpop.trf.xlu0
      %v368 = vpop.trf.xlu0
      %v369 = vpop.trf.xlu0
      %v370 = vpop.trf.xlu0
      %v371 = vpop.trf.xlu0
      %v372 = vpop.trf.xlu0
      %v373 = vpop.trf.xlu0
      %v374 = vpop.trf.xlu0
      %v375 = vpop.trf.xlu0
      %v376 = vpop.trf.xlu0
      %v377 = vpop.trf.xlu0
      %v378 = vpop.trf.xlu0
      %v379 = vpop.trf.xlu0
      %v380 = vpop.trf.xlu0
      %381 = vxpose.xlu0.b32.start [1/16] %v308, 128
      %382 = vxpose.xlu0.b32.cont [2/16] 0.0, 128
      %383 = vxpose.xlu0.b32.cont [3/16] 0.0, 128
      %384 = vxpose.xlu0.b32.cont [4/16] 0.0, 128
      %385 = vxpose.xlu0.b32.cont [5/16] 0.0, 128
      %386 = vxpose.xlu0.b32.cont [6/16] 0.0, 128
      %387 = vxpose.xlu0.b32.cont [7/16] 0.0, 128
      %388 = vxpose.xlu0.b32.cont [8/16] 0.0, 128
      %389 = vxpose.xlu0.b32.cont [9/16] 0.0, 128
      %390 = vxpose.xlu0.b32.cont [10/16] 0.0, 128
      %391 = vxpose.xlu0.b32.cont [11/16] 0.0, 128
      %392 = vxpose.xlu0.b32.cont [12/16] 0.0, 128
      %393 = vxpose.xlu0.b32.cont [13/16] 0.0, 128
      %394 = vxpose.xlu0.b32.cont [14/16] 0.0, 128
      %395 = vxpose.xlu0.b32.cont [15/16] 0.0, 128
      %396 = vxpose.xlu0.b32.end [16/16] 0.0, 128
      %v397 = vpop.trf.xlu0
      %v398 = vpop.trf.xlu0
      %v399 = vpop.trf.xlu0
      %v400 = vpop.trf.xlu0
      %v401 = vpop.trf.xlu0
      %v402 = vpop.trf.xlu0
      %v403 = vpop.trf.xlu0
      %v404 = vpop.trf.xlu0
      %v405 = vpop.trf.xlu0
      %v406 = vpop.trf.xlu0
      %v407 = vpop.trf.xlu0
      %v408 = vpop.trf.xlu0
      %v409 = vpop.trf.xlu0
      %v410 = vpop.trf.xlu0
      %v411 = vpop.trf.xlu0
      %v412 = vpop.trf.xlu0
      %413 = vxpose.xlu0.b32.start [1/16] %v312, 128
      %414 = vxpose.xlu0.b32.cont [2/16] 0.0, 128
      %415 = vxpose.xlu0.b32.cont [3/16] 0.0, 128
      %416 = vxpose.xlu0.b32.cont [4/16] 0.0, 128
      %417 = vxpose.xlu0.b32.cont [5/16] 0.0, 128
      %418 = vxpose.xlu0.b32.cont [6/16] 0.0, 128
      %419 = vxpose.xlu0.b32.cont [7/16] 0.0, 128
      %420 = vxpose.xlu0.b32.cont [8/16] 0.0, 128
      %421 = vxpose.xlu0.b32.cont [9/16] 0.0, 128
      %422 = vxpose.xlu0.b32.cont [10/16] 0.0, 128
      %423 = vxpose.xlu0.b32.cont [11/16] 0.0, 128
      %424 = vxpose.xlu0.b32.cont [12/16] 0.0, 128
      %425 = vxpose.xlu0.b32.cont [13/16] 0.0, 128
      %426 = vxpose.xlu0.b32.cont [14/16] 0.0, 128
      %427 = vxpose.xlu0.b32.cont [15/16] 0.0, 128
      %428 = vxpose.xlu0.b32.end [16/16] 0.0, 128
      %v429 = vpop.trf.xlu0
      %v430 = vpop.trf.xlu0
      %v431 = vpop.trf.xlu0
      %v432 = vpop.trf.xlu0
      %v433 = vpop.trf.xlu0
      %v434 = vpop.trf.xlu0
      %v435 = vpop.trf.xlu0
      %v436 = vpop.trf.xlu0
      %v437 = vpop.trf.xlu0
      %v438 = vpop.trf.xlu0
      %v439 = vpop.trf.xlu0
      %v440 = vpop.trf.xlu0
      %v441 = vpop.trf.xlu0
      %v442 = vpop.trf.xlu0
      %v443 = vpop.trf.xlu0
      %v444 = vpop.trf.xlu0
      %s445 = smul.u32 %s28, 512
      %v446 = vlaneseq
      %v447 = vshrl.u32 %v446, 7
      %v448 = vadd.s32 %v447, 8
      %v449 = vadd.s32 %v447, 16
      %v450 = vadd.s32 %v447, 24
      %v451 = vadd.s32 %v447, 32
      %v452 = vadd.s32 %v447, 40
      %v453 = vadd.s32 %v447, 48
      %v454 = vadd.s32 %v447, 56
      %v455 = vadd.s32 %v447, 64
      %v456 = vadd.s32 %v447, 72
      %v457 = vadd.s32 %v447, 80
      %v458 = vadd.s32 %v447, 88
      %v459 = vadd.s32 %v447, 96
      %v460 = vadd.s32 %v447, 104
      %v461 = vadd.s32 %v447, 112
      %v462 = vadd.s32 %v447, 120
      %v463 = vadd.s32 %v447, 128
      %v464 = vadd.s32 %v447, 136
      %v465 = vadd.s32 %v447, 144
      %v466 = vadd.s32 %v447, 152
      %v467 = vadd.s32 %v447, 160
      %v468 = vadd.s32 %v447, 168
      %v469 = vadd.s32 %v447, 176
      %v470 = vadd.s32 %v447, 184
      %v471 = vadd.s32 %v447, 192
      %v472 = vadd.s32 %v447, 200
      %v473 = vadd.s32 %v447, 208
      %v474 = vadd.s32 %v447, 216
      %v475 = vadd.s32 %v447, 224
      %v476 = vadd.s32 %v447, 232
      %v477 = vadd.s32 %v447, 240
      %v478 = vadd.s32 %v447, 248
      %v479 = vadd.s32 %v447, 256
      %v480 = vadd.s32 %v447, 264
      %v481 = vadd.s32 %v447, 272
      %v482 = vadd.s32 %v447, 280
      %v483 = vadd.s32 %v447, 288
      %v484 = vadd.s32 %v447, 296
      %v485 = vadd.s32 %v447, 304
      %v486 = vadd.s32 %v447, 312
      %v487 = vadd.s32 %v447, 320
      %v488 = vadd.s32 %v447, 328
      %v489 = vadd.s32 %v447, 336
      %v490 = vadd.s32 %v447, 344
      %v491 = vadd.s32 %v447, 352
      %v492 = vadd.s32 %v447, 360
      %v493 = vadd.s32 %v447, 368
      %v494 = vadd.s32 %v447, 376
      %v495 = vadd.s32 %v447, 384
      %v496 = vadd.s32 %v447, 392
      %v497 = vadd.s32 %v447, 400
      %v498 = vadd.s32 %v447, 408
      %v499 = vadd.s32 %v447, 416
      %v500 = vadd.s32 %v447, 424
      %v501 = vadd.s32 %v447, 432
      %v502 = vadd.s32 %v447, 440
      %v503 = vadd.s32 %v447, 448
      %v504 = vadd.s32 %v447, 456
      %v505 = vadd.s32 %v447, 464
      %v506 = vadd.s32 %v447, 472
      %v507 = vadd.s32 %v447, 480
      %v508 = vadd.s32 %v447, 488
      %v509 = vadd.s32 %v447, 496
      %v510 = vadd.s32 %v447, 504
      %v511 = vstv %s445
      %v512 = vadd.s32 %v511, %v447
      %v513 = vadd.s32 %v511, %v448
      %v514 = vadd.s32 %v511, %v449
      %v515 = vadd.s32 %v511, %v450
      %v516 = vadd.s32 %v511, %v451
      %v517 = vadd.s32 %v511, %v452
      %v518 = vadd.s32 %v511, %v453
      %v519 = vadd.s32 %v511, %v454
      %v520 = vadd.s32 %v511, %v455
      %v521 = vadd.s32 %v511, %v456
      %v522 = vadd.s32 %v511, %v457
      %v523 = vadd.s32 %v511, %v458
      %v524 = vadd.s32 %v511, %v459
      %v525 = vadd.s32 %v511, %v460
      %v526 = vadd.s32 %v511, %v461
      %v527 = vadd.s32 %v511, %v462
      %v528 = vadd.s32 %v511, %v463
      %v529 = vadd.s32 %v511, %v464
      %v530 = vadd.s32 %v511, %v465
      %v531 = vadd.s32 %v511, %v466
      %v532 = vadd.s32 %v511, %v467
      %v533 = vadd.s32 %v511, %v468
      %v534 = vadd.s32 %v511, %v469
      %v535 = vadd.s32 %v511, %v470
      %v536 = vadd.s32 %v511, %v471
      %v537 = vadd.s32 %v511, %v472
      %v538 = vadd.s32 %v511, %v473
      %v539 = vadd.s32 %v511, %v474
      %v540 = vadd.s32 %v511, %v475
      %v541 = vadd.s32 %v511, %v476
      %v542 = vadd.s32 %v511, %v477
      %v543 = vadd.s32 %v511, %v478
      %v544 = vadd.s32 %v511, %v479
      %v545 = vadd.s32 %v511, %v480
      %v546 = vadd.s32 %v511, %v481
      %v547 = vadd.s32 %v511, %v482
      %v548 = vadd.s32 %v511, %v483
      %v549 = vadd.s32 %v511, %v484
      %v550 = vadd.s32 %v511, %v485
      %v551 = vadd.s32 %v511, %v486
      %v552 = vadd.s32 %v511, %v487
      %v553 = vadd.s32 %v511, %v488
      %v554 = vadd.s32 %v511, %v489
      %v555 = vadd.s32 %v511, %v490
      %v556 = vadd.s32 %v511, %v491
      %v557 = vadd.s32 %v511, %v492
      %v558 = vadd.s32 %v511, %v493
      %v559 = vadd.s32 %v511, %v494
      %v560 = vadd.s32 %v511, %v495
      %v561 = vadd.s32 %v511, %v496
      %v562 = vadd.s32 %v511, %v497
      %v563 = vadd.s32 %v511, %v498
      %v564 = vadd.s32 %v511, %v499
      %v565 = vadd.s32 %v511, %v500
      %v566 = vadd.s32 %v511, %v501
      %v567 = vadd.s32 %v511, %v502
      %v568 = vadd.s32 %v511, %v503
      %v569 = vadd.s32 %v511, %v504
      %v570 = vadd.s32 %v511, %v505
      %v571 = vadd.s32 %v511, %v506
      %v572 = vadd.s32 %v511, %v507
      %v573 = vadd.s32 %v511, %v508
      %v574 = vadd.s32 %v511, %v509
      %v575 = vadd.s32 %v511, %v510
      %s576 = smul.u32 %s27, 512
      %v577 = vlaneseq
      %v578 = vand.u32 %v577, 127
      %v579 = vadd.s32 %v578, 128
      %v580 = vadd.s32 %v578, 256
      %v581 = vadd.s32 %v578, 384
      %v582 = vstv %s576
      %v583 = vadd.s32 %v582, %v578
      %v584 = vadd.s32 %v582, %v579
      %v585 = vadd.s32 %v582, %v580
      %v586 = vadd.s32 %v582, %v581
      %588 = vset.pattern.permute.xlu0 0
      %589 = vperm.xlu0 %588, %v333
      %v590 = vpop.permute.xlu0 %589
      %593 = vset.pattern.permute.xlu0 0
      %594 = vperm.xlu0 %593, %v334
      %v595 = vpop.permute.xlu0 %594
      %598 = vset.pattern.permute.xlu0 0
      %599 = vperm.xlu0 %598, %v335
      %v600 = vpop.permute.xlu0 %599
      %603 = vset.pattern.permute.xlu0 0
      %604 = vperm.xlu0 %603, %v336
      %v605 = vpop.permute.xlu0 %604
      %608 = vset.pattern.permute.xlu0 0
      %609 = vperm.xlu0 %608, %v337
      %v610 = vpop.permute.xlu0 %609
      %613 = vset.pattern.permute.xlu0 0
      %614 = vperm.xlu0 %613, %v338
      %v615 = vpop.permute.xlu0 %614
      %618 = vset.pattern.permute.xlu0 0
      %619 = vperm.xlu0 %618, %v339
      %v620 = vpop.permute.xlu0 %619
      %623 = vset.pattern.permute.xlu0 0
      %624 = vperm.xlu0 %623, %v340
      %v625 = vpop.permute.xlu0 %624
      %628 = vset.pattern.permute.xlu0 0
      %629 = vperm.xlu0 %628, %v341
      %v630 = vpop.permute.xlu0 %629
      %633 = vset.pattern.permute.xlu0 0
      %634 = vperm.xlu0 %633, %v342
      %v635 = vpop.permute.xlu0 %634
      %638 = vset.pattern.permute.xlu0 0
      %639 = vperm.xlu0 %638, %v343
      %v640 = vpop.permute.xlu0 %639
      %643 = vset.pattern.permute.xlu0 0
      %644 = vperm.xlu0 %643, %v344
      %v645 = vpop.permute.xlu0 %644
      %648 = vset.pattern.permute.xlu0 0
      %649 = vperm.xlu0 %648, %v345
      %v650 = vpop.permute.xlu0 %649
      %653 = vset.pattern.permute.xlu0 0
      %654 = vperm.xlu0 %653, %v346
      %v655 = vpop.permute.xlu0 %654
      %658 = vset.pattern.permute.xlu0 0
      %659 = vperm.xlu0 %658, %v347
      %v660 = vpop.permute.xlu0 %659
      %663 = vset.pattern.permute.xlu0 0
      %664 = vperm.xlu0 %663, %v348
      %v665 = vpop.permute.xlu0 %664
      %668 = vset.pattern.permute.xlu0 0
      %669 = vperm.xlu0 %668, %v365
      %v670 = vpop.permute.xlu0 %669
      %673 = vset.pattern.permute.xlu0 0
      %674 = vperm.xlu0 %673, %v366
      %v675 = vpop.permute.xlu0 %674
      %678 = vset.pattern.permute.xlu0 0
      %679 = vperm.xlu0 %678, %v367
      %v680 = vpop.permute.xlu0 %679
      %683 = vset.pattern.permute.xlu0 0
      %684 = vperm.xlu0 %683, %v368
      %v685 = vpop.permute.xlu0 %684
      %688 = vset.pattern.permute.xlu0 0
      %689 = vperm.xlu0 %688, %v369
      %v690 = vpop.permute.xlu0 %689
      %693 = vset.pattern.permute.xlu0 0
      %694 = vperm.xlu0 %693, %v370
      %v695 = vpop.permute.xlu0 %694
      %698 = vset.pattern.permute.xlu0 0
      %699 = vperm.xlu0 %698, %v371
      %v700 = vpop.permute.xlu0 %699
      %703 = vset.pattern.permute.xlu0 0
      %704 = vperm.xlu0 %703, %v372
      %v705 = vpop.permute.xlu0 %704
      %708 = vset.pattern.permute.xlu0 0
      %709 = vperm.xlu0 %708, %v373
      %v710 = vpop.permute.xlu0 %709
      %713 = vset.pattern.permute.xlu0 0
      %714 = vperm.xlu0 %713, %v374
      %v715 = vpop.permute.xlu0 %714
      %718 = vset.pattern.permute.xlu0 0
      %719 = vperm.xlu0 %718, %v375
      %v720 = vpop.permute.xlu0 %719
      %723 = vset.pattern.permute.xlu0 0
      %724 = vperm.xlu0 %723, %v376
      %v725 = vpop.permute.xlu0 %724
      %728 = vset.pattern.permute.xlu0 0
      %729 = vperm.xlu0 %728, %v377
      %v730 = vpop.permute.xlu0 %729
      %733 = vset.pattern.permute.xlu0 0
      %734 = vperm.xlu0 %733, %v378
      %v735 = vpop.permute.xlu0 %734
      %738 = vset.pattern.permute.xlu0 0
      %739 = vperm.xlu0 %738, %v379
      %v740 = vpop.permute.xlu0 %739
      %743 = vset.pattern.permute.xlu0 0
      %744 = vperm.xlu0 %743, %v380
      %v745 = vpop.permute.xlu0 %744
      %748 = vset.pattern.permute.xlu0 0
      %749 = vperm.xlu0 %748, %v397
      %v750 = vpop.permute.xlu0 %749
      %753 = vset.pattern.permute.xlu0 0
      %754 = vperm.xlu0 %753, %v398
      %v755 = vpop.permute.xlu0 %754
      %758 = vset.pattern.permute.xlu0 0
      %759 = vperm.xlu0 %758, %v399
      %v760 = vpop.permute.xlu0 %759
      %763 = vset.pattern.permute.xlu0 0
      %764 = vperm.xlu0 %763, %v400
      %v765 = vpop.permute.xlu0 %764
      %768 = vset.pattern.permute.xlu0 0
      %769 = vperm.xlu0 %768, %v401
      %v770 = vpop.permute.xlu0 %769
      %773 = vset.pattern.permute.xlu0 0
      %774 = vperm.xlu0 %773, %v402
      %v775 = vpop.permute.xlu0 %774
      %778 = vset.pattern.permute.xlu0 0
      %779 = vperm.xlu0 %778, %v403
      %v780 = vpop.permute.xlu0 %779
      %783 = vset.pattern.permute.xlu0 0
      %784 = vperm.xlu0 %783, %v404
      %v785 = vpop.permute.xlu0 %784
      %788 = vset.pattern.permute.xlu0 0
      %789 = vperm.xlu0 %788, %v405
      %v790 = vpop.permute.xlu0 %789
      %793 = vset.pattern.permute.xlu0 0
      %794 = vperm.xlu0 %793, %v406
      %v795 = vpop.permute.xlu0 %794
      %798 = vset.pattern.permute.xlu0 0
      %799 = vperm.xlu0 %798, %v407
      %v800 = vpop.permute.xlu0 %799
      %803 = vset.pattern.permute.xlu0 0
      %804 = vperm.xlu0 %803, %v408
      %v805 = vpop.permute.xlu0 %804
      %808 = vset.pattern.permute.xlu0 0
      %809 = vperm.xlu0 %808, %v409
      %v810 = vpop.permute.xlu0 %809
      %813 = vset.pattern.permute.xlu0 0
      %814 = vperm.xlu0 %813, %v410
      %v815 = vpop.permute.xlu0 %814
      %818 = vset.pattern.permute.xlu0 0
      %819 = vperm.xlu0 %818, %v411
      %v820 = vpop.permute.xlu0 %819
      %823 = vset.pattern.permute.xlu0 0
      %824 = vperm.xlu0 %823, %v412
      %v825 = vpop.permute.xlu0 %824
      %828 = vset.pattern.permute.xlu0 0
      %829 = vperm.xlu0 %828, %v429
      %v830 = vpop.permute.xlu0 %829
      %833 = vset.pattern.permute.xlu0 0
      %834 = vperm.xlu0 %833, %v430
      %v835 = vpop.permute.xlu0 %834
      %838 = vset.pattern.permute.xlu0 0
      %839 = vperm.xlu0 %838, %v431
      %v840 = vpop.permute.xlu0 %839
      %843 = vset.pattern.permute.xlu0 0
      %844 = vperm.xlu0 %843, %v432
      %v845 = vpop.permute.xlu0 %844
      %848 = vset.pattern.permute.xlu0 0
      %849 = vperm.xlu0 %848, %v433
      %v850 = vpop.permute.xlu0 %849
      %853 = vset.pattern.permute.xlu0 0
      %854 = vperm.xlu0 %853, %v434
      %v855 = vpop.permute.xlu0 %854
      %858 = vset.pattern.permute.xlu0 0
      %859 = vperm.xlu0 %858, %v435
      %v860 = vpop.permute.xlu0 %859
      %863 = vset.pattern.permute.xlu0 0
      %864 = vperm.xlu0 %863, %v436
      %v865 = vpop.permute.xlu0 %864
      %868 = vset.pattern.permute.xlu0 0
      %869 = vperm.xlu0 %868, %v437
      %v870 = vpop.permute.xlu0 %869
      %873 = vset.pattern.permute.xlu0 0
      %874 = vperm.xlu0 %873, %v438
      %v875 = vpop.permute.xlu0 %874
      %878 = vset.pattern.permute.xlu0 0
      %879 = vperm.xlu0 %878, %v439
      %v880 = vpop.permute.xlu0 %879
      %883 = vset.pattern.permute.xlu0 0
      %884 = vperm.xlu0 %883, %v440
      %v885 = vpop.permute.xlu0 %884
      %888 = vset.pattern.permute.xlu0 0
      %889 = vperm.xlu0 %888, %v441
      %v890 = vpop.permute.xlu0 %889
      %893 = vset.pattern.permute.xlu0 0
      %894 = vperm.xlu0 %893, %v442
      %v895 = vpop.permute.xlu0 %894
      %898 = vset.pattern.permute.xlu0 0
      %899 = vperm.xlu0 %898, %v443
      %v900 = vpop.permute.xlu0 %899
      %903 = vset.pattern.permute.xlu0 0
      %904 = vperm.xlu0 %903, %v444
      %v905 = vpop.permute.xlu0 %904
      %v908 = vlaneseq
      %v909 = vshrl.u32 %v908, 7
      %v910 = vsub.s32 0, %v909
      %v911 = vrot.slane %v294, %v910
      %v912 = vlaneseq
      %v913 = vshrl.u32 %v912, 7
      %v914 = vsub.s32 1, %v913
      %v915 = vrot.slane %v294, %v914
      %v916 = vlaneseq
      %v917 = vshrl.u32 %v916, 7
      %v918 = vsub.s32 2, %v917
      %v919 = vrot.slane %v294, %v918
      %v920 = vlaneseq
      %v921 = vshrl.u32 %v920, 7
      %v922 = vsub.s32 3, %v921
      %v923 = vrot.slane %v294, %v922
      %vm928 = vcmp.gt.f32.partialorder %v590, %v911
      %vm929 = vcmp.gt.f32.partialorder %v590, %v915
      %vm930 = vcmp.gt.f32.partialorder %v590, %v919
      %vm931 = vcmp.gt.f32.partialorder %v590, %v923
      %vm932 = vcmp.gt.f32.partialorder %v595, %v911
      %vm933 = vcmp.gt.f32.partialorder %v595, %v915
      %vm934 = vcmp.gt.f32.partialorder %v595, %v919
      %vm935 = vcmp.gt.f32.partialorder %v595, %v923
      %vm936 = vcmp.gt.f32.partialorder %v600, %v911
      %vm937 = vcmp.gt.f32.partialorder %v600, %v915
      %vm938 = vcmp.gt.f32.partialorder %v600, %v919
      %vm939 = vcmp.gt.f32.partialorder %v600, %v923
      %vm940 = vcmp.gt.f32.partialorder %v605, %v911
      %vm941 = vcmp.gt.f32.partialorder %v605, %v915
      %vm942 = vcmp.gt.f32.partialorder %v605, %v919
      %vm943 = vcmp.gt.f32.partialorder %v605, %v923
      %vm944 = vcmp.gt.f32.partialorder %v610, %v911
      %vm945 = vcmp.gt.f32.partialorder %v610, %v915
      %vm946 = vcmp.gt.f32.partialorder %v610, %v919
      %vm947 = vcmp.gt.f32.partialorder %v610, %v923
      %vm948 = vcmp.gt.f32.partialorder %v615, %v911
      %vm949 = vcmp.gt.f32.partialorder %v615, %v915
      %vm950 = vcmp.gt.f32.partialorder %v615, %v919
      %vm951 = vcmp.gt.f32.partialorder %v615, %v923
      %vm952 = vcmp.gt.f32.partialorder %v620, %v911
      %vm953 = vcmp.gt.f32.partialorder %v620, %v915
      %vm954 = vcmp.gt.f32.partialorder %v620, %v919
      %vm955 = vcmp.gt.f32.partialorder %v620, %v923
      %vm956 = vcmp.gt.f32.partialorder %v625, %v911
      %vm957 = vcmp.gt.f32.partialorder %v625, %v915
      %vm958 = vcmp.gt.f32.partialorder %v625, %v919
      %vm959 = vcmp.gt.f32.partialorder %v625, %v923
      %vm960 = vcmp.gt.f32.partialorder %v630, %v911
      %vm961 = vcmp.gt.f32.partialorder %v630, %v915
      %vm962 = vcmp.gt.f32.partialorder %v630, %v919
      %vm963 = vcmp.gt.f32.partialorder %v630, %v923
      %vm964 = vcmp.gt.f32.partialorder %v635, %v911
      %vm965 = vcmp.gt.f32.partialorder %v635, %v915
      %vm966 = vcmp.gt.f32.partialorder %v635, %v919
      %vm967 = vcmp.gt.f32.partialorder %v635, %v923
      %vm968 = vcmp.gt.f32.partialorder %v640, %v911
      %vm969 = vcmp.gt.f32.partialorder %v640, %v915
      %vm970 = vcmp.gt.f32.partialorder %v640, %v919
      %vm971 = vcmp.gt.f32.partialorder %v640, %v923
      %vm972 = vcmp.gt.f32.partialorder %v645, %v911
      %vm973 = vcmp.gt.f32.partialorder %v645, %v915
      %vm974 = vcmp.gt.f32.partialorder %v645, %v919
      %vm975 = vcmp.gt.f32.partialorder %v645, %v923
      %vm976 = vcmp.gt.f32.partialorder %v650, %v911
      %vm977 = vcmp.gt.f32.partialorder %v650, %v915
      %vm978 = vcmp.gt.f32.partialorder %v650, %v919
      %vm979 = vcmp.gt.f32.partialorder %v650, %v923
      %vm980 = vcmp.gt.f32.partialorder %v655, %v911
      %vm981 = vcmp.gt.f32.partialorder %v655, %v915
      %vm982 = vcmp.gt.f32.partialorder %v655, %v919
      %vm983 = vcmp.gt.f32.partialorder %v655, %v923
      %vm984 = vcmp.gt.f32.partialorder %v660, %v911
      %vm985 = vcmp.gt.f32.partialorder %v660, %v915
      %vm986 = vcmp.gt.f32.partialorder %v660, %v919
      %vm987 = vcmp.gt.f32.partialorder %v660, %v923
      %vm988 = vcmp.gt.f32.partialorder %v665, %v911
      %vm989 = vcmp.gt.f32.partialorder %v665, %v915
      %vm990 = vcmp.gt.f32.partialorder %v665, %v919
      %vm991 = vcmp.gt.f32.partialorder %v665, %v923
      %vm992 = vcmp.gt.f32.partialorder %v670, %v911
      %vm993 = vcmp.gt.f32.partialorder %v670, %v915
      %vm994 = vcmp.gt.f32.partialorder %v670, %v919
      %vm995 = vcmp.gt.f32.partialorder %v670, %v923
      %vm996 = vcmp.gt.f32.partialorder %v675, %v911
      %vm997 = vcmp.gt.f32.partialorder %v675, %v915
      %vm998 = vcmp.gt.f32.partialorder %v675, %v919
      %vm999 = vcmp.gt.f32.partialorder %v675, %v923
      %vm1000 = vcmp.gt.f32.partialorder %v680, %v911
      %vm1001 = vcmp.gt.f32.partialorder %v680, %v915
      %vm1002 = vcmp.gt.f32.partialorder %v680, %v919
      %vm1003 = vcmp.gt.f32.partialorder %v680, %v923
      %vm1004 = vcmp.gt.f32.partialorder %v685, %v911
      %vm1005 = vcmp.gt.f32.partialorder %v685, %v915
      %vm1006 = vcmp.gt.f32.partialorder %v685, %v919
      %vm1007 = vcmp.gt.f32.partialorder %v685, %v923
      %vm1008 = vcmp.gt.f32.partialorder %v690, %v911
      %vm1009 = vcmp.gt.f32.partialorder %v690, %v915
      %vm1010 = vcmp.gt.f32.partialorder %v690, %v919
      %vm1011 = vcmp.gt.f32.partialorder %v690, %v923
      %vm1012 = vcmp.gt.f32.partialorder %v695, %v911
      %vm1013 = vcmp.gt.f32.partialorder %v695, %v915
      %vm1014 = vcmp.gt.f32.partialorder %v695, %v919
      %vm1015 = vcmp.gt.f32.partialorder %v695, %v923
      %vm1016 = vcmp.gt.f32.partialorder %v700, %v911
      %vm1017 = vcmp.gt.f32.partialorder %v700, %v915
      %vm1018 = vcmp.gt.f32.partialorder %v700, %v919
      %vm1019 = vcmp.gt.f32.partialorder %v700, %v923
      %vm1020 = vcmp.gt.f32.partialorder %v705, %v911
      %vm1021 = vcmp.gt.f32.partialorder %v705, %v915
      %vm1022 = vcmp.gt.f32.partialorder %v705, %v919
      %vm1023 = vcmp.gt.f32.partialorder %v705, %v923
      %vm1024 = vcmp.gt.f32.partialorder %v710, %v911
      %vm1025 = vcmp.gt.f32.partialorder %v710, %v915
      %vm1026 = vcmp.gt.f32.partialorder %v710, %v919
      %vm1027 = vcmp.gt.f32.partialorder %v710, %v923
      %vm1028 = vcmp.gt.f32.partialorder %v715, %v911
      %vm1029 = vcmp.gt.f32.partialorder %v715, %v915
      %vm1030 = vcmp.gt.f32.partialorder %v715, %v919
      %vm1031 = vcmp.gt.f32.partialorder %v715, %v923
      %vm1032 = vcmp.gt.f32.partialorder %v720, %v911
      %vm1033 = vcmp.gt.f32.partialorder %v720, %v915
      %vm1034 = vcmp.gt.f32.partialorder %v720, %v919
      %vm1035 = vcmp.gt.f32.partialorder %v720, %v923
      %vm1036 = vcmp.gt.f32.partialorder %v725, %v911
      %vm1037 = vcmp.gt.f32.partialorder %v725, %v915
      %vm1038 = vcmp.gt.f32.partialorder %v725, %v919
      %vm1039 = vcmp.gt.f32.partialorder %v725, %v923
      %vm1040 = vcmp.gt.f32.partialorder %v730, %v911
      %vm1041 = vcmp.gt.f32.partialorder %v730, %v915
      %vm1042 = vcmp.gt.f32.partialorder %v730, %v919
      %vm1043 = vcmp.gt.f32.partialorder %v730, %v923
      %vm1044 = vcmp.gt.f32.partialorder %v735, %v911
      %vm1045 = vcmp.gt.f32.partialorder %v735, %v915
      %vm1046 = vcmp.gt.f32.partialorder %v735, %v919
      %vm1047 = vcmp.gt.f32.partialorder %v735, %v923
      %vm1048 = vcmp.gt.f32.partialorder %v740, %v911
      %vm1049 = vcmp.gt.f32.partialorder %v740, %v915
      %vm1050 = vcmp.gt.f32.partialorder %v740, %v919
      %vm1051 = vcmp.gt.f32.partialorder %v740, %v923
      %vm1052 = vcmp.gt.f32.partialorder %v745, %v911
      %vm1053 = vcmp.gt.f32.partialorder %v745, %v915
      %vm1054 = vcmp.gt.f32.partialorder %v745, %v919
      %vm1055 = vcmp.gt.f32.partialorder %v745, %v923
      %vm1056 = vcmp.gt.f32.partialorder %v750, %v911
      %vm1057 = vcmp.gt.f32.partialorder %v750, %v915
      %vm1058 = vcmp.gt.f32.partialorder %v750, %v919
      %vm1059 = vcmp.gt.f32.partialorder %v750, %v923
      %vm1060 = vcmp.gt.f32.partialorder %v755, %v911
      %vm1061 = vcmp.gt.f32.partialorder %v755, %v915
      %vm1062 = vcmp.gt.f32.partialorder %v755, %v919
      %vm1063 = vcmp.gt.f32.partialorder %v755, %v923
      %vm1064 = vcmp.gt.f32.partialorder %v760, %v911
      %vm1065 = vcmp.gt.f32.partialorder %v760, %v915
      %vm1066 = vcmp.gt.f32.partialorder %v760, %v919
      %vm1067 = vcmp.gt.f32.partialorder %v760, %v923
      %vm1068 = vcmp.gt.f32.partialorder %v765, %v911
      %vm1069 = vcmp.gt.f32.partialorder %v765, %v915
      %vm1070 = vcmp.gt.f32.partialorder %v765, %v919
      %vm1071 = vcmp.gt.f32.partialorder %v765, %v923
      %vm1072 = vcmp.gt.f32.partialorder %v770, %v911
      %vm1073 = vcmp.gt.f32.partialorder %v770, %v915
      %vm1074 = vcmp.gt.f32.partialorder %v770, %v919
      %vm1075 = vcmp.gt.f32.partialorder %v770, %v923
      %vm1076 = vcmp.gt.f32.partialorder %v775, %v911
      %vm1077 = vcmp.gt.f32.partialorder %v775, %v915
      %vm1078 = vcmp.gt.f32.partialorder %v775, %v919
      %vm1079 = vcmp.gt.f32.partialorder %v775, %v923
      %vm1080 = vcmp.gt.f32.partialorder %v780, %v911
      %vm1081 = vcmp.gt.f32.partialorder %v780, %v915
      %vm1082 = vcmp.gt.f32.partialorder %v780, %v919
      %vm1083 = vcmp.gt.f32.partialorder %v780, %v923
      %vm1084 = vcmp.gt.f32.partialorder %v785, %v911
      %vm1085 = vcmp.gt.f32.partialorder %v785, %v915
      %vm1086 = vcmp.gt.f32.partialorder %v785, %v919
      %vm1087 = vcmp.gt.f32.partialorder %v785, %v923
      %vm1088 = vcmp.gt.f32.partialorder %v790, %v911
      %vm1089 = vcmp.gt.f32.partialorder %v790, %v915
      %vm1090 = vcmp.gt.f32.partialorder %v790, %v919
      %vm1091 = vcmp.gt.f32.partialorder %v790, %v923
      %vm1092 = vcmp.gt.f32.partialorder %v795, %v911
      %vm1093 = vcmp.gt.f32.partialorder %v795, %v915
      %vm1094 = vcmp.gt.f32.partialorder %v795, %v919
      %vm1095 = vcmp.gt.f32.partialorder %v795, %v923
      %vm1096 = vcmp.gt.f32.partialorder %v800, %v911
      %vm1097 = vcmp.gt.f32.partialorder %v800, %v915
      %vm1098 = vcmp.gt.f32.partialorder %v800, %v919
      %vm1099 = vcmp.gt.f32.partialorder %v800, %v923
      %vm1100 = vcmp.gt.f32.partialorder %v805, %v911
      %vm1101 = vcmp.gt.f32.partialorder %v805, %v915
      %vm1102 = vcmp.gt.f32.partialorder %v805, %v919
      %vm1103 = vcmp.gt.f32.partialorder %v805, %v923
      %vm1104 = vcmp.gt.f32.partialorder %v810, %v911
      %vm1105 = vcmp.gt.f32.partialorder %v810, %v915
      %vm1106 = vcmp.gt.f32.partialorder %v810, %v919
      %vm1107 = vcmp.gt.f32.partialorder %v810, %v923
      %vm1108 = vcmp.gt.f32.partialorder %v815, %v911
      %vm1109 = vcmp.gt.f32.partialorder %v815, %v915
      %vm1110 = vcmp.gt.f32.partialorder %v815, %v919
      %vm1111 = vcmp.gt.f32.partialorder %v815, %v923
      %vm1112 = vcmp.gt.f32.partialorder %v820, %v911
      %vm1113 = vcmp.gt.f32.partialorder %v820, %v915
      %vm1114 = vcmp.gt.f32.partialorder %v820, %v919
      %vm1115 = vcmp.gt.f32.partialorder %v820, %v923
      %vm1116 = vcmp.gt.f32.partialorder %v825, %v911
      %vm1117 = vcmp.gt.f32.partialorder %v825, %v915
      %vm1118 = vcmp.gt.f32.partialorder %v825, %v919
      %vm1119 = vcmp.gt.f32.partialorder %v825, %v923
      %vm1120 = vcmp.gt.f32.partialorder %v830, %v911
      %vm1121 = vcmp.gt.f32.partialorder %v830, %v915
      %vm1122 = vcmp.gt.f32.partialorder %v830, %v919
      %vm1123 = vcmp.gt.f32.partialorder %v830, %v923
      %vm1124 = vcmp.gt.f32.partialorder %v835, %v911
      %vm1125 = vcmp.gt.f32.partialorder %v835, %v915
      %vm1126 = vcmp.gt.f32.partialorder %v835, %v919
      %vm1127 = vcmp.gt.f32.partialorder %v835, %v923
      %vm1128 = vcmp.gt.f32.partialorder %v840, %v911
      %vm1129 = vcmp.gt.f32.partialorder %v840, %v915
      %vm1130 = vcmp.gt.f32.partialorder %v840, %v919
      %vm1131 = vcmp.gt.f32.partialorder %v840, %v923
      %vm1132 = vcmp.gt.f32.partialorder %v845, %v911
      %vm1133 = vcmp.gt.f32.partialorder %v845, %v915
      %vm1134 = vcmp.gt.f32.partialorder %v845, %v919
      %vm1135 = vcmp.gt.f32.partialorder %v845, %v923
      %vm1136 = vcmp.gt.f32.partialorder %v850, %v911
      %vm1137 = vcmp.gt.f32.partialorder %v850, %v915
      %vm1138 = vcmp.gt.f32.partialorder %v850, %v919
      %vm1139 = vcmp.gt.f32.partialorder %v850, %v923
      %vm1140 = vcmp.gt.f32.partialorder %v855, %v911
      %vm1141 = vcmp.gt.f32.partialorder %v855, %v915
      %vm1142 = vcmp.gt.f32.partialorder %v855, %v919
      %vm1143 = vcmp.gt.f32.partialorder %v855, %v923
      %vm1144 = vcmp.gt.f32.partialorder %v860, %v911
      %vm1145 = vcmp.gt.f32.partialorder %v860, %v915
      %vm1146 = vcmp.gt.f32.partialorder %v860, %v919
      %vm1147 = vcmp.gt.f32.partialorder %v860, %v923
      %vm1148 = vcmp.gt.f32.partialorder %v865, %v911
      %vm1149 = vcmp.gt.f32.partialorder %v865, %v915
      %vm1150 = vcmp.gt.f32.partialorder %v865, %v919
      %vm1151 = vcmp.gt.f32.partialorder %v865, %v923
      %vm1152 = vcmp.gt.f32.partialorder %v870, %v911
      %vm1153 = vcmp.gt.f32.partialorder %v870, %v915
      %vm1154 = vcmp.gt.f32.partialorder %v870, %v919
      %vm1155 = vcmp.gt.f32.partialorder %v870, %v923
      %vm1156 = vcmp.gt.f32.partialorder %v875, %v911
      %vm1157 = vcmp.gt.f32.partialorder %v875, %v915
      %vm1158 = vcmp.gt.f32.partialorder %v875, %v919
      %vm1159 = vcmp.gt.f32.partialorder %v875, %v923
      %vm1160 = vcmp.gt.f32.partialorder %v880, %v911
      %vm1161 = vcmp.gt.f32.partialorder %v880, %v915
      %vm1162 = vcmp.gt.f32.partialorder %v880, %v919
      %vm1163 = vcmp.gt.f32.partialorder %v880, %v923
      %vm1164 = vcmp.gt.f32.partialorder %v885, %v911
      %vm1165 = vcmp.gt.f32.partialorder %v885, %v915
      %vm1166 = vcmp.gt.f32.partialorder %v885, %v919
      %vm1167 = vcmp.gt.f32.partialorder %v885, %v923
      %vm1168 = vcmp.gt.f32.partialorder %v890, %v911
      %vm1169 = vcmp.gt.f32.partialorder %v890, %v915
      %vm1170 = vcmp.gt.f32.partialorder %v890, %v919
      %vm1171 = vcmp.gt.f32.partialorder %v890, %v923
      %vm1172 = vcmp.gt.f32.partialorder %v895, %v911
      %vm1173 = vcmp.gt.f32.partialorder %v895, %v915
      %vm1174 = vcmp.gt.f32.partialorder %v895, %v919
      %vm1175 = vcmp.gt.f32.partialorder %v895, %v923
      %vm1176 = vcmp.gt.f32.partialorder %v900, %v911
      %vm1177 = vcmp.gt.f32.partialorder %v900, %v915
      %vm1178 = vcmp.gt.f32.partialorder %v900, %v919
      %vm1179 = vcmp.gt.f32.partialorder %v900, %v923
      %vm1180 = vcmp.gt.f32.partialorder %v905, %v911
      %vm1181 = vcmp.gt.f32.partialorder %v905, %v915
      %vm1182 = vcmp.gt.f32.partialorder %v905, %v919
      %vm1183 = vcmp.gt.f32.partialorder %v905, %v923
      %vm1184 = vcmp.eq.f32.partialorder %v590, %v911
      %vm1185 = vcmp.eq.f32.partialorder %v590, %v915
      %vm1186 = vcmp.eq.f32.partialorder %v590, %v919
      %vm1187 = vcmp.eq.f32.partialorder %v590, %v923
      %vm1188 = vcmp.eq.f32.partialorder %v595, %v911
      %vm1189 = vcmp.eq.f32.partialorder %v595, %v915
      %vm1190 = vcmp.eq.f32.partialorder %v595, %v919
      %vm1191 = vcmp.eq.f32.partialorder %v595, %v923
      %vm1192 = vcmp.eq.f32.partialorder %v600, %v911
      %vm1193 = vcmp.eq.f32.partialorder %v600, %v915
      %vm1194 = vcmp.eq.f32.partialorder %v600, %v919
      %vm1195 = vcmp.eq.f32.partialorder %v600, %v923
      %vm1196 = vcmp.eq.f32.partialorder %v605, %v911
      %vm1197 = vcmp.eq.f32.partialorder %v605, %v915
      %vm1198 = vcmp.eq.f32.partialorder %v605, %v919
      %vm1199 = vcmp.eq.f32.partialorder %v605, %v923
      %vm1200 = vcmp.eq.f32.partialorder %v610, %v911
      %vm1201 = vcmp.eq.f32.partialorder %v610, %v915
      %vm1202 = vcmp.eq.f32.partialorder %v610, %v919
      %vm1203 = vcmp.eq.f32.partialorder %v610, %v923
      %vm1204 = vcmp.eq.f32.partialorder %v615, %v911
      %vm1205 = vcmp.eq.f32.partialorder %v615, %v915
      %vm1206 = vcmp.eq.f32.partialorder %v615, %v919
      %vm1207 = vcmp.eq.f32.partialorder %v615, %v923
      %vm1208 = vcmp.eq.f32.partialorder %v620, %v911
      %vm1209 = vcmp.eq.f32.partialorder %v620, %v915
      %vm1210 = vcmp.eq.f32.partialorder %v620, %v919
      %vm1211 = vcmp.eq.f32.partialorder %v620, %v923
      %vm1212 = vcmp.eq.f32.partialorder %v625, %v911
      %vm1213 = vcmp.eq.f32.partialorder %v625, %v915
      %vm1214 = vcmp.eq.f32.partialorder %v625, %v919
      %vm1215 = vcmp.eq.f32.partialorder %v625, %v923
      %vm1216 = vcmp.eq.f32.partialorder %v630, %v911
      %vm1217 = vcmp.eq.f32.partialorder %v630, %v915
      %vm1218 = vcmp.eq.f32.partialorder %v630, %v919
      %vm1219 = vcmp.eq.f32.partialorder %v630, %v923
      %vm1220 = vcmp.eq.f32.partialorder %v635, %v911
      %vm1221 = vcmp.eq.f32.partialorder %v635, %v915
      %vm1222 = vcmp.eq.f32.partialorder %v635, %v919
      %vm1223 = vcmp.eq.f32.partialorder %v635, %v923
      %vm1224 = vcmp.eq.f32.partialorder %v640, %v911
      %vm1225 = vcmp.eq.f32.partialorder %v640, %v915
      %vm1226 = vcmp.eq.f32.partialorder %v640, %v919
      %vm1227 = vcmp.eq.f32.partialorder %v640, %v923
      %vm1228 = vcmp.eq.f32.partialorder %v645, %v911
      %vm1229 = vcmp.eq.f32.partialorder %v645, %v915
      %vm1230 = vcmp.eq.f32.partialorder %v645, %v919
      %vm1231 = vcmp.eq.f32.partialorder %v645, %v923
      %vm1232 = vcmp.eq.f32.partialorder %v650, %v911
      %vm1233 = vcmp.eq.f32.partialorder %v650, %v915
      %vm1234 = vcmp.eq.f32.partialorder %v650, %v919
      %vm1235 = vcmp.eq.f32.partialorder %v650, %v923
      %vm1236 = vcmp.eq.f32.partialorder %v655, %v911
      %vm1237 = vcmp.eq.f32.partialorder %v655, %v915
      %vm1238 = vcmp.eq.f32.partialorder %v655, %v919
      %vm1239 = vcmp.eq.f32.partialorder %v655, %v923
      %vm1240 = vcmp.eq.f32.partialorder %v660, %v911
      %vm1241 = vcmp.eq.f32.partialorder %v660, %v915
      %vm1242 = vcmp.eq.f32.partialorder %v660, %v919
      %vm1243 = vcmp.eq.f32.partialorder %v660, %v923
      %vm1244 = vcmp.eq.f32.partialorder %v665, %v911
      %vm1245 = vcmp.eq.f32.partialorder %v665, %v915
      %vm1246 = vcmp.eq.f32.partialorder %v665, %v919
      %vm1247 = vcmp.eq.f32.partialorder %v665, %v923
      %vm1248 = vcmp.eq.f32.partialorder %v670, %v911
      %vm1249 = vcmp.eq.f32.partialorder %v670, %v915
      %vm1250 = vcmp.eq.f32.partialorder %v670, %v919
      %vm1251 = vcmp.eq.f32.partialorder %v670, %v923
      %vm1252 = vcmp.eq.f32.partialorder %v675, %v911
      %vm1253 = vcmp.eq.f32.partialorder %v675, %v915
      %vm1254 = vcmp.eq.f32.partialorder %v675, %v919
      %vm1255 = vcmp.eq.f32.partialorder %v675, %v923
      %vm1256 = vcmp.eq.f32.partialorder %v680, %v911
      %vm1257 = vcmp.eq.f32.partialorder %v680, %v915
      %vm1258 = vcmp.eq.f32.partialorder %v680, %v919
      %vm1259 = vcmp.eq.f32.partialorder %v680, %v923
      %vm1260 = vcmp.eq.f32.partialorder %v685, %v911
      %vm1261 = vcmp.eq.f32.partialorder %v685, %v915
      %vm1262 = vcmp.eq.f32.partialorder %v685, %v919
      %vm1263 = vcmp.eq.f32.partialorder %v685, %v923
      %vm1264 = vcmp.eq.f32.partialorder %v690, %v911
      %vm1265 = vcmp.eq.f32.partialorder %v690, %v915
      %vm1266 = vcmp.eq.f32.partialorder %v690, %v919
      %vm1267 = vcmp.eq.f32.partialorder %v690, %v923
      %vm1268 = vcmp.eq.f32.partialorder %v695, %v911
      %vm1269 = vcmp.eq.f32.partialorder %v695, %v915
      %vm1270 = vcmp.eq.f32.partialorder %v695, %v919
      %vm1271 = vcmp.eq.f32.partialorder %v695, %v923
      %vm1272 = vcmp.eq.f32.partialorder %v700, %v911
      %vm1273 = vcmp.eq.f32.partialorder %v700, %v915
      %vm1274 = vcmp.eq.f32.partialorder %v700, %v919
      %vm1275 = vcmp.eq.f32.partialorder %v700, %v923
      %vm1276 = vcmp.eq.f32.partialorder %v705, %v911
      %vm1277 = vcmp.eq.f32.partialorder %v705, %v915
      %vm1278 = vcmp.eq.f32.partialorder %v705, %v919
      %vm1279 = vcmp.eq.f32.partialorder %v705, %v923
      %vm1280 = vcmp.eq.f32.partialorder %v710, %v911
      %vm1281 = vcmp.eq.f32.partialorder %v710, %v915
      %vm1282 = vcmp.eq.f32.partialorder %v710, %v919
      %vm1283 = vcmp.eq.f32.partialorder %v710, %v923
      %vm1284 = vcmp.eq.f32.partialorder %v715, %v911
      %vm1285 = vcmp.eq.f32.partialorder %v715, %v915
      %vm1286 = vcmp.eq.f32.partialorder %v715, %v919
      %vm1287 = vcmp.eq.f32.partialorder %v715, %v923
      %vm1288 = vcmp.eq.f32.partialorder %v720, %v911
      %vm1289 = vcmp.eq.f32.partialorder %v720, %v915
      %vm1290 = vcmp.eq.f32.partialorder %v720, %v919
      %vm1291 = vcmp.eq.f32.partialorder %v720, %v923
      %vm1292 = vcmp.eq.f32.partialorder %v725, %v911
      %vm1293 = vcmp.eq.f32.partialorder %v725, %v915
      %vm1294 = vcmp.eq.f32.partialorder %v725, %v919
      %vm1295 = vcmp.eq.f32.partialorder %v725, %v923
      %vm1296 = vcmp.eq.f32.partialorder %v730, %v911
      %vm1297 = vcmp.eq.f32.partialorder %v730, %v915
      %vm1298 = vcmp.eq.f32.partialorder %v730, %v919
      %vm1299 = vcmp.eq.f32.partialorder %v730, %v923
      %vm1300 = vcmp.eq.f32.partialorder %v735, %v911
      %vm1301 = vcmp.eq.f32.partialorder %v735, %v915
      %vm1302 = vcmp.eq.f32.partialorder %v735, %v919
      %vm1303 = vcmp.eq.f32.partialorder %v735, %v923
      %vm1304 = vcmp.eq.f32.partialorder %v740, %v911
      %vm1305 = vcmp.eq.f32.partialorder %v740, %v915
      %vm1306 = vcmp.eq.f32.partialorder %v740, %v919
      %vm1307 = vcmp.eq.f32.partialorder %v740, %v923
      %vm1308 = vcmp.eq.f32.partialorder %v745, %v911
      %vm1309 = vcmp.eq.f32.partialorder %v745, %v915
      %vm1310 = vcmp.eq.f32.partialorder %v745, %v919
      %vm1311 = vcmp.eq.f32.partialorder %v745, %v923
      %vm1312 = vcmp.eq.f32.partialorder %v750, %v911
      %vm1313 = vcmp.eq.f32.partialorder %v750, %v915
      %vm1314 = vcmp.eq.f32.partialorder %v750, %v919
      %vm1315 = vcmp.eq.f32.partialorder %v750, %v923
      %vm1316 = vcmp.eq.f32.partialorder %v755, %v911
      %vm1317 = vcmp.eq.f32.partialorder %v755, %v915
      %vm1318 = vcmp.eq.f32.partialorder %v755, %v919
      %vm1319 = vcmp.eq.f32.partialorder %v755, %v923
      %vm1320 = vcmp.eq.f32.partialorder %v760, %v911
      %vm1321 = vcmp.eq.f32.partialorder %v760, %v915
      %vm1322 = vcmp.eq.f32.partialorder %v760, %v919
      %vm1323 = vcmp.eq.f32.partialorder %v760, %v923
      %vm1324 = vcmp.eq.f32.partialorder %v765, %v911
      %vm1325 = vcmp.eq.f32.partialorder %v765, %v915
      %vm1326 = vcmp.eq.f32.partialorder %v765, %v919
      %vm1327 = vcmp.eq.f32.partialorder %v765, %v923
      %vm1328 = vcmp.eq.f32.partialorder %v770, %v911
      %vm1329 = vcmp.eq.f32.partialorder %v770, %v915
      %vm1330 = vcmp.eq.f32.partialorder %v770, %v919
      %vm1331 = vcmp.eq.f32.partialorder %v770, %v923
      %vm1332 = vcmp.eq.f32.partialorder %v775, %v911
      %vm1333 = vcmp.eq.f32.partialorder %v775, %v915
      %vm1334 = vcmp.eq.f32.partialorder %v775, %v919
      %vm1335 = vcmp.eq.f32.partialorder %v775, %v923
      %vm1336 = vcmp.eq.f32.partialorder %v780, %v911
      %vm1337 = vcmp.eq.f32.partialorder %v780, %v915
      %vm1338 = vcmp.eq.f32.partialorder %v780, %v919
      %vm1339 = vcmp.eq.f32.partialorder %v780, %v923
      %vm1340 = vcmp.eq.f32.partialorder %v785, %v911
      %vm1341 = vcmp.eq.f32.partialorder %v785, %v915
      %vm1342 = vcmp.eq.f32.partialorder %v785, %v919
      %vm1343 = vcmp.eq.f32.partialorder %v785, %v923
      %vm1344 = vcmp.eq.f32.partialorder %v790, %v911
      %vm1345 = vcmp.eq.f32.partialorder %v790, %v915
      %vm1346 = vcmp.eq.f32.partialorder %v790, %v919
      %vm1347 = vcmp.eq.f32.partialorder %v790, %v923
      %vm1348 = vcmp.eq.f32.partialorder %v795, %v911
      %vm1349 = vcmp.eq.f32.partialorder %v795, %v915
      %vm1350 = vcmp.eq.f32.partialorder %v795, %v919
      %vm1351 = vcmp.eq.f32.partialorder %v795, %v923
      %vm1352 = vcmp.eq.f32.partialorder %v800, %v911
      %vm1353 = vcmp.eq.f32.partialorder %v800, %v915
      %vm1354 = vcmp.eq.f32.partialorder %v800, %v919
      %vm1355 = vcmp.eq.f32.partialorder %v800, %v923
      %vm1356 = vcmp.eq.f32.partialorder %v805, %v911
      %vm1357 = vcmp.eq.f32.partialorder %v805, %v915
      %vm1358 = vcmp.eq.f32.partialorder %v805, %v919
      %vm1359 = vcmp.eq.f32.partialorder %v805, %v923
      %vm1360 = vcmp.eq.f32.partialorder %v810, %v911
      %vm1361 = vcmp.eq.f32.partialorder %v810, %v915
      %vm1362 = vcmp.eq.f32.partialorder %v810, %v919
      %vm1363 = vcmp.eq.f32.partialorder %v810, %v923
      %vm1364 = vcmp.eq.f32.partialorder %v815, %v911
      %vm1365 = vcmp.eq.f32.partialorder %v815, %v915
      %vm1366 = vcmp.eq.f32.partialorder %v815, %v919
      %vm1367 = vcmp.eq.f32.partialorder %v815, %v923
      %vm1368 = vcmp.eq.f32.partialorder %v820, %v911
      %vm1369 = vcmp.eq.f32.partialorder %v820, %v915
      %vm1370 = vcmp.eq.f32.partialorder %v820, %v919
      %vm1371 = vcmp.eq.f32.partialorder %v820, %v923
      %vm1372 = vcmp.eq.f32.partialorder %v825, %v911
      %vm1373 = vcmp.eq.f32.partialorder %v825, %v915
      %vm1374 = vcmp.eq.f32.partialorder %v825, %v919
      %vm1375 = vcmp.eq.f32.partialorder %v825, %v923
      %vm1376 = vcmp.eq.f32.partialorder %v830, %v911
      %vm1377 = vcmp.eq.f32.partialorder %v830, %v915
      %vm1378 = vcmp.eq.f32.partialorder %v830, %v919
      %vm1379 = vcmp.eq.f32.partialorder %v830, %v923
      %vm1380 = vcmp.eq.f32.partialorder %v835, %v911
      %vm1381 = vcmp.eq.f32.partialorder %v835, %v915
      %vm1382 = vcmp.eq.f32.partialorder %v835, %v919
      %vm1383 = vcmp.eq.f32.partialorder %v835, %v923
      %vm1384 = vcmp.eq.f32.partialorder %v840, %v911
      %vm1385 = vcmp.eq.f32.partialorder %v840, %v915
      %vm1386 = vcmp.eq.f32.partialorder %v840, %v919
      %vm1387 = vcmp.eq.f32.partialorder %v840, %v923
      %vm1388 = vcmp.eq.f32.partialorder %v845, %v911
      %vm1389 = vcmp.eq.f32.partialorder %v845, %v915
      %vm1390 = vcmp.eq.f32.partialorder %v845, %v919
      %vm1391 = vcmp.eq.f32.partialorder %v845, %v923
      %vm1392 = vcmp.eq.f32.partialorder %v850, %v911
      %vm1393 = vcmp.eq.f32.partialorder %v850, %v915
      %vm1394 = vcmp.eq.f32.partialorder %v850, %v919
      %vm1395 = vcmp.eq.f32.partialorder %v850, %v923
      %vm1396 = vcmp.eq.f32.partialorder %v855, %v911
      %vm1397 = vcmp.eq.f32.partialorder %v855, %v915
      %vm1398 = vcmp.eq.f32.partialorder %v855, %v919
      %vm1399 = vcmp.eq.f32.partialorder %v855, %v923
      %vm1400 = vcmp.eq.f32.partialorder %v860, %v911
      %vm1401 = vcmp.eq.f32.partialorder %v860, %v915
      %vm1402 = vcmp.eq.f32.partialorder %v860, %v919
      %vm1403 = vcmp.eq.f32.partialorder %v860, %v923
      %vm1404 = vcmp.eq.f32.partialorder %v865, %v911
      %vm1405 = vcmp.eq.f32.partialorder %v865, %v915
      %vm1406 = vcmp.eq.f32.partialorder %v865, %v919
      %vm1407 = vcmp.eq.f32.partialorder %v865, %v923
      %vm1408 = vcmp.eq.f32.partialorder %v870, %v911
      %vm1409 = vcmp.eq.f32.partialorder %v870, %v915
      %vm1410 = vcmp.eq.f32.partialorder %v870, %v919
      %vm1411 = vcmp.eq.f32.partialorder %v870, %v923
      %vm1412 = vcmp.eq.f32.partialorder %v875, %v911
      %vm1413 = vcmp.eq.f32.partialorder %v875, %v915
      %vm1414 = vcmp.eq.f32.partialorder %v875, %v919
      %vm1415 = vcmp.eq.f32.partialorder %v875, %v923
      %vm1416 = vcmp.eq.f32.partialorder %v880, %v911
      %vm1417 = vcmp.eq.f32.partialorder %v880, %v915
      %vm1418 = vcmp.eq.f32.partialorder %v880, %v919
      %vm1419 = vcmp.eq.f32.partialorder %v880, %v923
      %vm1420 = vcmp.eq.f32.partialorder %v885, %v911
      %vm1421 = vcmp.eq.f32.partialorder %v885, %v915
      %vm1422 = vcmp.eq.f32.partialorder %v885, %v919
      %vm1423 = vcmp.eq.f32.partialorder %v885, %v923
      %vm1424 = vcmp.eq.f32.partialorder %v890, %v911
      %vm1425 = vcmp.eq.f32.partialorder %v890, %v915
      %vm1426 = vcmp.eq.f32.partialorder %v890, %v919
      %vm1427 = vcmp.eq.f32.partialorder %v890, %v923
      %vm1428 = vcmp.eq.f32.partialorder %v895, %v911
      %vm1429 = vcmp.eq.f32.partialorder %v895, %v915
      %vm1430 = vcmp.eq.f32.partialorder %v895, %v919
      %vm1431 = vcmp.eq.f32.partialorder %v895, %v923
      %vm1432 = vcmp.eq.f32.partialorder %v900, %v911
      %vm1433 = vcmp.eq.f32.partialorder %v900, %v915
      %vm1434 = vcmp.eq.f32.partialorder %v900, %v919
      %vm1435 = vcmp.eq.f32.partialorder %v900, %v923
      %vm1436 = vcmp.eq.f32.partialorder %v905, %v911
      %vm1437 = vcmp.eq.f32.partialorder %v905, %v915
      %vm1438 = vcmp.eq.f32.partialorder %v905, %v919
      %vm1439 = vcmp.eq.f32.partialorder %v905, %v923
      %vm1440 = vcmp.lt.s32.totalorder %v512, %v583
      %vm1441 = vcmp.lt.s32.totalorder %v512, %v584
      %vm1442 = vcmp.lt.s32.totalorder %v512, %v585
      %vm1443 = vcmp.lt.s32.totalorder %v512, %v586
      %vm1444 = vcmp.lt.s32.totalorder %v513, %v583
      %vm1445 = vcmp.lt.s32.totalorder %v513, %v584
      %vm1446 = vcmp.lt.s32.totalorder %v513, %v585
      %vm1447 = vcmp.lt.s32.totalorder %v513, %v586
      %vm1448 = vcmp.lt.s32.totalorder %v514, %v583
      %vm1449 = vcmp.lt.s32.totalorder %v514, %v584
      %vm1450 = vcmp.lt.s32.totalorder %v514, %v585
      %vm1451 = vcmp.lt.s32.totalorder %v514, %v586
      %vm1452 = vcmp.lt.s32.totalorder %v515, %v583
      %vm1453 = vcmp.lt.s32.totalorder %v515, %v584
      %vm1454 = vcmp.lt.s32.totalorder %v515, %v585
      %vm1455 = vcmp.lt.s32.totalorder %v515, %v586
      %vm1456 = vcmp.lt.s32.totalorder %v516, %v583
      %vm1457 = vcmp.lt.s32.totalorder %v516, %v584
      %vm1458 = vcmp.lt.s32.totalorder %v516, %v585
      %vm1459 = vcmp.lt.s32.totalorder %v516, %v586
      %vm1460 = vcmp.lt.s32.totalorder %v517, %v583
      %vm1461 = vcmp.lt.s32.totalorder %v517, %v584
      %vm1462 = vcmp.lt.s32.totalorder %v517, %v585
      %vm1463 = vcmp.lt.s32.totalorder %v517, %v586
      %vm1464 = vcmp.lt.s32.totalorder %v518, %v583
      %vm1465 = vcmp.lt.s32.totalorder %v518, %v584
      %vm1466 = vcmp.lt.s32.totalorder %v518, %v585
      %vm1467 = vcmp.lt.s32.totalorder %v518, %v586
      %vm1468 = vcmp.lt.s32.totalorder %v519, %v583
      %vm1469 = vcmp.lt.s32.totalorder %v519, %v584
      %vm1470 = vcmp.lt.s32.totalorder %v519, %v585
      %vm1471 = vcmp.lt.s32.totalorder %v519, %v586
      %vm1472 = vcmp.lt.s32.totalorder %v520, %v583
      %vm1473 = vcmp.lt.s32.totalorder %v520, %v584
      %vm1474 = vcmp.lt.s32.totalorder %v520, %v585
      %vm1475 = vcmp.lt.s32.totalorder %v520, %v586
      %vm1476 = vcmp.lt.s32.totalorder %v521, %v583
      %vm1477 = vcmp.lt.s32.totalorder %v521, %v584
      %vm1478 = vcmp.lt.s32.totalorder %v521, %v585
      %vm1479 = vcmp.lt.s32.totalorder %v521, %v586
      %vm1480 = vcmp.lt.s32.totalorder %v522, %v583
      %vm1481 = vcmp.lt.s32.totalorder %v522, %v584
      %vm1482 = vcmp.lt.s32.totalorder %v522, %v585
      %vm1483 = vcmp.lt.s32.totalorder %v522, %v586
      %vm1484 = vcmp.lt.s32.totalorder %v523, %v583
      %vm1485 = vcmp.lt.s32.totalorder %v523, %v584
      %vm1486 = vcmp.lt.s32.totalorder %v523, %v585
      %vm1487 = vcmp.lt.s32.totalorder %v523, %v586
      %vm1488 = vcmp.lt.s32.totalorder %v524, %v583
      %vm1489 = vcmp.lt.s32.totalorder %v524, %v584
      %vm1490 = vcmp.lt.s32.totalorder %v524, %v585
      %vm1491 = vcmp.lt.s32.totalorder %v524, %v586
      %vm1492 = vcmp.lt.s32.totalorder %v525, %v583
      %vm1493 = vcmp.lt.s32.totalorder %v525, %v584
      %vm1494 = vcmp.lt.s32.totalorder %v525, %v585
      %vm1495 = vcmp.lt.s32.totalorder %v525, %v586
      %vm1496 = vcmp.lt.s32.totalorder %v526, %v583
      %vm1497 = vcmp.lt.s32.totalorder %v526, %v584
      %vm1498 = vcmp.lt.s32.totalorder %v526, %v585
      %vm1499 = vcmp.lt.s32.totalorder %v526, %v586
      %vm1500 = vcmp.lt.s32.totalorder %v527, %v583
      %vm1501 = vcmp.lt.s32.totalorder %v527, %v584
      %vm1502 = vcmp.lt.s32.totalorder %v527, %v585
      %vm1503 = vcmp.lt.s32.totalorder %v527, %v586
      %vm1504 = vcmp.lt.s32.totalorder %v528, %v583
      %vm1505 = vcmp.lt.s32.totalorder %v528, %v584
      %vm1506 = vcmp.lt.s32.totalorder %v528, %v585
      %vm1507 = vcmp.lt.s32.totalorder %v528, %v586
      %vm1508 = vcmp.lt.s32.totalorder %v529, %v583
      %vm1509 = vcmp.lt.s32.totalorder %v529, %v584
      %vm1510 = vcmp.lt.s32.totalorder %v529, %v585
      %vm1511 = vcmp.lt.s32.totalorder %v529, %v586
      %vm1512 = vcmp.lt.s32.totalorder %v530, %v583
      %vm1513 = vcmp.lt.s32.totalorder %v530, %v584
      %vm1514 = vcmp.lt.s32.totalorder %v530, %v585
      %vm1515 = vcmp.lt.s32.totalorder %v530, %v586
      %vm1516 = vcmp.lt.s32.totalorder %v531, %v583
      %vm1517 = vcmp.lt.s32.totalorder %v531, %v584
      %vm1518 = vcmp.lt.s32.totalorder %v531, %v585
      %vm1519 = vcmp.lt.s32.totalorder %v531, %v586
      %vm1520 = vcmp.lt.s32.totalorder %v532, %v583
      %vm1521 = vcmp.lt.s32.totalorder %v532, %v584
      %vm1522 = vcmp.lt.s32.totalorder %v532, %v585
      %vm1523 = vcmp.lt.s32.totalorder %v532, %v586
      %vm1524 = vcmp.lt.s32.totalorder %v533, %v583
      %vm1525 = vcmp.lt.s32.totalorder %v533, %v584
      %vm1526 = vcmp.lt.s32.totalorder %v533, %v585
      %vm1527 = vcmp.lt.s32.totalorder %v533, %v586
      %vm1528 = vcmp.lt.s32.totalorder %v534, %v583
      %vm1529 = vcmp.lt.s32.totalorder %v534, %v584
      %vm1530 = vcmp.lt.s32.totalorder %v534, %v585
      %vm1531 = vcmp.lt.s32.totalorder %v534, %v586
      %vm1532 = vcmp.lt.s32.totalorder %v535, %v583
      %vm1533 = vcmp.lt.s32.totalorder %v535, %v584
      %vm1534 = vcmp.lt.s32.totalorder %v535, %v585
      %vm1535 = vcmp.lt.s32.totalorder %v535, %v586
      %vm1536 = vcmp.lt.s32.totalorder %v536, %v583
      %vm1537 = vcmp.lt.s32.totalorder %v536, %v584
      %vm1538 = vcmp.lt.s32.totalorder %v536, %v585
      %vm1539 = vcmp.lt.s32.totalorder %v536, %v586
      %vm1540 = vcmp.lt.s32.totalorder %v537, %v583
      %vm1541 = vcmp.lt.s32.totalorder %v537, %v584
      %vm1542 = vcmp.lt.s32.totalorder %v537, %v585
      %vm1543 = vcmp.lt.s32.totalorder %v537, %v586
      %vm1544 = vcmp.lt.s32.totalorder %v538, %v583
      %vm1545 = vcmp.lt.s32.totalorder %v538, %v584
      %vm1546 = vcmp.lt.s32.totalorder %v538, %v585
      %vm1547 = vcmp.lt.s32.totalorder %v538, %v586
      %vm1548 = vcmp.lt.s32.totalorder %v539, %v583
      %vm1549 = vcmp.lt.s32.totalorder %v539, %v584
      %vm1550 = vcmp.lt.s32.totalorder %v539, %v585
      %vm1551 = vcmp.lt.s32.totalorder %v539, %v586
      %vm1552 = vcmp.lt.s32.totalorder %v540, %v583
      %vm1553 = vcmp.lt.s32.totalorder %v540, %v584
      %vm1554 = vcmp.lt.s32.totalorder %v540, %v585
      %vm1555 = vcmp.lt.s32.totalorder %v540, %v586
      %vm1556 = vcmp.lt.s32.totalorder %v541, %v583
      %vm1557 = vcmp.lt.s32.totalorder %v541, %v584
      %vm1558 = vcmp.lt.s32.totalorder %v541, %v585
      %vm1559 = vcmp.lt.s32.totalorder %v541, %v586
      %vm1560 = vcmp.lt.s32.totalorder %v542, %v583
      %vm1561 = vcmp.lt.s32.totalorder %v542, %v584
      %vm1562 = vcmp.lt.s32.totalorder %v542, %v585
      %vm1563 = vcmp.lt.s32.totalorder %v542, %v586
      %vm1564 = vcmp.lt.s32.totalorder %v543, %v583
      %vm1565 = vcmp.lt.s32.totalorder %v543, %v584
      %vm1566 = vcmp.lt.s32.totalorder %v543, %v585
      %vm1567 = vcmp.lt.s32.totalorder %v543, %v586
      %vm1568 = vcmp.lt.s32.totalorder %v544, %v583
      %vm1569 = vcmp.lt.s32.totalorder %v544, %v584
      %vm1570 = vcmp.lt.s32.totalorder %v544, %v585
      %vm1571 = vcmp.lt.s32.totalorder %v544, %v586
      %vm1572 = vcmp.lt.s32.totalorder %v545, %v583
      %vm1573 = vcmp.lt.s32.totalorder %v545, %v584
      %vm1574 = vcmp.lt.s32.totalorder %v545, %v585
      %vm1575 = vcmp.lt.s32.totalorder %v545, %v586
      %vm1576 = vcmp.lt.s32.totalorder %v546, %v583
      %vm1577 = vcmp.lt.s32.totalorder %v546, %v584
      %vm1578 = vcmp.lt.s32.totalorder %v546, %v585
      %vm1579 = vcmp.lt.s32.totalorder %v546, %v586
      %vm1580 = vcmp.lt.s32.totalorder %v547, %v583
      %vm1581 = vcmp.lt.s32.totalorder %v547, %v584
      %vm1582 = vcmp.lt.s32.totalorder %v547, %v585
      %vm1583 = vcmp.lt.s32.totalorder %v547, %v586
      %vm1584 = vcmp.lt.s32.totalorder %v548, %v583
      %vm1585 = vcmp.lt.s32.totalorder %v548, %v584
      %vm1586 = vcmp.lt.s32.totalorder %v548, %v585
      %vm1587 = vcmp.lt.s32.totalorder %v548, %v586
      %vm1588 = vcmp.lt.s32.totalorder %v549, %v583
      %vm1589 = vcmp.lt.s32.totalorder %v549, %v584
      %vm1590 = vcmp.lt.s32.totalorder %v549, %v585
      %vm1591 = vcmp.lt.s32.totalorder %v549, %v586
      %vm1592 = vcmp.lt.s32.totalorder %v550, %v583
      %vm1593 = vcmp.lt.s32.totalorder %v550, %v584
      %vm1594 = vcmp.lt.s32.totalorder %v550, %v585
      %vm1595 = vcmp.lt.s32.totalorder %v550, %v586
      %vm1596 = vcmp.lt.s32.totalorder %v551, %v583
      %vm1597 = vcmp.lt.s32.totalorder %v551, %v584
      %vm1598 = vcmp.lt.s32.totalorder %v551, %v585
      %vm1599 = vcmp.lt.s32.totalorder %v551, %v586
      %vm1600 = vcmp.lt.s32.totalorder %v552, %v583
      %vm1601 = vcmp.lt.s32.totalorder %v552, %v584
      %vm1602 = vcmp.lt.s32.totalorder %v552, %v585
      %vm1603 = vcmp.lt.s32.totalorder %v552, %v586
      %vm1604 = vcmp.lt.s32.totalorder %v553, %v583
      %vm1605 = vcmp.lt.s32.totalorder %v553, %v584
      %vm1606 = vcmp.lt.s32.totalorder %v553, %v585
      %vm1607 = vcmp.lt.s32.totalorder %v553, %v586
      %vm1608 = vcmp.lt.s32.totalorder %v554, %v583
      %vm1609 = vcmp.lt.s32.totalorder %v554, %v584
      %vm1610 = vcmp.lt.s32.totalorder %v554, %v585
      %vm1611 = vcmp.lt.s32.totalorder %v554, %v586
      %vm1612 = vcmp.lt.s32.totalorder %v555, %v583
      %vm1613 = vcmp.lt.s32.totalorder %v555, %v584
      %vm1614 = vcmp.lt.s32.totalorder %v555, %v585
      %vm1615 = vcmp.lt.s32.totalorder %v555, %v586
      %vm1616 = vcmp.lt.s32.totalorder %v556, %v583
      %vm1617 = vcmp.lt.s32.totalorder %v556, %v584
      %vm1618 = vcmp.lt.s32.totalorder %v556, %v585
      %vm1619 = vcmp.lt.s32.totalorder %v556, %v586
      %vm1620 = vcmp.lt.s32.totalorder %v557, %v583
      %vm1621 = vcmp.lt.s32.totalorder %v557, %v584
      %vm1622 = vcmp.lt.s32.totalorder %v557, %v585
      %vm1623 = vcmp.lt.s32.totalorder %v557, %v586
      %vm1624 = vcmp.lt.s32.totalorder %v558, %v583
      %vm1625 = vcmp.lt.s32.totalorder %v558, %v584
      %vm1626 = vcmp.lt.s32.totalorder %v558, %v585
      %vm1627 = vcmp.lt.s32.totalorder %v558, %v586
      %vm1628 = vcmp.lt.s32.totalorder %v559, %v583
      %vm1629 = vcmp.lt.s32.totalorder %v559, %v584
      %vm1630 = vcmp.lt.s32.totalorder %v559, %v585
      %vm1631 = vcmp.lt.s32.totalorder %v559, %v586
      %vm1632 = vcmp.lt.s32.totalorder %v560, %v583
      %vm1633 = vcmp.lt.s32.totalorder %v560, %v584
      %vm1634 = vcmp.lt.s32.totalorder %v560, %v585
      %vm1635 = vcmp.lt.s32.totalorder %v560, %v586
      %vm1636 = vcmp.lt.s32.totalorder %v561, %v583
      %vm1637 = vcmp.lt.s32.totalorder %v561, %v584
      %vm1638 = vcmp.lt.s32.totalorder %v561, %v585
      %vm1639 = vcmp.lt.s32.totalorder %v561, %v586
      %vm1640 = vcmp.lt.s32.totalorder %v562, %v583
      %vm1641 = vcmp.lt.s32.totalorder %v562, %v584
      %vm1642 = vcmp.lt.s32.totalorder %v562, %v585
      %vm1643 = vcmp.lt.s32.totalorder %v562, %v586
      %vm1644 = vcmp.lt.s32.totalorder %v563, %v583
      %vm1645 = vcmp.lt.s32.totalorder %v563, %v584
      %vm1646 = vcmp.lt.s32.totalorder %v563, %v585
      %vm1647 = vcmp.lt.s32.totalorder %v563, %v586
      %vm1648 = vcmp.lt.s32.totalorder %v564, %v583
      %vm1649 = vcmp.lt.s32.totalorder %v564, %v584
      %vm1650 = vcmp.lt.s32.totalorder %v564, %v585
      %vm1651 = vcmp.lt.s32.totalorder %v564, %v586
      %vm1652 = vcmp.lt.s32.totalorder %v565, %v583
      %vm1653 = vcmp.lt.s32.totalorder %v565, %v584
      %vm1654 = vcmp.lt.s32.totalorder %v565, %v585
      %vm1655 = vcmp.lt.s32.totalorder %v565, %v586
      %vm1656 = vcmp.lt.s32.totalorder %v566, %v583
      %vm1657 = vcmp.lt.s32.totalorder %v566, %v584
      %vm1658 = vcmp.lt.s32.totalorder %v566, %v585
      %vm1659 = vcmp.lt.s32.totalorder %v566, %v586
      %vm1660 = vcmp.lt.s32.totalorder %v567, %v583
      %vm1661 = vcmp.lt.s32.totalorder %v567, %v584
      %vm1662 = vcmp.lt.s32.totalorder %v567, %v585
      %vm1663 = vcmp.lt.s32.totalorder %v567, %v586
      %vm1664 = vcmp.lt.s32.totalorder %v568, %v583
      %vm1665 = vcmp.lt.s32.totalorder %v568, %v584
      %vm1666 = vcmp.lt.s32.totalorder %v568, %v585
      %vm1667 = vcmp.lt.s32.totalorder %v568, %v586
      %vm1668 = vcmp.lt.s32.totalorder %v569, %v583
      %vm1669 = vcmp.lt.s32.totalorder %v569, %v584
      %vm1670 = vcmp.lt.s32.totalorder %v569, %v585
      %vm1671 = vcmp.lt.s32.totalorder %v569, %v586
      %vm1672 = vcmp.lt.s32.totalorder %v570, %v583
      %vm1673 = vcmp.lt.s32.totalorder %v570, %v584
      %vm1674 = vcmp.lt.s32.totalorder %v570, %v585
      %vm1675 = vcmp.lt.s32.totalorder %v570, %v586
      %vm1676 = vcmp.lt.s32.totalorder %v571, %v583
      %vm1677 = vcmp.lt.s32.totalorder %v571, %v584
      %vm1678 = vcmp.lt.s32.totalorder %v571, %v585
      %vm1679 = vcmp.lt.s32.totalorder %v571, %v586
      %vm1680 = vcmp.lt.s32.totalorder %v572, %v583
      %vm1681 = vcmp.lt.s32.totalorder %v572, %v584
      %vm1682 = vcmp.lt.s32.totalorder %v572, %v585
      %vm1683 = vcmp.lt.s32.totalorder %v572, %v586
      %vm1684 = vcmp.lt.s32.totalorder %v573, %v583
      %vm1685 = vcmp.lt.s32.totalorder %v573, %v584
      %vm1686 = vcmp.lt.s32.totalorder %v573, %v585
      %vm1687 = vcmp.lt.s32.totalorder %v573, %v586
      %vm1688 = vcmp.lt.s32.totalorder %v574, %v583
      %vm1689 = vcmp.lt.s32.totalorder %v574, %v584
      %vm1690 = vcmp.lt.s32.totalorder %v574, %v585
      %vm1691 = vcmp.lt.s32.totalorder %v574, %v586
      %vm1692 = vcmp.lt.s32.totalorder %v575, %v583
      %vm1693 = vcmp.lt.s32.totalorder %v575, %v584
      %vm1694 = vcmp.lt.s32.totalorder %v575, %v585
      %vm1695 = vcmp.lt.s32.totalorder %v575, %v586
      %vm1696 = vmand %vm1184, %vm1440
      %vm1697 = vmand %vm1185, %vm1441
      %vm1698 = vmand %vm1186, %vm1442
      %vm1699 = vmand %vm1187, %vm1443
      %vm1700 = vmand %vm1188, %vm1444
      %vm1701 = vmand %vm1189, %vm1445
      %vm1702 = vmand %vm1190, %vm1446
      %vm1703 = vmand %vm1191, %vm1447
      %vm1704 = vmand %vm1192, %vm1448
      %vm1705 = vmand %vm1193, %vm1449
      %vm1706 = vmand %vm1194, %vm1450
      %vm1707 = vmand %vm1195, %vm1451
      %vm1708 = vmand %vm1196, %vm1452
      %vm1709 = vmand %vm1197, %vm1453
      %vm1710 = vmand %vm1198, %vm1454
      %vm1711 = vmand %vm1199, %vm1455
      %vm1712 = vmand %vm1200, %vm1456
      %vm1713 = vmand %vm1201, %vm1457
      %vm1714 = vmand %vm1202, %vm1458
      %vm1715 = vmand %vm1203, %vm1459
      %vm1716 = vmand %vm1204, %vm1460
      %vm1717 = vmand %vm1205, %vm1461
      %vm1718 = vmand %vm1206, %vm1462
      %vm1719 = vmand %vm1207, %vm1463
      %vm1720 = vmand %vm1208, %vm1464
      %vm1721 = vmand %vm1209, %vm1465
      %vm1722 = vmand %vm1210, %vm1466
      %vm1723 = vmand %vm1211, %vm1467
      %vm1724 = vmand %vm1212, %vm1468
      %vm1725 = vmand %vm1213, %vm1469
      %vm1726 = vmand %vm1214, %vm1470
      %vm1727 = vmand %vm1215, %vm1471
      %vm1728 = vmand %vm1216, %vm1472
      %vm1729 = vmand %vm1217, %vm1473
      %vm1730 = vmand %vm1218, %vm1474
      %vm1731 = vmand %vm1219, %vm1475
      %vm1732 = vmand %vm1220, %vm1476
      %vm1733 = vmand %vm1221, %vm1477
      %vm1734 = vmand %vm1222, %vm1478
      %vm1735 = vmand %vm1223, %vm1479
      %vm1736 = vmand %vm1224, %vm1480
      %vm1737 = vmand %vm1225, %vm1481
      %vm1738 = vmand %vm1226, %vm1482
      %vm1739 = vmand %vm1227, %vm1483
      %vm1740 = vmand %vm1228, %vm1484
      %vm1741 = vmand %vm1229, %vm1485
      %vm1742 = vmand %vm1230, %vm1486
      %vm1743 = vmand %vm1231, %vm1487
      %vm1744 = vmand %vm1232, %vm1488
      %vm1745 = vmand %vm1233, %vm1489
      %vm1746 = vmand %vm1234, %vm1490
      %vm1747 = vmand %vm1235, %vm1491
      %vm1748 = vmand %vm1236, %vm1492
      %vm1749 = vmand %vm1237, %vm1493
      %vm1750 = vmand %vm1238, %vm1494
      %vm1751 = vmand %vm1239, %vm1495
      %vm1752 = vmand %vm1240, %vm1496
      %vm1753 = vmand %vm1241, %vm1497
      %vm1754 = vmand %vm1242, %vm1498
      %vm1755 = vmand %vm1243, %vm1499
      %vm1756 = vmand %vm1244, %vm1500
      %vm1757 = vmand %vm1245, %vm1501
      %vm1758 = vmand %vm1246, %vm1502
      %vm1759 = vmand %vm1247, %vm1503
      %vm1760 = vmand %vm1248, %vm1504
      %vm1761 = vmand %vm1249, %vm1505
      %vm1762 = vmand %vm1250, %vm1506
      %vm1763 = vmand %vm1251, %vm1507
      %vm1764 = vmand %vm1252, %vm1508
      %vm1765 = vmand %vm1253, %vm1509
      %vm1766 = vmand %vm1254, %vm1510
      %vm1767 = vmand %vm1255, %vm1511
      %vm1768 = vmand %vm1256, %vm1512
      %vm1769 = vmand %vm1257, %vm1513
      %vm1770 = vmand %vm1258, %vm1514
      %vm1771 = vmand %vm1259, %vm1515
      %vm1772 = vmand %vm1260, %vm1516
      %vm1773 = vmand %vm1261, %vm1517
      %vm1774 = vmand %vm1262, %vm1518
      %vm1775 = vmand %vm1263, %vm1519
      %vm1776 = vmand %vm1264, %vm1520
      %vm1777 = vmand %vm1265, %vm1521
      %vm1778 = vmand %vm1266, %vm1522
      %vm1779 = vmand %vm1267, %vm1523
      %vm1780 = vmand %vm1268, %vm1524
      %vm1781 = vmand %vm1269, %vm1525
      %vm1782 = vmand %vm1270, %vm1526
      %vm1783 = vmand %vm1271, %vm1527
      %vm1784 = vmand %vm1272, %vm1528
      %vm1785 = vmand %vm1273, %vm1529
      %vm1786 = vmand %vm1274, %vm1530
      %vm1787 = vmand %vm1275, %vm1531
      %vm1788 = vmand %vm1276, %vm1532
      %vm1789 = vmand %vm1277, %vm1533
      %vm1790 = vmand %vm1278, %vm1534
      %vm1791 = vmand %vm1279, %vm1535
      %vm1792 = vmand %vm1280, %vm1536
      %vm1793 = vmand %vm1281, %vm1537
      %vm1794 = vmand %vm1282, %vm1538
      %vm1795 = vmand %vm1283, %vm1539
      %vm1796 = vmand %vm1284, %vm1540
      %vm1797 = vmand %vm1285, %vm1541
      %vm1798 = vmand %vm1286, %vm1542
      %vm1799 = vmand %vm1287, %vm1543
      %vm1800 = vmand %vm1288, %vm1544
      %vm1801 = vmand %vm1289, %vm1545
      %vm1802 = vmand %vm1290, %vm1546
      %vm1803 = vmand %vm1291, %vm1547
      %vm1804 = vmand %vm1292, %vm1548
      %vm1805 = vmand %vm1293, %vm1549
      %vm1806 = vmand %vm1294, %vm1550
      %vm1807 = vmand %vm1295, %vm1551
      %vm1808 = vmand %vm1296, %vm1552
      %vm1809 = vmand %vm1297, %vm1553
      %vm1810 = vmand %vm1298, %vm1554
      %vm1811 = vmand %vm1299, %vm1555
      %vm1812 = vmand %vm1300, %vm1556
      %vm1813 = vmand %vm1301, %vm1557
      %vm1814 = vmand %vm1302, %vm1558
      %vm1815 = vmand %vm1303, %vm1559
      %vm1816 = vmand %vm1304, %vm1560
      %vm1817 = vmand %vm1305, %vm1561
      %vm1818 = vmand %vm1306, %vm1562
      %vm1819 = vmand %vm1307, %vm1563
      %vm1820 = vmand %vm1308, %vm1564
      %vm1821 = vmand %vm1309, %vm1565
      %vm1822 = vmand %vm1310, %vm1566
      %vm1823 = vmand %vm1311, %vm1567
      %vm1824 = vmand %vm1312, %vm1568
      %vm1825 = vmand %vm1313, %vm1569
      %vm1826 = vmand %vm1314, %vm1570
      %vm1827 = vmand %vm1315, %vm1571
      %vm1828 = vmand %vm1316, %vm1572
      %vm1829 = vmand %vm1317, %vm1573
      %vm1830 = vmand %vm1318, %vm1574
      %vm1831 = vmand %vm1319, %vm1575
      %vm1832 = vmand %vm1320, %vm1576
      %vm1833 = vmand %vm1321, %vm1577
      %vm1834 = vmand %vm1322, %vm1578
      %vm1835 = vmand %vm1323, %vm1579
      %vm1836 = vmand %vm1324, %vm1580
      %vm1837 = vmand %vm1325, %vm1581
      %vm1838 = vmand %vm1326, %vm1582
      %vm1839 = vmand %vm1327, %vm1583
      %vm1840 = vmand %vm1328, %vm1584
      %vm1841 = vmand %vm1329, %vm1585
      %vm1842 = vmand %vm1330, %vm1586
      %vm1843 = vmand %vm1331, %vm1587
      %vm1844 = vmand %vm1332, %vm1588
      %vm1845 = vmand %vm1333, %vm1589
      %vm1846 = vmand %vm1334, %vm1590
      %vm1847 = vmand %vm1335, %vm1591
      %vm1848 = vmand %vm1336, %vm1592
      %vm1849 = vmand %vm1337, %vm1593
      %vm1850 = vmand %vm1338, %vm1594
      %vm1851 = vmand %vm1339, %vm1595
      %vm1852 = vmand %vm1340, %vm1596
      %vm1853 = vmand %vm1341, %vm1597
      %vm1854 = vmand %vm1342, %vm1598
      %vm1855 = vmand %vm1343, %vm1599
      %vm1856 = vmand %vm1344, %vm1600
      %vm1857 = vmand %vm1345, %vm1601
      %vm1858 = vmand %vm1346, %vm1602
      %vm1859 = vmand %vm1347, %vm1603
      %vm1860 = vmand %vm1348, %vm1604
      %vm1861 = vmand %vm1349, %vm1605
      %vm1862 = vmand %vm1350, %vm1606
      %vm1863 = vmand %vm1351, %vm1607
      %vm1864 = vmand %vm1352, %vm1608
      %vm1865 = vmand %vm1353, %vm1609
      %vm1866 = vmand %vm1354, %vm1610
      %vm1867 = vmand %vm1355, %vm1611
      %vm1868 = vmand %vm1356, %vm1612
      %vm1869 = vmand %vm1357, %vm1613
      %vm1870 = vmand %vm1358, %vm1614
      %vm1871 = vmand %vm1359, %vm1615
      %vm1872 = vmand %vm1360, %vm1616
      %vm1873 = vmand %vm1361, %vm1617
      %vm1874 = vmand %vm1362, %vm1618
      %vm1875 = vmand %vm1363, %vm1619
      %vm1876 = vmand %vm1364, %vm1620
      %vm1877 = vmand %vm1365, %vm1621
      %vm1878 = vmand %vm1366, %vm1622
      %vm1879 = vmand %vm1367, %vm1623
      %vm1880 = vmand %vm1368, %vm1624
      %vm1881 = vmand %vm1369, %vm1625
      %vm1882 = vmand %vm1370, %vm1626
      %vm1883 = vmand %vm1371, %vm1627
      %vm1884 = vmand %vm1372, %vm1628
      %vm1885 = vmand %vm1373, %vm1629
      %vm1886 = vmand %vm1374, %vm1630
      %vm1887 = vmand %vm1375, %vm1631
      %vm1888 = vmand %vm1376, %vm1632
      %vm1889 = vmand %vm1377, %vm1633
      %vm1890 = vmand %vm1378, %vm1634
      %vm1891 = vmand %vm1379, %vm1635
      %vm1892 = vmand %vm1380, %vm1636
      %vm1893 = vmand %vm1381, %vm1637
      %vm1894 = vmand %vm1382, %vm1638
      %vm1895 = vmand %vm1383, %vm1639
      %vm1896 = vmand %vm1384, %vm1640
      %vm1897 = vmand %vm1385, %vm1641
      %vm1898 = vmand %vm1386, %vm1642
      %vm1899 = vmand %vm1387, %vm1643
      %vm1900 = vmand %vm1388, %vm1644
      %vm1901 = vmand %vm1389, %vm1645
      %vm1902 = vmand %vm1390, %vm1646
      %vm1903 = vmand %vm1391, %vm1647
      %vm1904 = vmand %vm1392, %vm1648
      %vm1905 = vmand %vm1393, %vm1649
      %vm1906 = vmand %vm1394, %vm1650
      %vm1907 = vmand %vm1395, %vm1651
      %vm1908 = vmand %vm1396, %vm1652
      %vm1909 = vmand %vm1397, %vm1653
      %vm1910 = vmand %vm1398, %vm1654
      %vm1911 = vmand %vm1399, %vm1655
      %vm1912 = vmand %vm1400, %vm1656
      %vm1913 = vmand %vm1401, %vm1657
      %vm1914 = vmand %vm1402, %vm1658
      %vm1915 = vmand %vm1403, %vm1659
      %vm1916 = vmand %vm1404, %vm1660
      %vm1917 = vmand %vm1405, %vm1661
      %vm1918 = vmand %vm1406, %vm1662
      %vm1919 = vmand %vm1407, %vm1663
      %vm1920 = vmand %vm1408, %vm1664
      %vm1921 = vmand %vm1409, %vm1665
      %vm1922 = vmand %vm1410, %vm1666
      %vm1923 = vmand %vm1411, %vm1667
      %vm1924 = vmand %vm1412, %vm1668
      %vm1925 = vmand %vm1413, %vm1669
      %vm1926 = vmand %vm1414, %vm1670
      %vm1927 = vmand %vm1415, %vm1671
      %vm1928 = vmand %vm1416, %vm1672
      %vm1929 = vmand %vm1417, %vm1673
      %vm1930 = vmand %vm1418, %vm1674
      %vm1931 = vmand %vm1419, %vm1675
      %vm1932 = vmand %vm1420, %vm1676
      %vm1933 = vmand %vm1421, %vm1677
      %vm1934 = vmand %vm1422, %vm1678
      %vm1935 = vmand %vm1423, %vm1679
      %vm1936 = vmand %vm1424, %vm1680
      %vm1937 = vmand %vm1425, %vm1681
      %vm1938 = vmand %vm1426, %vm1682
      %vm1939 = vmand %vm1427, %vm1683
      %vm1940 = vmand %vm1428, %vm1684
      %vm1941 = vmand %vm1429, %vm1685
      %vm1942 = vmand %vm1430, %vm1686
      %vm1943 = vmand %vm1431, %vm1687
      %vm1944 = vmand %vm1432, %vm1688
      %vm1945 = vmand %vm1433, %vm1689
      %vm1946 = vmand %vm1434, %vm1690
      %vm1947 = vmand %vm1435, %vm1691
      %vm1948 = vmand %vm1436, %vm1692
      %vm1949 = vmand %vm1437, %vm1693
      %vm1950 = vmand %vm1438, %vm1694
      %vm1951 = vmand %vm1439, %vm1695
      %vm1952 = vmor %vm928, %vm1696
      %vm1953 = vmor %vm929, %vm1697
      %vm1954 = vmor %vm930, %vm1698
      %vm1955 = vmor %vm931, %vm1699
      %vm1956 = vmor %vm932, %vm1700
      %vm1957 = vmor %vm933, %vm1701
      %vm1958 = vmor %vm934, %vm1702
      %vm1959 = vmor %vm935, %vm1703
      %vm1960 = vmor %vm936, %vm1704
      %vm1961 = vmor %vm937, %vm1705
      %vm1962 = vmor %vm938, %vm1706
      %vm1963 = vmor %vm939, %vm1707
      %vm1964 = vmor %vm940, %vm1708
      %vm1965 = vmor %vm941, %vm1709
      %vm1966 = vmor %vm942, %vm1710
      %vm1967 = vmor %vm943, %vm1711
      %vm1968 = vmor %vm944, %vm1712
      %vm1969 = vmor %vm945, %vm1713
      %vm1970 = vmor %vm946, %vm1714
      %vm1971 = vmor %vm947, %vm1715
      %vm1972 = vmor %vm948, %vm1716
      %vm1973 = vmor %vm949, %vm1717
      %vm1974 = vmor %vm950, %vm1718
      %vm1975 = vmor %vm951, %vm1719
      %vm1976 = vmor %vm952, %vm1720
      %vm1977 = vmor %vm953, %vm1721
      %vm1978 = vmor %vm954, %vm1722
      %vm1979 = vmor %vm955, %vm1723
      %vm1980 = vmor %vm956, %vm1724
      %vm1981 = vmor %vm957, %vm1725
      %vm1982 = vmor %vm958, %vm1726
      %vm1983 = vmor %vm959, %vm1727
      %vm1984 = vmor %vm960, %vm1728
      %vm1985 = vmor %vm961, %vm1729
      %vm1986 = vmor %vm962, %vm1730
      %vm1987 = vmor %vm963, %vm1731
      %vm1988 = vmor %vm964, %vm1732
      %vm1989 = vmor %vm965, %vm1733
      %vm1990 = vmor %vm966, %vm1734
      %vm1991 = vmor %vm967, %vm1735
      %vm1992 = vmor %vm968, %vm1736
      %vm1993 = vmor %vm969, %vm1737
      %vm1994 = vmor %vm970, %vm1738
      %vm1995 = vmor %vm971, %vm1739
      %vm1996 = vmor %vm972, %vm1740
      %vm1997 = vmor %vm973, %vm1741
      %vm1998 = vmor %vm974, %vm1742
      %vm1999 = vmor %vm975, %vm1743
      %vm2000 = vmor %vm976, %vm1744
      %vm2001 = vmor %vm977, %vm1745
      %vm2002 = vmor %vm978, %vm1746
      %vm2003 = vmor %vm979, %vm1747
      %vm2004 = vmor %vm980, %vm1748
      %vm2005 = vmor %vm981, %vm1749
      %vm2006 = vmor %vm982, %vm1750
      %vm2007 = vmor %vm983, %vm1751
      %vm2008 = vmor %vm984, %vm1752
      %vm2009 = vmor %vm985, %vm1753
      %vm2010 = vmor %vm986, %vm1754
      %vm2011 = vmor %vm987, %vm1755
      %vm2012 = vmor %vm988, %vm1756
      %vm2013 = vmor %vm989, %vm1757
      %vm2014 = vmor %vm990, %vm1758
      %vm2015 = vmor %vm991, %vm1759
      %vm2016 = vmor %vm992, %vm1760
      %vm2017 = vmor %vm993, %vm1761
      %vm2018 = vmor %vm994, %vm1762
      %vm2019 = vmor %vm995, %vm1763
      %vm2020 = vmor %vm996, %vm1764
      %vm2021 = vmor %vm997, %vm1765
      %vm2022 = vmor %vm998, %vm1766
      %vm2023 = vmor %vm999, %vm1767
      %vm2024 = vmor %vm1000, %vm1768
      %vm2025 = vmor %vm1001, %vm1769
      %vm2026 = vmor %vm1002, %vm1770
      %vm2027 = vmor %vm1003, %vm1771
      %vm2028 = vmor %vm1004, %vm1772
      %vm2029 = vmor %vm1005, %vm1773
      %vm2030 = vmor %vm1006, %vm1774
      %vm2031 = vmor %vm1007, %vm1775
      %vm2032 = vmor %vm1008, %vm1776
      %vm2033 = vmor %vm1009, %vm1777
      %vm2034 = vmor %vm1010, %vm1778
      %vm2035 = vmor %vm1011, %vm1779
      %vm2036 = vmor %vm1012, %vm1780
      %vm2037 = vmor %vm1013, %vm1781
      %vm2038 = vmor %vm1014, %vm1782
      %vm2039 = vmor %vm1015, %vm1783
      %vm2040 = vmor %vm1016, %vm1784
      %vm2041 = vmor %vm1017, %vm1785
      %vm2042 = vmor %vm1018, %vm1786
      %vm2043 = vmor %vm1019, %vm1787
      %vm2044 = vmor %vm1020, %vm1788
      %vm2045 = vmor %vm1021, %vm1789
      %vm2046 = vmor %vm1022, %vm1790
      %vm2047 = vmor %vm1023, %vm1791
      %vm2048 = vmor %vm1024, %vm1792
      %vm2049 = vmor %vm1025, %vm1793
      %vm2050 = vmor %vm1026, %vm1794
      %vm2051 = vmor %vm1027, %vm1795
      %vm2052 = vmor %vm1028, %vm1796
      %vm2053 = vmor %vm1029, %vm1797
      %vm2054 = vmor %vm1030, %vm1798
      %vm2055 = vmor %vm1031, %vm1799
      %vm2056 = vmor %vm1032, %vm1800
      %vm2057 = vmor %vm1033, %vm1801
      %vm2058 = vmor %vm1034, %vm1802
      %vm2059 = vmor %vm1035, %vm1803
      %vm2060 = vmor %vm1036, %vm1804
      %vm2061 = vmor %vm1037, %vm1805
      %vm2062 = vmor %vm1038, %vm1806
      %vm2063 = vmor %vm1039, %vm1807
      %vm2064 = vmor %vm1040, %vm1808
      %vm2065 = vmor %vm1041, %vm1809
      %vm2066 = vmor %vm1042, %vm1810
      %vm2067 = vmor %vm1043, %vm1811
      %vm2068 = vmor %vm1044, %vm1812
      %vm2069 = vmor %vm1045, %vm1813
      %vm2070 = vmor %vm1046, %vm1814
      %vm2071 = vmor %vm1047, %vm1815
      %vm2072 = vmor %vm1048, %vm1816
      %vm2073 = vmor %vm1049, %vm1817
      %vm2074 = vmor %vm1050, %vm1818
      %vm2075 = vmor %vm1051, %vm1819
      %vm2076 = vmor %vm1052, %vm1820
      %vm2077 = vmor %vm1053, %vm1821
      %vm2078 = vmor %vm1054, %vm1822
      %vm2079 = vmor %vm1055, %vm1823
      %vm2080 = vmor %vm1056, %vm1824
      %vm2081 = vmor %vm1057, %vm1825
      %vm2082 = vmor %vm1058, %vm1826
      %vm2083 = vmor %vm1059, %vm1827
      %vm2084 = vmor %vm1060, %vm1828
      %vm2085 = vmor %vm1061, %vm1829
      %vm2086 = vmor %vm1062, %vm1830
      %vm2087 = vmor %vm1063, %vm1831
      %vm2088 = vmor %vm1064, %vm1832
      %vm2089 = vmor %vm1065, %vm1833
      %vm2090 = vmor %vm1066, %vm1834
      %vm2091 = vmor %vm1067, %vm1835
      %vm2092 = vmor %vm1068, %vm1836
      %vm2093 = vmor %vm1069, %vm1837
      %vm2094 = vmor %vm1070, %vm1838
      %vm2095 = vmor %vm1071, %vm1839
      %vm2096 = vmor %vm1072, %vm1840
      %vm2097 = vmor %vm1073, %vm1841
      %vm2098 = vmor %vm1074, %vm1842
      %vm2099 = vmor %vm1075, %vm1843
      %vm2100 = vmor %vm1076, %vm1844
      %vm2101 = vmor %vm1077, %vm1845
      %vm2102 = vmor %vm1078, %vm1846
      %vm2103 = vmor %vm1079, %vm1847
      %vm2104 = vmor %vm1080, %vm1848
      %vm2105 = vmor %vm1081, %vm1849
      %vm2106 = vmor %vm1082, %vm1850
      %vm2107 = vmor %vm1083, %vm1851
      %vm2108 = vmor %vm1084, %vm1852
      %vm2109 = vmor %vm1085, %vm1853
      %vm2110 = vmor %vm1086, %vm1854
      %vm2111 = vmor %vm1087, %vm1855
      %vm2112 = vmor %vm1088, %vm1856
      %vm2113 = vmor %vm1089, %vm1857
      %vm2114 = vmor %vm1090, %vm1858
      %vm2115 = vmor %vm1091, %vm1859
      %vm2116 = vmor %vm1092, %vm1860
      %vm2117 = vmor %vm1093, %vm1861
      %vm2118 = vmor %vm1094, %vm1862
      %vm2119 = vmor %vm1095, %vm1863
      %vm2120 = vmor %vm1096, %vm1864
      %vm2121 = vmor %vm1097, %vm1865
      %vm2122 = vmor %vm1098, %vm1866
      %vm2123 = vmor %vm1099, %vm1867
      %vm2124 = vmor %vm1100, %vm1868
      %vm2125 = vmor %vm1101, %vm1869
      %vm2126 = vmor %vm1102, %vm1870
      %vm2127 = vmor %vm1103, %vm1871
      %vm2128 = vmor %vm1104, %vm1872
      %vm2129 = vmor %vm1105, %vm1873
      %vm2130 = vmor %vm1106, %vm1874
      %vm2131 = vmor %vm1107, %vm1875
      %vm2132 = vmor %vm1108, %vm1876
      %vm2133 = vmor %vm1109, %vm1877
      %vm2134 = vmor %vm1110, %vm1878
      %vm2135 = vmor %vm1111, %vm1879
      %vm2136 = vmor %vm1112, %vm1880
      %vm2137 = vmor %vm1113, %vm1881
      %vm2138 = vmor %vm1114, %vm1882
      %vm2139 = vmor %vm1115, %vm1883
      %vm2140 = vmor %vm1116, %vm1884
      %vm2141 = vmor %vm1117, %vm1885
      %vm2142 = vmor %vm1118, %vm1886
      %vm2143 = vmor %vm1119, %vm1887
      %vm2144 = vmor %vm1120, %vm1888
      %vm2145 = vmor %vm1121, %vm1889
      %vm2146 = vmor %vm1122, %vm1890
      %vm2147 = vmor %vm1123, %vm1891
      %vm2148 = vmor %vm1124, %vm1892
      %vm2149 = vmor %vm1125, %vm1893
      %vm2150 = vmor %vm1126, %vm1894
      %vm2151 = vmor %vm1127, %vm1895
      %vm2152 = vmor %vm1128, %vm1896
      %vm2153 = vmor %vm1129, %vm1897
      %vm2154 = vmor %vm1130, %vm1898
      %vm2155 = vmor %vm1131, %vm1899
      %vm2156 = vmor %vm1132, %vm1900
      %vm2157 = vmor %vm1133, %vm1901
      %vm2158 = vmor %vm1134, %vm1902
      %vm2159 = vmor %vm1135, %vm1903
      %vm2160 = vmor %vm1136, %vm1904
      %vm2161 = vmor %vm1137, %vm1905
      %vm2162 = vmor %vm1138, %vm1906
      %vm2163 = vmor %vm1139, %vm1907
      %vm2164 = vmor %vm1140, %vm1908
      %vm2165 = vmor %vm1141, %vm1909
      %vm2166 = vmor %vm1142, %vm1910
      %vm2167 = vmor %vm1143, %vm1911
      %vm2168 = vmor %vm1144, %vm1912
      %vm2169 = vmor %vm1145, %vm1913
      %vm2170 = vmor %vm1146, %vm1914
      %vm2171 = vmor %vm1147, %vm1915
      %vm2172 = vmor %vm1148, %vm1916
      %vm2173 = vmor %vm1149, %vm1917
      %vm2174 = vmor %vm1150, %vm1918
      %vm2175 = vmor %vm1151, %vm1919
      %vm2176 = vmor %vm1152, %vm1920
      %vm2177 = vmor %vm1153, %vm1921
      %vm2178 = vmor %vm1154, %vm1922
      %vm2179 = vmor %vm1155, %vm1923
      %vm2180 = vmor %vm1156, %vm1924
      %vm2181 = vmor %vm1157, %vm1925
      %vm2182 = vmor %vm1158, %vm1926
      %vm2183 = vmor %vm1159, %vm1927
      %vm2184 = vmor %vm1160, %vm1928
      %vm2185 = vmor %vm1161, %vm1929
      %vm2186 = vmor %vm1162, %vm1930
      %vm2187 = vmor %vm1163, %vm1931
      %vm2188 = vmor %vm1164, %vm1932
      %vm2189 = vmor %vm1165, %vm1933
      %vm2190 = vmor %vm1166, %vm1934
      %vm2191 = vmor %vm1167, %vm1935
      %vm2192 = vmor %vm1168, %vm1936
      %vm2193 = vmor %vm1169, %vm1937
      %vm2194 = vmor %vm1170, %vm1938
      %vm2195 = vmor %vm1171, %vm1939
      %vm2196 = vmor %vm1172, %vm1940
      %vm2197 = vmor %vm1173, %vm1941
      %vm2198 = vmor %vm1174, %vm1942
      %vm2199 = vmor %vm1175, %vm1943
      %vm2200 = vmor %vm1176, %vm1944
      %vm2201 = vmor %vm1177, %vm1945
      %vm2202 = vmor %vm1178, %vm1946
      %vm2203 = vmor %vm1179, %vm1947
      %vm2204 = vmor %vm1180, %vm1948
      %vm2205 = vmor %vm1181, %vm1949
      %vm2206 = vmor %vm1182, %vm1950
      %vm2207 = vmor %vm1183, %vm1951
      %v2208 = vsel %vm1952, 1, 0
      %v2209 = vsel %vm1953, 1, 0
      %v2210 = vsel %vm1954, 1, 0
      %v2211 = vsel %vm1955, 1, 0
      %v2212 = vsel %vm1956, 1, 0
      %v2213 = vsel %vm1957, 1, 0
      %v2214 = vsel %vm1958, 1, 0
      %v2215 = vsel %vm1959, 1, 0
      %v2216 = vsel %vm1960, 1, 0
      %v2217 = vsel %vm1961, 1, 0
      %v2218 = vsel %vm1962, 1, 0
      %v2219 = vsel %vm1963, 1, 0
      %v2220 = vsel %vm1964, 1, 0
      %v2221 = vsel %vm1965, 1, 0
      %v2222 = vsel %vm1966, 1, 0
      %v2223 = vsel %vm1967, 1, 0
      %v2224 = vsel %vm1968, 1, 0
      %v2225 = vsel %vm1969, 1, 0
      %v2226 = vsel %vm1970, 1, 0
      %v2227 = vsel %vm1971, 1, 0
      %v2228 = vsel %vm1972, 1, 0
      %v2229 = vsel %vm1973, 1, 0
      %v2230 = vsel %vm1974, 1, 0
      %v2231 = vsel %vm1975, 1, 0
      %v2232 = vsel %vm1976, 1, 0
      %v2233 = vsel %vm1977, 1, 0
      %v2234 = vsel %vm1978, 1, 0
      %v2235 = vsel %vm1979, 1, 0
      %v2236 = vsel %vm1980, 1, 0
      %v2237 = vsel %vm1981, 1, 0
      %v2238 = vsel %vm1982, 1, 0
      %v2239 = vsel %vm1983, 1, 0
      %v2240 = vsel %vm1984, 1, 0
      %v2241 = vsel %vm1985, 1, 0
      %v2242 = vsel %vm1986, 1, 0
      %v2243 = vsel %vm1987, 1, 0
      %v2244 = vsel %vm1988, 1, 0
      %v2245 = vsel %vm1989, 1, 0
      %v2246 = vsel %vm1990, 1, 0
      %v2247 = vsel %vm1991, 1, 0
      %v2248 = vsel %vm1992, 1, 0
      %v2249 = vsel %vm1993, 1, 0
      %v2250 = vsel %vm1994, 1, 0
      %v2251 = vsel %vm1995, 1, 0
      %v2252 = vsel %vm1996, 1, 0
      %v2253 = vsel %vm1997, 1, 0
      %v2254 = vsel %vm1998, 1, 0
      %v2255 = vsel %vm1999, 1, 0
      %v2256 = vsel %vm2000, 1, 0
      %v2257 = vsel %vm2001, 1, 0
      %v2258 = vsel %vm2002, 1, 0
      %v2259 = vsel %vm2003, 1, 0
      %v2260 = vsel %vm2004, 1, 0
      %v2261 = vsel %vm2005, 1, 0
      %v2262 = vsel %vm2006, 1, 0
      %v2263 = vsel %vm2007, 1, 0
      %v2264 = vsel %vm2008, 1, 0
      %v2265 = vsel %vm2009, 1, 0
      %v2266 = vsel %vm2010, 1, 0
      %v2267 = vsel %vm2011, 1, 0
      %v2268 = vsel %vm2012, 1, 0
      %v2269 = vsel %vm2013, 1, 0
      %v2270 = vsel %vm2014, 1, 0
      %v2271 = vsel %vm2015, 1, 0
      %v2272 = vsel %vm2016, 1, 0
      %v2273 = vsel %vm2017, 1, 0
      %v2274 = vsel %vm2018, 1, 0
      %v2275 = vsel %vm2019, 1, 0
      %v2276 = vsel %vm2020, 1, 0
      %v2277 = vsel %vm2021, 1, 0
      %v2278 = vsel %vm2022, 1, 0
      %v2279 = vsel %vm2023, 1, 0
      %v2280 = vsel %vm2024, 1, 0
      %v2281 = vsel %vm2025, 1, 0
      %v2282 = vsel %vm2026, 1, 0
      %v2283 = vsel %vm2027, 1, 0
      %v2284 = vsel %vm2028, 1, 0
      %v2285 = vsel %vm2029, 1, 0
      %v2286 = vsel %vm2030, 1, 0
      %v2287 = vsel %vm2031, 1, 0
      %v2288 = vsel %vm2032, 1, 0
      %v2289 = vsel %vm2033, 1, 0
      %v2290 = vsel %vm2034, 1, 0
      %v2291 = vsel %vm2035, 1, 0
      %v2292 = vsel %vm2036, 1, 0
      %v2293 = vsel %vm2037, 1, 0
      %v2294 = vsel %vm2038, 1, 0
      %v2295 = vsel %vm2039, 1, 0
      %v2296 = vsel %vm2040, 1, 0
      %v2297 = vsel %vm2041, 1, 0
      %v2298 = vsel %vm2042, 1, 0
      %v2299 = vsel %vm2043, 1, 0
      %v2300 = vsel %vm2044, 1, 0
      %v2301 = vsel %vm2045, 1, 0
      %v2302 = vsel %vm2046, 1, 0
      %v2303 = vsel %vm2047, 1, 0
      %v2304 = vsel %vm2048, 1, 0
      %v2305 = vsel %vm2049, 1, 0
      %v2306 = vsel %vm2050, 1, 0
      %v2307 = vsel %vm2051, 1, 0
      %v2308 = vsel %vm2052, 1, 0
      %v2309 = vsel %vm2053, 1, 0
      %v2310 = vsel %vm2054, 1, 0
      %v2311 = vsel %vm2055, 1, 0
      %v2312 = vsel %vm2056, 1, 0
      %v2313 = vsel %vm2057, 1, 0
      %v2314 = vsel %vm2058, 1, 0
      %v2315 = vsel %vm2059, 1, 0
      %v2316 = vsel %vm2060, 1, 0
      %v2317 = vsel %vm2061, 1, 0
      %v2318 = vsel %vm2062, 1, 0
      %v2319 = vsel %vm2063, 1, 0
      %v2320 = vsel %vm2064, 1, 0
      %v2321 = vsel %vm2065, 1, 0
      %v2322 = vsel %vm2066, 1, 0
      %v2323 = vsel %vm2067, 1, 0
      %v2324 = vsel %vm2068, 1, 0
      %v2325 = vsel %vm2069, 1, 0
      %v2326 = vsel %vm2070, 1, 0
      %v2327 = vsel %vm2071, 1, 0
      %v2328 = vsel %vm2072, 1, 0
      %v2329 = vsel %vm2073, 1, 0
      %v2330 = vsel %vm2074, 1, 0
      %v2331 = vsel %vm2075, 1, 0
      %v2332 = vsel %vm2076, 1, 0
      %v2333 = vsel %vm2077, 1, 0
      %v2334 = vsel %vm2078, 1, 0
      %v2335 = vsel %vm2079, 1, 0
      %v2336 = vsel %vm2080, 1, 0
      %v2337 = vsel %vm2081, 1, 0
      %v2338 = vsel %vm2082, 1, 0
      %v2339 = vsel %vm2083, 1, 0
      %v2340 = vsel %vm2084, 1, 0
      %v2341 = vsel %vm2085, 1, 0
      %v2342 = vsel %vm2086, 1, 0
      %v2343 = vsel %vm2087, 1, 0
      %v2344 = vsel %vm2088, 1, 0
      %v2345 = vsel %vm2089, 1, 0
      %v2346 = vsel %vm2090, 1, 0
      %v2347 = vsel %vm2091, 1, 0
      %v2348 = vsel %vm2092, 1, 0
      %v2349 = vsel %vm2093, 1, 0
      %v2350 = vsel %vm2094, 1, 0
      %v2351 = vsel %vm2095, 1, 0
      %v2352 = vsel %vm2096, 1, 0
      %v2353 = vsel %vm2097, 1, 0
      %v2354 = vsel %vm2098, 1, 0
      %v2355 = vsel %vm2099, 1, 0
      %v2356 = vsel %vm2100, 1, 0
      %v2357 = vsel %vm2101, 1, 0
      %v2358 = vsel %vm2102, 1, 0
      %v2359 = vsel %vm2103, 1, 0
      %v2360 = vsel %vm2104, 1, 0
      %v2361 = vsel %vm2105, 1, 0
      %v2362 = vsel %vm2106, 1, 0
      %v2363 = vsel %vm2107, 1, 0
      %v2364 = vsel %vm2108, 1, 0
      %v2365 = vsel %vm2109, 1, 0
      %v2366 = vsel %vm2110, 1, 0
      %v2367 = vsel %vm2111, 1, 0
      %v2368 = vsel %vm2112, 1, 0
      %v2369 = vsel %vm2113, 1, 0
      %v2370 = vsel %vm2114, 1, 0
      %v2371 = vsel %vm2115, 1, 0
      %v2372 = vsel %vm2116, 1, 0
      %v2373 = vsel %vm2117, 1, 0
      %v2374 = vsel %vm2118, 1, 0
      %v2375 = vsel %vm2119, 1, 0
      %v2376 = vsel %vm2120, 1, 0
      %v2377 = vsel %vm2121, 1, 0
      %v2378 = vsel %vm2122, 1, 0
      %v2379 = vsel %vm2123, 1, 0
      %v2380 = vsel %vm2124, 1, 0
      %v2381 = vsel %vm2125, 1, 0
      %v2382 = vsel %vm2126, 1, 0
      %v2383 = vsel %vm2127, 1, 0
      %v2384 = vsel %vm2128, 1, 0
      %v2385 = vsel %vm2129, 1, 0
      %v2386 = vsel %vm2130, 1, 0
      %v2387 = vsel %vm2131, 1, 0
      %v2388 = vsel %vm2132, 1, 0
      %v2389 = vsel %vm2133, 1, 0
      %v2390 = vsel %vm2134, 1, 0
      %v2391 = vsel %vm2135, 1, 0
      %v2392 = vsel %vm2136, 1, 0
      %v2393 = vsel %vm2137, 1, 0
      %v2394 = vsel %vm2138, 1, 0
      %v2395 = vsel %vm2139, 1, 0
      %v2396 = vsel %vm2140, 1, 0
      %v2397 = vsel %vm2141, 1, 0
      %v2398 = vsel %vm2142, 1, 0
      %v2399 = vsel %vm2143, 1, 0
      %v2400 = vsel %vm2144, 1, 0
      %v2401 = vsel %vm2145, 1, 0
      %v2402 = vsel %vm2146, 1, 0
      %v2403 = vsel %vm2147, 1, 0
      %v2404 = vsel %vm2148, 1, 0
      %v2405 = vsel %vm2149, 1, 0
      %v2406 = vsel %vm2150, 1, 0
      %v2407 = vsel %vm2151, 1, 0
      %v2408 = vsel %vm2152, 1, 0
      %v2409 = vsel %vm2153, 1, 0
      %v2410 = vsel %vm2154, 1, 0
      %v2411 = vsel %vm2155, 1, 0
      %v2412 = vsel %vm2156, 1, 0
      %v2413 = vsel %vm2157, 1, 0
      %v2414 = vsel %vm2158, 1, 0
      %v2415 = vsel %vm2159, 1, 0
      %v2416 = vsel %vm2160, 1, 0
      %v2417 = vsel %vm2161, 1, 0
      %v2418 = vsel %vm2162, 1, 0
      %v2419 = vsel %vm2163, 1, 0
      %v2420 = vsel %vm2164, 1, 0
      %v2421 = vsel %vm2165, 1, 0
      %v2422 = vsel %vm2166, 1, 0
      %v2423 = vsel %vm2167, 1, 0
      %v2424 = vsel %vm2168, 1, 0
      %v2425 = vsel %vm2169, 1, 0
      %v2426 = vsel %vm2170, 1, 0
      %v2427 = vsel %vm2171, 1, 0
      %v2428 = vsel %vm2172, 1, 0
      %v2429 = vsel %vm2173, 1, 0
      %v2430 = vsel %vm2174, 1, 0
      %v2431 = vsel %vm2175, 1, 0
      %v2432 = vsel %vm2176, 1, 0
      %v2433 = vsel %vm2177, 1, 0
      %v2434 = vsel %vm2178, 1, 0
      %v2435 = vsel %vm2179, 1, 0
      %v2436 = vsel %vm2180, 1, 0
      %v2437 = vsel %vm2181, 1, 0
      %v2438 = vsel %vm2182, 1, 0
      %v2439 = vsel %vm2183, 1, 0
      %v2440 = vsel %vm2184, 1, 0
      %v2441 = vsel %vm2185, 1, 0
      %v2442 = vsel %vm2186, 1, 0
      %v2443 = vsel %vm2187, 1, 0
      %v2444 = vsel %vm2188, 1, 0
      %v2445 = vsel %vm2189, 1, 0
      %v2446 = vsel %vm2190, 1, 0
      %v2447 = vsel %vm2191, 1, 0
      %v2448 = vsel %vm2192, 1, 0
      %v2449 = vsel %vm2193, 1, 0
      %v2450 = vsel %vm2194, 1, 0
      %v2451 = vsel %vm2195, 1, 0
      %v2452 = vsel %vm2196, 1, 0
      %v2453 = vsel %vm2197, 1, 0
      %v2454 = vsel %vm2198, 1, 0
      %v2455 = vsel %vm2199, 1, 0
      %v2456 = vsel %vm2200, 1, 0
      %v2457 = vsel %vm2201, 1, 0
      %v2458 = vsel %vm2202, 1, 0
      %v2459 = vsel %vm2203, 1, 0
      %v2460 = vsel %vm2204, 1, 0
      %v2461 = vsel %vm2205, 1, 0
      %v2462 = vsel %vm2206, 1, 0
      %v2463 = vsel %vm2207, 1, 0
      %v2464 = vcvt.s32.f32 %v2208
      %v2465 = vcvt.s32.f32 %v2209
      %v2466 = vcvt.s32.f32 %v2210
      %v2467 = vcvt.s32.f32 %v2211
      %v2468 = vcvt.s32.f32 %v2212
      %v2469 = vcvt.s32.f32 %v2213
      %v2470 = vcvt.s32.f32 %v2214
      %v2471 = vcvt.s32.f32 %v2215
      %v2472 = vcvt.s32.f32 %v2216
      %v2473 = vcvt.s32.f32 %v2217
      %v2474 = vcvt.s32.f32 %v2218
      %v2475 = vcvt.s32.f32 %v2219
      %v2476 = vcvt.s32.f32 %v2220
      %v2477 = vcvt.s32.f32 %v2221
      %v2478 = vcvt.s32.f32 %v2222
      %v2479 = vcvt.s32.f32 %v2223
      %v2480 = vcvt.s32.f32 %v2224
      %v2481 = vcvt.s32.f32 %v2225
      %v2482 = vcvt.s32.f32 %v2226
      %v2483 = vcvt.s32.f32 %v2227
      %v2484 = vcvt.s32.f32 %v2228
      %v2485 = vcvt.s32.f32 %v2229
      %v2486 = vcvt.s32.f32 %v2230
      %v2487 = vcvt.s32.f32 %v2231
      %v2488 = vcvt.s32.f32 %v2232
      %v2489 = vcvt.s32.f32 %v2233
      %v2490 = vcvt.s32.f32 %v2234
      %v2491 = vcvt.s32.f32 %v2235
      %v2492 = vcvt.s32.f32 %v2236
      %v2493 = vcvt.s32.f32 %v2237
      %v2494 = vcvt.s32.f32 %v2238
      %v2495 = vcvt.s32.f32 %v2239
      %v2496 = vcvt.s32.f32 %v2240
      %v2497 = vcvt.s32.f32 %v2241
      %v2498 = vcvt.s32.f32 %v2242
      %v2499 = vcvt.s32.f32 %v2243
      %v2500 = vcvt.s32.f32 %v2244
      %v2501 = vcvt.s32.f32 %v2245
      %v2502 = vcvt.s32.f32 %v2246
      %v2503 = vcvt.s32.f32 %v2247
      %v2504 = vcvt.s32.f32 %v2248
      %v2505 = vcvt.s32.f32 %v2249
      %v2506 = vcvt.s32.f32 %v2250
      %v2507 = vcvt.s32.f32 %v2251
      %v2508 = vcvt.s32.f32 %v2252
      %v2509 = vcvt.s32.f32 %v2253
      %v2510 = vcvt.s32.f32 %v2254
      %v2511 = vcvt.s32.f32 %v2255
      %v2512 = vcvt.s32.f32 %v2256
      %v2513 = vcvt.s32.f32 %v2257
      %v2514 = vcvt.s32.f32 %v2258
      %v2515 = vcvt.s32.f32 %v2259
      %v2516 = vcvt.s32.f32 %v2260
      %v2517 = vcvt.s32.f32 %v2261
      %v2518 = vcvt.s32.f32 %v2262
      %v2519 = vcvt.s32.f32 %v2263
      %v2520 = vcvt.s32.f32 %v2264
      %v2521 = vcvt.s32.f32 %v2265
      %v2522 = vcvt.s32.f32 %v2266
      %v2523 = vcvt.s32.f32 %v2267
      %v2524 = vcvt.s32.f32 %v2268
      %v2525 = vcvt.s32.f32 %v2269
      %v2526 = vcvt.s32.f32 %v2270
      %v2527 = vcvt.s32.f32 %v2271
      %v2528 = vcvt.s32.f32 %v2272
      %v2529 = vcvt.s32.f32 %v2273
      %v2530 = vcvt.s32.f32 %v2274
      %v2531 = vcvt.s32.f32 %v2275
      %v2532 = vcvt.s32.f32 %v2276
      %v2533 = vcvt.s32.f32 %v2277
      %v2534 = vcvt.s32.f32 %v2278
      %v2535 = vcvt.s32.f32 %v2279
      %v2536 = vcvt.s32.f32 %v2280
      %v2537 = vcvt.s32.f32 %v2281
      %v2538 = vcvt.s32.f32 %v2282
      %v2539 = vcvt.s32.f32 %v2283
      %v2540 = vcvt.s32.f32 %v2284
      %v2541 = vcvt.s32.f32 %v2285
      %v2542 = vcvt.s32.f32 %v2286
      %v2543 = vcvt.s32.f32 %v2287
      %v2544 = vcvt.s32.f32 %v2288
      %v2545 = vcvt.s32.f32 %v2289
      %v2546 = vcvt.s32.f32 %v2290
      %v2547 = vcvt.s32.f32 %v2291
      %v2548 = vcvt.s32.f32 %v2292
      %v2549 = vcvt.s32.f32 %v2293
      %v2550 = vcvt.s32.f32 %v2294
      %v2551 = vcvt.s32.f32 %v2295
      %v2552 = vcvt.s32.f32 %v2296
      %v2553 = vcvt.s32.f32 %v2297
      %v2554 = vcvt.s32.f32 %v2298
      %v2555 = vcvt.s32.f32 %v2299
      %v2556 = vcvt.s32.f32 %v2300
      %v2557 = vcvt.s32.f32 %v2301
      %v2558 = vcvt.s32.f32 %v2302
      %v2559 = vcvt.s32.f32 %v2303
      %v2560 = vcvt.s32.f32 %v2304
      %v2561 = vcvt.s32.f32 %v2305
      %v2562 = vcvt.s32.f32 %v2306
      %v2563 = vcvt.s32.f32 %v2307
      %v2564 = vcvt.s32.f32 %v2308
      %v2565 = vcvt.s32.f32 %v2309
      %v2566 = vcvt.s32.f32 %v2310
      %v2567 = vcvt.s32.f32 %v2311
      %v2568 = vcvt.s32.f32 %v2312
      %v2569 = vcvt.s32.f32 %v2313
      %v2570 = vcvt.s32.f32 %v2314
      %v2571 = vcvt.s32.f32 %v2315
      %v2572 = vcvt.s32.f32 %v2316
      %v2573 = vcvt.s32.f32 %v2317
      %v2574 = vcvt.s32.f32 %v2318
      %v2575 = vcvt.s32.f32 %v2319
      %v2576 = vcvt.s32.f32 %v2320
      %v2577 = vcvt.s32.f32 %v2321
      %v2578 = vcvt.s32.f32 %v2322
      %v2579 = vcvt.s32.f32 %v2323
      %v2580 = vcvt.s32.f32 %v2324
      %v2581 = vcvt.s32.f32 %v2325
      %v2582 = vcvt.s32.f32 %v2326
      %v2583 = vcvt.s32.f32 %v2327
      %v2584 = vcvt.s32.f32 %v2328
      %v2585 = vcvt.s32.f32 %v2329
      %v2586 = vcvt.s32.f32 %v2330
      %v2587 = vcvt.s32.f32 %v2331
      %v2588 = vcvt.s32.f32 %v2332
      %v2589 = vcvt.s32.f32 %v2333
      %v2590 = vcvt.s32.f32 %v2334
      %v2591 = vcvt.s32.f32 %v2335
      %v2592 = vcvt.s32.f32 %v2336
      %v2593 = vcvt.s32.f32 %v2337
      %v2594 = vcvt.s32.f32 %v2338
      %v2595 = vcvt.s32.f32 %v2339
      %v2596 = vcvt.s32.f32 %v2340
      %v2597 = vcvt.s32.f32 %v2341
      %v2598 = vcvt.s32.f32 %v2342
      %v2599 = vcvt.s32.f32 %v2343
      %v2600 = vcvt.s32.f32 %v2344
      %v2601 = vcvt.s32.f32 %v2345
      %v2602 = vcvt.s32.f32 %v2346
      %v2603 = vcvt.s32.f32 %v2347
      %v2604 = vcvt.s32.f32 %v2348
      %v2605 = vcvt.s32.f32 %v2349
      %v2606 = vcvt.s32.f32 %v2350
      %v2607 = vcvt.s32.f32 %v2351
      %v2608 = vcvt.s32.f32 %v2352
      %v2609 = vcvt.s32.f32 %v2353
      %v2610 = vcvt.s32.f32 %v2354
      %v2611 = vcvt.s32.f32 %v2355
      %v2612 = vcvt.s32.f32 %v2356
      %v2613 = vcvt.s32.f32 %v2357
      %v2614 = vcvt.s32.f32 %v2358
      %v2615 = vcvt.s32.f32 %v2359
      %v2616 = vcvt.s32.f32 %v2360
      %v2617 = vcvt.s32.f32 %v2361
      %v2618 = vcvt.s32.f32 %v2362
      %v2619 = vcvt.s32.f32 %v2363
      %v2620 = vcvt.s32.f32 %v2364
      %v2621 = vcvt.s32.f32 %v2365
      %v2622 = vcvt.s32.f32 %v2366
      %v2623 = vcvt.s32.f32 %v2367
      %v2624 = vcvt.s32.f32 %v2368
      %v2625 = vcvt.s32.f32 %v2369
      %v2626 = vcvt.s32.f32 %v2370
      %v2627 = vcvt.s32.f32 %v2371
      %v2628 = vcvt.s32.f32 %v2372
      %v2629 = vcvt.s32.f32 %v2373
      %v2630 = vcvt.s32.f32 %v2374
      %v2631 = vcvt.s32.f32 %v2375
      %v2632 = vcvt.s32.f32 %v2376
      %v2633 = vcvt.s32.f32 %v2377
      %v2634 = vcvt.s32.f32 %v2378
      %v2635 = vcvt.s32.f32 %v2379
      %v2636 = vcvt.s32.f32 %v2380
      %v2637 = vcvt.s32.f32 %v2381
      %v2638 = vcvt.s32.f32 %v2382
      %v2639 = vcvt.s32.f32 %v2383
      %v2640 = vcvt.s32.f32 %v2384
      %v2641 = vcvt.s32.f32 %v2385
      %v2642 = vcvt.s32.f32 %v2386
      %v2643 = vcvt.s32.f32 %v2387
      %v2644 = vcvt.s32.f32 %v2388
      %v2645 = vcvt.s32.f32 %v2389
      %v2646 = vcvt.s32.f32 %v2390
      %v2647 = vcvt.s32.f32 %v2391
      %v2648 = vcvt.s32.f32 %v2392
      %v2649 = vcvt.s32.f32 %v2393
      %v2650 = vcvt.s32.f32 %v2394
      %v2651 = vcvt.s32.f32 %v2395
      %v2652 = vcvt.s32.f32 %v2396
      %v2653 = vcvt.s32.f32 %v2397
      %v2654 = vcvt.s32.f32 %v2398
      %v2655 = vcvt.s32.f32 %v2399
      %v2656 = vcvt.s32.f32 %v2400
      %v2657 = vcvt.s32.f32 %v2401
      %v2658 = vcvt.s32.f32 %v2402
      %v2659 = vcvt.s32.f32 %v2403
      %v2660 = vcvt.s32.f32 %v2404
      %v2661 = vcvt.s32.f32 %v2405
      %v2662 = vcvt.s32.f32 %v2406
      %v2663 = vcvt.s32.f32 %v2407
      %v2664 = vcvt.s32.f32 %v2408
      %v2665 = vcvt.s32.f32 %v2409
      %v2666 = vcvt.s32.f32 %v2410
      %v2667 = vcvt.s32.f32 %v2411
      %v2668 = vcvt.s32.f32 %v2412
      %v2669 = vcvt.s32.f32 %v2413
      %v2670 = vcvt.s32.f32 %v2414
      %v2671 = vcvt.s32.f32 %v2415
      %v2672 = vcvt.s32.f32 %v2416
      %v2673 = vcvt.s32.f32 %v2417
      %v2674 = vcvt.s32.f32 %v2418
      %v2675 = vcvt.s32.f32 %v2419
      %v2676 = vcvt.s32.f32 %v2420
      %v2677 = vcvt.s32.f32 %v2421
      %v2678 = vcvt.s32.f32 %v2422
      %v2679 = vcvt.s32.f32 %v2423
      %v2680 = vcvt.s32.f32 %v2424
      %v2681 = vcvt.s32.f32 %v2425
      %v2682 = vcvt.s32.f32 %v2426
      %v2683 = vcvt.s32.f32 %v2427
      %v2684 = vcvt.s32.f32 %v2428
      %v2685 = vcvt.s32.f32 %v2429
      %v2686 = vcvt.s32.f32 %v2430
      %v2687 = vcvt.s32.f32 %v2431
      %v2688 = vcvt.s32.f32 %v2432
      %v2689 = vcvt.s32.f32 %v2433
      %v2690 = vcvt.s32.f32 %v2434
      %v2691 = vcvt.s32.f32 %v2435
      %v2692 = vcvt.s32.f32 %v2436
      %v2693 = vcvt.s32.f32 %v2437
      %v2694 = vcvt.s32.f32 %v2438
      %v2695 = vcvt.s32.f32 %v2439
      %v2696 = vcvt.s32.f32 %v2440
      %v2697 = vcvt.s32.f32 %v2441
      %v2698 = vcvt.s32.f32 %v2442
      %v2699 = vcvt.s32.f32 %v2443
      %v2700 = vcvt.s32.f32 %v2444
      %v2701 = vcvt.s32.f32 %v2445
      %v2702 = vcvt.s32.f32 %v2446
      %v2703 = vcvt.s32.f32 %v2447
      %v2704 = vcvt.s32.f32 %v2448
      %v2705 = vcvt.s32.f32 %v2449
      %v2706 = vcvt.s32.f32 %v2450
      %v2707 = vcvt.s32.f32 %v2451
      %v2708 = vcvt.s32.f32 %v2452
      %v2709 = vcvt.s32.f32 %v2453
      %v2710 = vcvt.s32.f32 %v2454
      %v2711 = vcvt.s32.f32 %v2455
      %v2712 = vcvt.s32.f32 %v2456
      %v2713 = vcvt.s32.f32 %v2457
      %v2714 = vcvt.s32.f32 %v2458
      %v2715 = vcvt.s32.f32 %v2459
      %v2716 = vcvt.s32.f32 %v2460
      %v2717 = vcvt.s32.f32 %v2461
      %v2718 = vcvt.s32.f32 %v2462
      %v2719 = vcvt.s32.f32 %v2463
      %v2720 = vpack.c.bf16 %v2468, %v2464
      %v2721 = vpack.c.bf16 %v2469, %v2465
      %v2722 = vpack.c.bf16 %v2470, %v2466
      %v2723 = vpack.c.bf16 %v2471, %v2467
      %v2724 = vpack.c.bf16 %v2476, %v2472
      %v2725 = vpack.c.bf16 %v2477, %v2473
      %v2726 = vpack.c.bf16 %v2478, %v2474
      %v2727 = vpack.c.bf16 %v2479, %v2475
      %v2728 = vpack.c.bf16 %v2484, %v2480
      %v2729 = vpack.c.bf16 %v2485, %v2481
      %v2730 = vpack.c.bf16 %v2486, %v2482
      %v2731 = vpack.c.bf16 %v2487, %v2483
      %v2732 = vpack.c.bf16 %v2492, %v2488
      %v2733 = vpack.c.bf16 %v2493, %v2489
      %v2734 = vpack.c.bf16 %v2494, %v2490
      %v2735 = vpack.c.bf16 %v2495, %v2491
      %v2736 = vpack.c.bf16 %v2500, %v2496
      %v2737 = vpack.c.bf16 %v2501, %v2497
      %v2738 = vpack.c.bf16 %v2502, %v2498
      %v2739 = vpack.c.bf16 %v2503, %v2499
      %v2740 = vpack.c.bf16 %v2508, %v2504
      %v2741 = vpack.c.bf16 %v2509, %v2505
      %v2742 = vpack.c.bf16 %v2510, %v2506
      %v2743 = vpack.c.bf16 %v2511, %v2507
      %v2744 = vpack.c.bf16 %v2516, %v2512
      %v2745 = vpack.c.bf16 %v2517, %v2513
      %v2746 = vpack.c.bf16 %v2518, %v2514
      %v2747 = vpack.c.bf16 %v2519, %v2515
      %v2748 = vpack.c.bf16 %v2524, %v2520
      %v2749 = vpack.c.bf16 %v2525, %v2521
      %v2750 = vpack.c.bf16 %v2526, %v2522
      %v2751 = vpack.c.bf16 %v2527, %v2523
      %v2752 = vpack.c.bf16 %v2532, %v2528
      %v2753 = vpack.c.bf16 %v2533, %v2529
      %v2754 = vpack.c.bf16 %v2534, %v2530
      %v2755 = vpack.c.bf16 %v2535, %v2531
      %v2756 = vpack.c.bf16 %v2540, %v2536
      %v2757 = vpack.c.bf16 %v2541, %v2537
      %v2758 = vpack.c.bf16 %v2542, %v2538
      %v2759 = vpack.c.bf16 %v2543, %v2539
      %v2760 = vpack.c.bf16 %v2548, %v2544
      %v2761 = vpack.c.bf16 %v2549, %v2545
      %v2762 = vpack.c.bf16 %v2550, %v2546
      %v2763 = vpack.c.bf16 %v2551, %v2547
      %v2764 = vpack.c.bf16 %v2556, %v2552
      %v2765 = vpack.c.bf16 %v2557, %v2553
      %v2766 = vpack.c.bf16 %v2558, %v2554
      %v2767 = vpack.c.bf16 %v2559, %v2555
      %v2768 = vpack.c.bf16 %v2564, %v2560
      %v2769 = vpack.c.bf16 %v2565, %v2561
      %v2770 = vpack.c.bf16 %v2566, %v2562
      %v2771 = vpack.c.bf16 %v2567, %v2563
      %v2772 = vpack.c.bf16 %v2572, %v2568
      %v2773 = vpack.c.bf16 %v2573, %v2569
      %v2774 = vpack.c.bf16 %v2574, %v2570
      %v2775 = vpack.c.bf16 %v2575, %v2571
      %v2776 = vpack.c.bf16 %v2580, %v2576
      %v2777 = vpack.c.bf16 %v2581, %v2577
      %v2778 = vpack.c.bf16 %v2582, %v2578
      %v2779 = vpack.c.bf16 %v2583, %v2579
      %v2780 = vpack.c.bf16 %v2588, %v2584
      %v2781 = vpack.c.bf16 %v2589, %v2585
      %v2782 = vpack.c.bf16 %v2590, %v2586
      %v2783 = vpack.c.bf16 %v2591, %v2587
      %v2784 = vpack.c.bf16 %v2596, %v2592
      %v2785 = vpack.c.bf16 %v2597, %v2593
      %v2786 = vpack.c.bf16 %v2598, %v2594
      %v2787 = vpack.c.bf16 %v2599, %v2595
      %v2788 = vpack.c.bf16 %v2604, %v2600
      %v2789 = vpack.c.bf16 %v2605, %v2601
      %v2790 = vpack.c.bf16 %v2606, %v2602
      %v2791 = vpack.c.bf16 %v2607, %v2603
      %v2792 = vpack.c.bf16 %v2612, %v2608
      %v2793 = vpack.c.bf16 %v2613, %v2609
      %v2794 = vpack.c.bf16 %v2614, %v2610
      %v2795 = vpack.c.bf16 %v2615, %v2611
      %v2796 = vpack.c.bf16 %v2620, %v2616
      %v2797 = vpack.c.bf16 %v2621, %v2617
      %v2798 = vpack.c.bf16 %v2622, %v2618
      %v2799 = vpack.c.bf16 %v2623, %v2619
      %v2800 = vpack.c.bf16 %v2628, %v2624
      %v2801 = vpack.c.bf16 %v2629, %v2625
      %v2802 = vpack.c.bf16 %v2630, %v2626
      %v2803 = vpack.c.bf16 %v2631, %v2627
      %v2804 = vpack.c.bf16 %v2636, %v2632
      %v2805 = vpack.c.bf16 %v2637, %v2633
      %v2806 = vpack.c.bf16 %v2638, %v2634
      %v2807 = vpack.c.bf16 %v2639, %v2635
      %v2808 = vpack.c.bf16 %v2644, %v2640
      %v2809 = vpack.c.bf16 %v2645, %v2641
      %v2810 = vpack.c.bf16 %v2646, %v2642
      %v2811 = vpack.c.bf16 %v2647, %v2643
      %v2812 = vpack.c.bf16 %v2652, %v2648
      %v2813 = vpack.c.bf16 %v2653, %v2649
      %v2814 = vpack.c.bf16 %v2654, %v2650
      %v2815 = vpack.c.bf16 %v2655, %v2651
      %v2816 = vpack.c.bf16 %v2660, %v2656
      %v2817 = vpack.c.bf16 %v2661, %v2657
      %v2818 = vpack.c.bf16 %v2662, %v2658
      %v2819 = vpack.c.bf16 %v2663, %v2659
      %v2820 = vpack.c.bf16 %v2668, %v2664
      %v2821 = vpack.c.bf16 %v2669, %v2665
      %v2822 = vpack.c.bf16 %v2670, %v2666
      %v2823 = vpack.c.bf16 %v2671, %v2667
      %v2824 = vpack.c.bf16 %v2676, %v2672
      %v2825 = vpack.c.bf16 %v2677, %v2673
      %v2826 = vpack.c.bf16 %v2678, %v2674
      %v2827 = vpack.c.bf16 %v2679, %v2675
      %v2828 = vpack.c.bf16 %v2684, %v2680
      %v2829 = vpack.c.bf16 %v2685, %v2681
      %v2830 = vpack.c.bf16 %v2686, %v2682
      %v2831 = vpack.c.bf16 %v2687, %v2683
      %v2832 = vpack.c.bf16 %v2692, %v2688
      %v2833 = vpack.c.bf16 %v2693, %v2689
      %v2834 = vpack.c.bf16 %v2694, %v2690
      %v2835 = vpack.c.bf16 %v2695, %v2691
      %v2836 = vpack.c.bf16 %v2700, %v2696
      %v2837 = vpack.c.bf16 %v2701, %v2697
      %v2838 = vpack.c.bf16 %v2702, %v2698
      %v2839 = vpack.c.bf16 %v2703, %v2699
      %v2840 = vpack.c.bf16 %v2708, %v2704
      %v2841 = vpack.c.bf16 %v2709, %v2705
      %v2842 = vpack.c.bf16 %v2710, %v2706
      %v2843 = vpack.c.bf16 %v2711, %v2707
      %v2844 = vpack.c.bf16 %v2716, %v2712
      %v2845 = vpack.c.bf16 %v2717, %v2713
      %v2846 = vpack.c.bf16 %v2718, %v2714
      %v2847 = vpack.c.bf16 %v2719, %v2715
      %v2848 = vld [vmem:[#allocation2] sm:$0xff]
      %v2849 = vld [vmem:[#allocation2 + $0x8] sm:$0xff]
      %v2850 = vld [vmem:[#allocation2 + $0x10] sm:$0xff]
      %v2851 = vld [vmem:[#allocation2 + $0x18] sm:$0xff]
      %2852 = vmatprep.subr.bf16.mxu0 %v2721
      %2853 = vmatpush1.bf16.msra.mxu0 %v2720
      %2854 = vmatprep.subr.bf16.mxu0 %v2725
      %2855 = vmatpush1.bf16.msra.mxu0 %v2724
      %2856 = vmatprep.subr.bf16.mxu0 %v2729
      %2857 = vmatpush1.bf16.msra.mxu0 %v2728
      %2858 = vmatprep.subr.bf16.mxu0 %v2733
      %2859 = vmatpush1.bf16.msra.mxu0 %v2732
      %2860 = vmatprep.subr.bf16.mxu0 %v2737
      %2861 = vmatpush1.bf16.msra.mxu0 %v2736
      %2862 = vmatprep.subr.bf16.mxu0 %v2741
      %2863 = vmatpush1.bf16.msra.mxu0 %v2740
      %2864 = vmatprep.subr.bf16.mxu0 %v2745
      %2865 = vmatpush1.bf16.msra.mxu0 %v2744
      %2866 = vmatprep.subr.bf16.mxu0 %v2749
      %2867 = vmatpush1.bf16.msra.mxu0 %v2748
      %2868 = vmatprep.subr.bf16.mxu0 %v2753
      %2869 = vmatpush1.bf16.msra.mxu0 %v2752
      %2870 = vmatprep.subr.bf16.mxu0 %v2757
      %2871 = vmatpush1.bf16.msra.mxu0 %v2756
      %2872 = vmatprep.subr.bf16.mxu0 %v2761
      %2873 = vmatpush1.bf16.msra.mxu0 %v2760
      %2874 = vmatprep.subr.bf16.mxu0 %v2765
      %2875 = vmatpush1.bf16.msra.mxu0 %v2764
      %2876 = vmatprep.subr.bf16.mxu0 %v2769
      %2877 = vmatpush1.bf16.msra.mxu0 %v2768
      %2878 = vmatprep.subr.bf16.mxu0 %v2773
      %2879 = vmatpush1.bf16.msra.mxu0 %v2772
      %2880 = vmatprep.subr.bf16.mxu0 %v2777
      %2881 = vmatpush1.bf16.msra.mxu0 %v2776
      %2882 = vmatprep.subr.bf16.mxu0 %v2781
      %2883 = vmatpush1.bf16.msra.mxu0 %v2780
      %2884 = vmatprep.mubr.bf16.mxu0 1065369472
      %2885 = vmatmul.mubr.bf16.gmra.mrb[0].mxu0 1065369472
      %v2886 = vpop.f32.mrb[0].mxu0
      %v2887 = vadd.f32 0.0, %v2886
      %v2888 = vpop.f32.mrb[0].mxu0
      %v2889 = vadd.f32 0.0, %v2888
      %v2890 = vpop.f32.mrb[0].mxu0
      %v2891 = vpop.f32.mrb[0].mxu0
      %2892 = vdwg.mxu0
      %2893 = vmatprep.subr.bf16.mxu0 %v2785
      %2894 = vmatpush1.bf16.msra.mxu0 %v2784
      %2895 = vmatprep.subr.bf16.mxu0 %v2789
      %2896 = vmatpush1.bf16.msra.mxu0 %v2788
      %2897 = vmatprep.subr.bf16.mxu0 %v2793
      %2898 = vmatpush1.bf16.msra.mxu0 %v2792
      %2899 = vmatprep.subr.bf16.mxu0 %v2797
      %2900 = vmatpush1.bf16.msra.mxu0 %v2796
      %2901 = vmatprep.subr.bf16.mxu0 %v2801
      %2902 = vmatpush1.bf16.msra.mxu0 %v2800
      %2903 = vmatprep.subr.bf16.mxu0 %v2805
      %2904 = vmatpush1.bf16.msra.mxu0 %v2804
      %2905 = vmatprep.subr.bf16.mxu0 %v2809
      %2906 = vmatpush1.bf16.msra.mxu0 %v2808
      %2907 = vmatprep.subr.bf16.mxu0 %v2813
      %2908 = vmatpush1.bf16.msra.mxu0 %v2812
      %2909 = vmatprep.subr.bf16.mxu0 %v2817
      %2910 = vmatpush1.bf16.msra.mxu0 %v2816
      %2911 = vmatprep.subr.bf16.mxu0 %v2821
      %2912 = vmatpush1.bf16.msra.mxu0 %v2820
      %2913 = vmatprep.subr.bf16.mxu0 %v2825
      %2914 = vmatpush1.bf16.msra.mxu0 %v2824
      %2915 = vmatprep.subr.bf16.mxu0 %v2829
      %2916 = vmatpush1.bf16.msra.mxu0 %v2828
      %2917 = vmatprep.subr.bf16.mxu0 %v2833
      %2918 = vmatpush1.bf16.msra.mxu0 %v2832
      %2919 = vmatprep.subr.bf16.mxu0 %v2837
      %2920 = vmatpush1.bf16.msra.mxu0 %v2836
      %2921 = vmatprep.subr.bf16.mxu0 %v2841
      %2922 = vmatpush1.bf16.msra.mxu0 %v2840
      %2923 = vmatprep.subr.bf16.mxu0 %v2845
      %2924 = vmatpush1.bf16.msra.mxu0 %v2844
      %2925 = vmatprep.mubr.bf16.mxu0 1065369472
      %2926 = vmatmul.mubr.bf16.gmra.mrb[0].mxu0 1065369472
      %v2927 = vpop.f32.mrb[0].mxu0
      %v2928 = vadd.f32 %v2887, %v2927
      %v2929 = vpop.f32.mrb[0].mxu0
      %v2930 = vadd.f32 %v2889, %v2929
      %v2931 = vpop.f32.mrb[0].mxu0
      %v2932 = vpop.f32.mrb[0].mxu0
      %2933 = vdwg.mxu0
      %2934 = vmatprep.subr.bf16.mxu0 %v2723
      %2935 = vmatpush1.bf16.msra.mxu0 %v2722
      %2936 = vmatprep.subr.bf16.mxu0 %v2727
      %2937 = vmatpush1.bf16.msra.mxu0 %v2726
      %2938 = vmatprep.subr.bf16.mxu0 %v2731
      %2939 = vmatpush1.bf16.msra.mxu0 %v2730
      %2940 = vmatprep.subr.bf16.mxu0 %v2735
      %2941 = vmatpush1.bf16.msra.mxu0 %v2734
      %2942 = vmatprep.subr.bf16.mxu0 %v2739
      %2943 = vmatpush1.bf16.msra.mxu0 %v2738
      %2944 = vmatprep.subr.bf16.mxu0 %v2743
      %2945 = vmatpush1.bf16.msra.mxu0 %v2742
      %2946 = vmatprep.subr.bf16.mxu0 %v2747
      %2947 = vmatpush1.bf16.msra.mxu0 %v2746
      %2948 = vmatprep.subr.bf16.mxu0 %v2751
      %2949 = vmatpush1.bf16.msra.mxu0 %v2750
      %2950 = vmatprep.subr.bf16.mxu0 %v2755
      %2951 = vmatpush1.bf16.msra.mxu0 %v2754
      %2952 = vmatprep.subr.bf16.mxu0 %v2759
      %2953 = vmatpush1.bf16.msra.mxu0 %v2758
      %2954 = vmatprep.subr.bf16.mxu0 %v2763
      %2955 = vmatpush1.bf16.msra.mxu0 %v2762
      %2956 = vmatprep.subr.bf16.mxu0 %v2767
      %2957 = vmatpush1.bf16.msra.mxu0 %v2766
      %2958 = vmatprep.subr.bf16.mxu0 %v2771
      %2959 = vmatpush1.bf16.msra.mxu0 %v2770
      %2960 = vmatprep.subr.bf16.mxu0 %v2775
      %2961 = vmatpush1.bf16.msra.mxu0 %v2774
      %2962 = vmatprep.subr.bf16.mxu0 %v2779
      %2963 = vmatpush1.bf16.msra.mxu0 %v2778
      %2964 = vmatprep.subr.bf16.mxu0 %v2783
      %2965 = vmatpush1.bf16.msra.mxu0 %v2782
      %2966 = vmatprep.mubr.bf16.mxu0 1065369472
      %2967 = vmatmul.mubr.bf16.gmra.mrb[0].mxu0 1065369472
      %v2968 = vpop.f32.mrb[0].mxu0
      %v2969 = vadd.f32 0.0, %v2968
      %v2970 = vpop.f32.mrb[0].mxu0
      %v2971 = vadd.f32 0.0, %v2970
      %v2972 = vpop.f32.mrb[0].mxu0
      %v2973 = vpop.f32.mrb[0].mxu0
      %2974 = vdwg.mxu0
      %2975 = vmatprep.subr.bf16.mxu0 %v2787
      %2976 = vmatpush1.bf16.msra.mxu0 %v2786
      %2977 = vmatprep.subr.bf16.mxu0 %v2791
      %2978 = vmatpush1.bf16.msra.mxu0 %v2790
      %2979 = vmatprep.subr.bf16.mxu0 %v2795
      %2980 = vmatpush1.bf16.msra.mxu0 %v2794
      %2981 = vmatprep.subr.bf16.mxu0 %v2799
      %2982 = vmatpush1.bf16.msra.mxu0 %v2798
      %2983 = vmatprep.subr.bf16.mxu0 %v2803
      %2984 = vmatpush1.bf16.msra.mxu0 %v2802
      %2985 = vmatprep.subr.bf16.mxu0 %v2807
      %2986 = vmatpush1.bf16.msra.mxu0 %v2806
      %2987 = vmatprep.subr.bf16.mxu0 %v2811
      %2988 = vmatpush1.bf16.msra.mxu0 %v2810
      %2989 = vmatprep.subr.bf16.mxu0 %v2815
      %2990 = vmatpush1.bf16.msra.mxu0 %v2814
      %2991 = vmatprep.subr.bf16.mxu0 %v2819
      %2992 = vmatpush1.bf16.msra.mxu0 %v2818
      %2993 = vmatprep.subr.bf16.mxu0 %v2823
      %2994 = vmatpush1.bf16.msra.mxu0 %v2822
      %2995 = vmatprep.subr.bf16.mxu0 %v2827
      %2996 = vmatpush1.bf16.msra.mxu0 %v2826
      %2997 = vmatprep.subr.bf16.mxu0 %v2831
      %2998 = vmatpush1.bf16.msra.mxu0 %v2830
      %2999 = vmatprep.subr.bf16.mxu0 %v2835
      %3000 = vmatpush1.bf16.msra.mxu0 %v2834
      %3001 = vmatprep.subr.bf16.mxu0 %v2839
      %3002 = vmatpush1.bf16.msra.mxu0 %v2838
      %3003 = vmatprep.subr.bf16.mxu0 %v2843
      %3004 = vmatpush1.bf16.msra.mxu0 %v2842
      %3005 = vmatprep.subr.bf16.mxu0 %v2847
      %3006 = vmatpush1.bf16.msra.mxu0 %v2846
      %3007 = vmatprep.mubr.bf16.mxu0 1065369472
      %3008 = vmatmul.mubr.bf16.gmra.mrb[0].mxu0 1065369472
      %v3009 = vpop.f32.mrb[0].mxu0
      %v3010 = vadd.f32 %v2969, %v3009
      %v3011 = vpop.f32.mrb[0].mxu0
      %v3012 = vadd.f32 %v2971, %v3011
      %v3013 = vpop.f32.mrb[0].mxu0
      %v3014 = vpop.f32.mrb[0].mxu0
      %3015 = vdwg.mxu0
      %v3016 = vadd.f32 %v2848, %v2928
      %v3017 = vadd.f32 %v2849, %v2930
      %v3018 = vadd.f32 %v2850, %v3010
      %v3019 = vadd.f32 %v2851, %v3012
      %3020 = vst [vmem:[#allocation2] sm:$0xff] %v3016
      %3021 = vst [vmem:[#allocation2 + $0x8] sm:$0xff] %v3017
      %3022 = vst [vmem:[#allocation2 + $0x10] sm:$0xff] %v3018
      %3023 = vst [vmem:[#allocation2 + $0x18] sm:$0xff] %v3019
      // Predicated region
      $region37: #{multibox_loss.3} parent=31 // pred_check
        %p3024 = pneg %p286
      $region38: #{multibox_loss.3} parent=31 // pred_check_branch
        %3026 = sbr.rel (%p3024) target = $region40
      $region39: #{multibox_loss.3} parent=31 // pred_region
        %v3027 = vld [vmem:[#allocation2] ss:$8 sm:$0xf]
        %s3028 = sld [smem:[#allocation4 + %s26]]
        %s3029 = scvt.s32.f32 %s3028
        %vm3030 = vcmp.eq.f32.partialorder %v294, -1.0
        %v3031 = vstv %s3029
        %vm3032 = vcmp.lt.f32.partialorder %v3027, %v3031
        %vm3033 = vmor %vm3030, %vm3032
        %v3034 = vld [vmem:[%s274] sm:$0xf]
        %v3035 = vsel %vm3033, %v3034, 0.0
        %v3036 = vlaneseq
        %vm3037 = vcmp.ge.s32.totalorder %v3036, 0
        %vm3038 = vcmp.lt.s32.totalorder %v3036, 512
        %vm3039 = vmand %vm3037, %vm3038
        %3040 = vst.msk [vmem:[%s283] sm:$0xf] %vm3039, %v3035
      $region40: #{multibox_loss.3} parent=31 // pred_fallthru
        _
      %s3041 = smul.u32 4, %s27
      %p3042 = scmp.lt.s32.totalorder %s26, 1
      %s3043 = scalar_select %p3042, %s26, 1
      %p3044 = scmp.lt.s32.totalorder %s3041, 3
      %s3045 = scalar_select %p3044, %s3041, 3
      %s3046 = smul.addr %s3043, 4
      %s3047 = sadd.s32 %s3045, %s3046
      %s3048 = scalar_lea.vmem %s4, %s3047
      // Predicated region
      $region41: #{multibox_loss.3} parent=31 // pred_check
        %p3049 = pneg %p144
      $region42: #{multibox_loss.3} parent=31 // pred_check_branch
        %3051 = sbr.rel (%p3049) target = $region44
      $region43: #{multibox_loss.3} parent=31 // pred_region
        %s3052 = smul.u32 4, %s27
      $region44: #{multibox_loss.3} parent=31 // pred_fallthru
        _
    $region32: #{multibox_loss.3} parent=5 // pred_fallthru
      _
    %p3053 = scmp.le.s32.totalorder 2, %s16
    // Predicated region
    $region45: #{multibox_loss.3} parent=5 // pred_check
      %p3054 = pneg %p3053
    $region46: #{multibox_loss.3} parent=5 // pred_check_branch
      %3056 = sbr.rel (%p3054) target = $region48
    $region47: #{multibox_loss.3} parent=5 // pred_region
      %s3057 = ssub.s32 %s16, 2
      // Predicated region
      $region49: #{multibox_loss.3} parent=47 // pred_check
        %p3058 = pneg %p150
      $region50: #{multibox_loss.3} parent=47 // pred_check_branch
        %3060 = sbr.rel (%p3058) target = $region52
      $region51: #{multibox_loss.3} parent=47 // pred_region
        %s3061 = smul.u32 4, %s30
        %p3062 = scmp.lt.s32.totalorder %s29, 1
        %s3063 = scalar_select %p3062, %s29, 1
        %p3064 = scmp.lt.s32.totalorder %s3061, 3
        %s3065 = scalar_select %p3064, %s3061, 3
        %s3066 = smul.addr %s3063, 4
        %s3067 = sadd.s32 %s3065, %s3066
        %s3068 = scalar_lea.vmem %s4, %s3067
      $region52: #{multibox_loss.3} parent=47 // pred_fallthru
        _
    $region48: #{multibox_loss.3} parent=5 // pred_fallthru
      _
  $region6: #{multibox_loss.3} parent=0 // loop_footer
    %s20 = sadd.s32 1, %s16
  $region7: #{multibox_loss.3} parent=0 // loop_footer_branch
    %15 = sbr.rel target = $region3
  $region8: #{multibox_loss.3} parent=0 // loop_exit
    _

</llo_original>
